<compile_context>
chip_gen: v7x
topology: tpu7x:2x2x1
jax: 0.10.0
libtpu: 0.0.40
codegen_flags: <defaults>
</compile_context>

<pallas_src>
import functools

import numpy as np

import jax
import jax.numpy as jnp
from jax import lax
from jax.experimental import pallas as pl
from jax.experimental.pallas import tpu as pltpu


# Layer hyper-parameters fixed by the PyTorch module.
_LAYERS = (
    dict(cin=8, cout=16, k=3, s=2, p=0),
    dict(cin=16, cout=8, k=5, s=3, p=1),
    dict(cin=8, cout=1, k=2, s=2, p=1),
)

_LANE = 128      # vreg lane width
_SUBLANE = 8     # vreg sublane height (f32)


def _round_up(x, m):
    return (x + m - 1) // m * m


def _out_size(n, k, s, p):
    # PyTorch ConvTranspose2d output size (output_padding=0, dilation=1).
    return (n - 1) * s - 2 * p + k


def _placement(n_in, n_out, k, s, p):
    """S[kt, i, o] = 1 iff o == i*s - p + kt and 0 <= o < n_out (numpy constant)."""
    S = np.zeros((k, n_in, n_out), np.float32)
    for kt in range(k):
        for i in range(n_in):
            o = i * s - p + kt
            if 0 <= o < n_out:
                S[kt, i, o] = 1.0
    return S


def decoder2_prepare(params, in_hw):
    """Weight-only preprocessing.  Run ONCE per set of params, outside jit.

    Layer l is lowered to
        out_l = act( sum_kh  P_l[kh] @ (X_l @ G_cat_l)[:, kh-th 128-aligned slice] + b_l )
    with activations in (rows = H, lanes = Cin*W) layout, zero-padded to
    (mult-of-8 rows, mult-of-128 lanes).  G_cat_l folds channel mixing AND the
    stride/padding placement along W for all taps into one lane-dense matmul;
    P_l[kh] is a tiny per-sample 0/1 placement matrix along H.

    Returns (ops, meta):
      ops  = (G1, P1, b1, G2, P2, b2, G3, P3, b3)   device arrays, f32
      meta = ((R0, L0), tuple of (Ho, Wo, Cout, R_out, L_out) per layer)
    """
    H, W = in_hw
    cin0 = _LAYERS[0]["cin"]
    R_in = _round_up(H, _SUBLANE)
    L_in = _round_up(cin0 * W, _LANE)
    meta0 = (R_in, L_in)

    ops = []
    layer_meta = []
    for (w, b), cfg in zip(params, _LAYERS):
        cin, cout, k, s, p = cfg["cin"], cfg["cout"], cfg["k"], cfg["s"], cfg["p"]
        w = np.asarray(w, np.float32)
        b = np.asarray(b, np.float32)
        assert w.shape == (cin, cout, k, k), w.shape
        Ho, Wo = _out_size(H, k, s, p), _out_size(W, k, s, p)
        R_out = _round_up(Ho, _SUBLANE)
        L_out = _round_up(cout * Wo, _LANE)

        # G[kh, ci*W+iw, co*Wo+ow] = w[ci, co, kh, kw]  iff  ow == iw*s - p + kw
        Sw = _placement(W, Wo, k, s, p)                       # (k, W, Wo)
        G = np.einsum("cohk,kiv->hciov", w, Sw)               # (k,cin,W,cout,Wo)
        G = G.reshape(k, cin * W, cout * Wo)
        G_pad = np.zeros((k, L_in, L_out), np.float32)        # zero pad rows/cols
        G_pad[:, :cin * W, :cout * Wo] = G
        # Lane-concatenate the taps: (L_in, k*L_out), tap slices 128-aligned.
        G_cat = np.ascontiguousarray(
            np.transpose(G_pad, (1, 0, 2)).reshape(L_in, k * L_out))

        # P[kt, oh, ih] = 1 iff oh == ih*s - p + kt  (per sample, row-padded with
        # zeros -> the previous layer's garbage pad rows are multiplied by 0).
        Sh = _placement(H, Ho, k, s, p)                       # (k, H, Ho)
        P = np.zeros((k, R_out, R_in), np.float32)
        P[:, :Ho, :H] = np.transpose(Sh, (0, 2, 1))

        # Bias row broadcast over width, lane-padded with zeros.
        brow = np.zeros((1, L_out), np.float32)
        brow[0, :cout * Wo] = np.repeat(b, Wo)

        ops += [G_cat, P, brow]
        layer_meta.append((Ho, Wo, cout, R_out, L_out))
        H, W = Ho, Wo
        R_in, L_in = R_out, L_out

    ops = tuple(jnp.asarray(o) for o in ops)   # move to device once
    return ops, (meta0, tuple(layer_meta))


def _decoder2_kernel(x_ref,
                     g1_ref, p1_ref, b1_ref,
                     g2_ref, p2_ref, b2_ref,
                     g3_ref, p3_ref, b3_ref,
                     o_ref):
    def tconv(h, g_ref, p_ref, b_ref, act):
        k = p_ref.shape[0]
        l_out = g_ref.shape[1] // k
        # ONE wide lane-dense MXU matmul: channel mixing + W placement, all taps.
        y = jnp.dot(h, g_ref[...], preferred_element_type=jnp.float32)
        # k INDEPENDENT tiny 0/1 matmuls do the H placement (no pop->push chain).
        parts = [
            jnp.dot(p_ref[kt], y[:, kt * l_out:(kt + 1) * l_out],
                    preferred_element_type=jnp.float32)
            for kt in range(k)
        ]
        # Tree sum of the tap contributions.
        while len(parts) > 1:
            nxt = [parts[i] + parts[i + 1] for i in range(0, len(parts) - 1, 2)]
            if len(parts) % 2:
                nxt.append(parts[-1])
            parts = nxt
        acc = parts[0] + b_ref[...]
        return jnp.maximum(acc, 0.0) if act == "relu" else jnp.tanh(acc)

    h = x_ref[0]                                          # (8,  128)
    h = tconv(h, g1_ref, p1_ref, b1_ref, "relu")          # (16, 256)
    h = tconv(h, g2_ref, p2_ref, b2_ref, "relu")          # (32, 256)
    o_ref[0] = tconv(h, g3_ref, p3_ref, b3_ref, "tanh")   # (56, 128)


def _resident_spec(shape):
    """Full-array block, same block index for every grid step (stays in VMEM)."""
    zeros = (0,) * len(shape)
    return pl.BlockSpec(shape, lambda n, _z=zeros: _z)


@functools.partial(jax.jit, static_argnums=(2,))
def decoder2_apply(x, ops, meta):
    (R0, L0), layer_meta = meta
    N, Cin, H, W = x.shape
    Ho, Wo, Cout, R_out, L_out = layer_meta[-1]

    # NCHW -> per-sample (H, Cin*W) rows/lanes layout, zero-padded to (R0, L0).
    x2d = jnp.transpose(x, (0, 2, 1, 3)).reshape(N, H, Cin * W)
    x2d = jnp.pad(x2d, ((0, 0), (0, R0 - H), (0, L0 - Cin * W)))

    # Advisory cost estimate for the XLA scheduler.
    flops = 0
    bytes_accessed = x2d.size * 4 + N * R_out * L_out * 4
    r_in, l_in = R0, L0
    for i, (_, _, _, r_o, l_o) in enumerate(layer_meta):
        g, p, brow = ops[3 * i], ops[3 * i + 1], ops[3 * i + 2]
        k = p.shape[0]
        flops += N * (2 * r_in * l_in * g.shape[1] + k * 2 * r_o * r_in * l_o)
        bytes_accessed += (g.size + p.size + brow.size) * 4
        r_in, l_in = r_o, l_o
    transcendentals = N * R_out * L_out   # final tanh

    in_specs = [pl.BlockSpec((1, R0, L0), lambda n: (n, 0, 0))]
    in_specs += [_resident_spec(op.shape) for op in ops]
    out_spec = pl.BlockSpec((1, R_out, L_out), lambda n: (n, 0, 0))

    out3d = pl.pallas_call(
        _decoder2_kernel,
        out_shape=jax.ShapeDtypeStruct((N, R_out, L_out), jnp.float32),
        grid=(N,),
        in_specs=in_specs,
        out_specs=out_spec,
        compiler_params=pltpu.CompilerParams(
            dimension_semantics=("parallel",),
            vmem_limit_bytes=32 * 1024 * 1024),
        cost_estimate=pl.CostEstimate(flops=int(flops),
                                      transcendentals=int(transcendentals),
                                      bytes_accessed=int(bytes_accessed)),
    )(x2d, *ops)

    # Slice off row/lane padding, (N, Ho, Cout*Wo) -> NCHW.
    out = out3d[:, :Ho, :Cout * Wo]
    return jnp.transpose(out.reshape(N, Ho, Cout, Wo), (0, 2, 1, 3))


def decoder2_forward(x, params):
    """Convenience one-shot forward.  For repeated inference, call
    decoder2_prepare once and reuse (ops, meta) with decoder2_apply."""
    N, _, H, W = x.shape
    ops, meta = decoder2_prepare(params, (H, W))
    return decoder2_apply(x, ops, meta)


# ---------- pure-JAX reference (correctness check only) ----------
def _ref_conv_transpose2d(x, w, b, stride, padding):
    Cin, Cout, kH, kW = w.shape
    w_conv = jnp.transpose(w[:, :, ::-1, ::-1], (1, 0, 2, 3))  # (Cout, Cin, kH, kW)
    y = lax.conv_general_dilated(
        x, w_conv, window_strides=(1, 1),
        padding=[(kH - 1 - padding, kH - 1 - padding),
                 (kW - 1 - padding, kW - 1 - padding)],
        lhs_dilation=(stride, stride),
        dimension_numbers=("NCHW", "OIHW", "NCHW"))
    return y + b.reshape(1, Cout, 1, 1)


def _ref_decoder2(x, params):
    (w1, b1), (w2, b2), (w3, b3) = params
    x = jnp.maximum(_ref_conv_transpose2d(x, w1, b1, 2, 0), 0.0)
    x = jnp.maximum(_ref_conv_transpose2d(x, w2, b2, 3, 1), 0.0)
    x = jnp.tanh(_ref_conv_transpose2d(x, w3, b3, 2, 1))
    return x


if __name__ == "__main__":
    key = jax.random.PRNGKey(0)
    keys = jax.random.split(key, 7)

    # NCHW input for ConvTranspose2d(8, 16, ...).
    x = jax.random.normal(keys[0], (2, 8, 4, 4), jnp.float32)

    # Deterministic synthetic parameters in PyTorch ConvTranspose2d layout.
    w1 = 0.1 * jax.random.normal(keys[1], (8, 16, 3, 3), jnp.float32)
    b1 = 0.1 * jax.random.normal(keys[2], (16,), jnp.float32)
    w2 = 0.1 * jax.random.normal(keys[3], (16, 8, 5, 5), jnp.float32)
    b2 = 0.1 * jax.random.normal(keys[4], (8,), jnp.float32)
    w3 = 0.1 * jax.random.normal(keys[5], (8, 1, 2, 2), jnp.float32)
    b3 = 0.1 * jax.random.normal(keys[6], (1,), jnp.float32)
    params = ((w1, b1), (w2, b2), (w3, b3))

    # Weight-only preprocessing, hoisted out of the per-call (jitted) path.
    ops, meta = decoder2_prepare(params, (4, 4))

    y = decoder2_apply(x, ops, meta)
    jax.block_until_ready(y)

    # Shape per PyTorch formula: 4 -> 9 -> 27 -> 52
    assert y.shape == (2, 1, 52, 52), y.shape

    ref = _ref_decoder2(x, params)
    err = float(jnp.max(jnp.abs(y - ref)))
    assert jnp.allclose(y, ref, atol=2e-5, rtol=2e-5), err

    print("KERNEL_OK")
</pallas_src>

<mosaic_0001>
module attributes {stable_mosaic.version = 11 : i64} {
  func.func @_decoder2_kernel(%arg0: i32, %arg1: memref<1x8x128xf32, #tpu.memory_space<vmem>>, %arg2: memref<128x768xf32, #tpu.memory_space<vmem>>, %arg3: memref<3x16x8xf32, #tpu.memory_space<vmem>>, %arg4: memref<1x256xf32, #tpu.memory_space<vmem>>, %arg5: memref<256x1280xf32, #tpu.memory_space<vmem>>, %arg6: memref<5x32x16xf32, #tpu.memory_space<vmem>>, %arg7: memref<1x256xf32, #tpu.memory_space<vmem>>, %arg8: memref<256x256xf32, #tpu.memory_space<vmem>>, %arg9: memref<2x56x32xf32, #tpu.memory_space<vmem>>, %arg10: memref<1x128xf32, #tpu.memory_space<vmem>>, %arg11: memref<1x56x128xf32, #tpu.memory_space<vmem>>) attributes {dimension_semantics = [#tpu.dimension_semantics<parallel>], iteration_bounds = array<i64: 2>, scalar_prefetch = 0 : i64, scratch_operands = 0 : i64, tpu.core_type = #tpu.core_type<tc>, window_params = [{transform_indices = @transform_0, window_bounds = array<i64: 1, 8, 128>}, {pipeline_mode = #tpu.pipeline_mode<synchronous>, transform_indices = @transform_1, window_bounds = array<i64: 128, 768>}, {pipeline_mode = #tpu.pipeline_mode<synchronous>, transform_indices = @transform_2, window_bounds = array<i64: 3, 16, 8>}, {pipeline_mode = #tpu.pipeline_mode<synchronous>, transform_indices = @transform_3, window_bounds = array<i64: 1, 256>}, {pipeline_mode = #tpu.pipeline_mode<synchronous>, transform_indices = @transform_4, window_bounds = array<i64: 256, 1280>}, {pipeline_mode = #tpu.pipeline_mode<synchronous>, transform_indices = @transform_5, window_bounds = array<i64: 5, 32, 16>}, {pipeline_mode = #tpu.pipeline_mode<synchronous>, transform_indices = @transform_6, window_bounds = array<i64: 1, 256>}, {pipeline_mode = #tpu.pipeline_mode<synchronous>, transform_indices = @transform_7, window_bounds = array<i64: 256, 256>}, {pipeline_mode = #tpu.pipeline_mode<synchronous>, transform_indices = @transform_8, window_bounds = array<i64: 2, 56, 32>}, {pipeline_mode = #tpu.pipeline_mode<synchronous>, transform_indices = @transform_9, window_bounds = array<i64: 1, 128>}, {transform_indices = @transform_10, window_bounds = array<i64: 1, 56, 128>}]} {
    %c0 = arith.constant 0 : index
    %c0_0 = arith.constant 0 : index
    %c0_1 = arith.constant 0 : index
    %0 = vector.load %arg1[%c0, %c0_0, %c0_1] : memref<1x8x128xf32, #tpu.memory_space<vmem>>, vector<1x8x128xf32>
    %1 = vector.shape_cast %0 : vector<1x8x128xf32> to vector<8x128xf32>
    %c0_2 = arith.constant 0 : index
    %c0_3 = arith.constant 0 : index
    %2 = vector.load %arg2[%c0_2, %c0_3] : memref<128x768xf32, #tpu.memory_space<vmem>>, vector<128x768xf32>
    %cst = arith.constant dense<0.000000e+00> : vector<8x768xf32>
    %3 = tpu.matmul %1, %2, %cst {dimension_numbers = #tpu.dot_dimension_numbers<[1], [0], [0], [1], [0, 0, 1, 1], [], []>} : vector<8x128xf32>, vector<128x768xf32>, vector<8x768xf32> -> vector<8x768xf32>
    %c0_4 = arith.constant 0 : index
    %c0_5 = arith.constant 0 : index
    %c0_6 = arith.constant 0 : index
    %4 = vector.load %arg3[%c0_4, %c0_5, %c0_6] : memref<3x16x8xf32, #tpu.memory_space<vmem>>, vector<1x16x8xf32>
    %5 = vector.shape_cast %4 : vector<1x16x8xf32> to vector<16x8xf32>
    %6 = vector.extract_strided_slice %3 {offsets = [0, 0], sizes = [8, 256], strides = [1, 1]} : vector<8x768xf32> to vector<8x256xf32>
    %cst_7 = arith.constant dense<0.000000e+00> : vector<16x256xf32>
    %7 = tpu.matmul %5, %6, %cst_7 {dimension_numbers = #tpu.dot_dimension_numbers<[1], [0], [0], [1], [0, 0, 1, 1], [], []>} : vector<16x8xf32>, vector<8x256xf32>, vector<16x256xf32> -> vector<16x256xf32>
    %c1 = arith.constant 1 : index
    %c0_8 = arith.constant 0 : index
    %c0_9 = arith.constant 0 : index
    %8 = vector.load %arg3[%c1, %c0_8, %c0_9] : memref<3x16x8xf32, #tpu.memory_space<vmem>>, vector<1x16x8xf32>
    %9 = vector.shape_cast %8 : vector<1x16x8xf32> to vector<16x8xf32>
    %10 = vector.extract_strided_slice %3 {offsets = [0, 256], sizes = [8, 256], strides = [1, 1]} : vector<8x768xf32> to vector<8x256xf32>
    %cst_10 = arith.constant dense<0.000000e+00> : vector<16x256xf32>
    %11 = tpu.matmul %9, %10, %cst_10 {dimension_numbers = #tpu.dot_dimension_numbers<[1], [0], [0], [1], [0, 0, 1, 1], [], []>} : vector<16x8xf32>, vector<8x256xf32>, vector<16x256xf32> -> vector<16x256xf32>
    %c2 = arith.constant 2 : index
    %c0_11 = arith.constant 0 : index
    %c0_12 = arith.constant 0 : index
    %12 = vector.load %arg3[%c2, %c0_11, %c0_12] : memref<3x16x8xf32, #tpu.memory_space<vmem>>, vector<1x16x8xf32>
    %13 = vector.shape_cast %12 : vector<1x16x8xf32> to vector<16x8xf32>
    %14 = vector.extract_strided_slice %3 {offsets = [0, 512], sizes = [8, 256], strides = [1, 1]} : vector<8x768xf32> to vector<8x256xf32>
    %cst_13 = arith.constant dense<0.000000e+00> : vector<16x256xf32>
    %15 = tpu.matmul %13, %14, %cst_13 {dimension_numbers = #tpu.dot_dimension_numbers<[1], [0], [0], [1], [0, 0, 1, 1], [], []>} : vector<16x8xf32>, vector<8x256xf32>, vector<16x256xf32> -> vector<16x256xf32>
    %16 = arith.addf %7, %11 : vector<16x256xf32>
    %17 = arith.addf %16, %15 : vector<16x256xf32>
    %c0_14 = arith.constant 0 : index
    %c0_15 = arith.constant 0 : index
    %18 = vector.load %arg4[%c0_14, %c0_15] : memref<1x256xf32, #tpu.memory_space<vmem>>, vector<1x256xf32>
    %19 = vector.broadcast %18 : vector<1x256xf32> to vector<16x256xf32>
    %20 = arith.addf %17, %19 : vector<16x256xf32>
    %cst_16 = arith.constant 0.000000e+00 : f32
    %21 = vector.broadcast %cst_16 : f32 to vector<16x256xf32>
    %22 = arith.maximumf %20, %21 : vector<16x256xf32>
    %c0_17 = arith.constant 0 : index
    %c0_18 = arith.constant 0 : index
    %23 = vector.load %arg5[%c0_17, %c0_18] : memref<256x1280xf32, #tpu.memory_space<vmem>>, vector<256x1280xf32>
    %cst_19 = arith.constant dense<0.000000e+00> : vector<16x1280xf32>
    %24 = tpu.matmul %22, %23, %cst_19 {dimension_numbers = #tpu.dot_dimension_numbers<[1], [0], [0], [1], [0, 0, 1, 1], [], []>} : vector<16x256xf32>, vector<256x1280xf32>, vector<16x1280xf32> -> vector<16x1280xf32>
    %c0_20 = arith.constant 0 : index
    %c0_21 = arith.constant 0 : index
    %c0_22 = arith.constant 0 : index
    %25 = vector.load %arg6[%c0_20, %c0_21, %c0_22] : memref<5x32x16xf32, #tpu.memory_space<vmem>>, vector<1x32x16xf32>
    %26 = vector.shape_cast %25 : vector<1x32x16xf32> to vector<32x16xf32>
    %27 = vector.extract_strided_slice %24 {offsets = [0, 0], sizes = [16, 256], strides = [1, 1]} : vector<16x1280xf32> to vector<16x256xf32>
    %cst_23 = arith.constant dense<0.000000e+00> : vector<32x256xf32>
    %28 = tpu.matmul %26, %27, %cst_23 {dimension_numbers = #tpu.dot_dimension_numbers<[1], [0], [0], [1], [0, 0, 1, 1], [], []>} : vector<32x16xf32>, vector<16x256xf32>, vector<32x256xf32> -> vector<32x256xf32>
    %c1_24 = arith.constant 1 : index
    %c0_25 = arith.constant 0 : index
    %c0_26 = arith.constant 0 : index
    %29 = vector.load %arg6[%c1_24, %c0_25, %c0_26] : memref<5x32x16xf32, #tpu.memory_space<vmem>>, vector<1x32x16xf32>
    %30 = vector.shape_cast %29 : vector<1x32x16xf32> to vector<32x16xf32>
    %31 = vector.extract_strided_slice %24 {offsets = [0, 256], sizes = [16, 256], strides = [1, 1]} : vector<16x1280xf32> to vector<16x256xf32>
    %cst_27 = arith.constant dense<0.000000e+00> : vector<32x256xf32>
    %32 = tpu.matmul %30, %31, %cst_27 {dimension_numbers = #tpu.dot_dimension_numbers<[1], [0], [0], [1], [0, 0, 1, 1], [], []>} : vector<32x16xf32>, vector<16x256xf32>, vector<32x256xf32> -> vector<32x256xf32>
    %c2_28 = arith.constant 2 : index
    %c0_29 = arith.constant 0 : index
    %c0_30 = arith.constant 0 : index
    %33 = vector.load %arg6[%c2_28, %c0_29, %c0_30] : memref<5x32x16xf32, #tpu.memory_space<vmem>>, vector<1x32x16xf32>
    %34 = vector.shape_cast %33 : vector<1x32x16xf32> to vector<32x16xf32>
    %35 = vector.extract_strided_slice %24 {offsets = [0, 512], sizes = [16, 256], strides = [1, 1]} : vector<16x1280xf32> to vector<16x256xf32>
    %cst_31 = arith.constant dense<0.000000e+00> : vector<32x256xf32>
    %36 = tpu.matmul %34, %35, %cst_31 {dimension_numbers = #tpu.dot_dimension_numbers<[1], [0], [0], [1], [0, 0, 1, 1], [], []>} : vector<32x16xf32>, vector<16x256xf32>, vector<32x256xf32> -> vector<32x256xf32>
    %c3 = arith.constant 3 : index
    %c0_32 = arith.constant 0 : index
    %c0_33 = arith.constant 0 : index
    %37 = vector.load %arg6[%c3, %c0_32, %c0_33] : memref<5x32x16xf32, #tpu.memory_space<vmem>>, vector<1x32x16xf32>
    %38 = vector.shape_cast %37 : vector<1x32x16xf32> to vector<32x16xf32>
    %39 = vector.extract_strided_slice %24 {offsets = [0, 768], sizes = [16, 256], strides = [1, 1]} : vector<16x1280xf32> to vector<16x256xf32>
    %cst_34 = arith.constant dense<0.000000e+00> : vector<32x256xf32>
    %40 = tpu.matmul %38, %39, %cst_34 {dimension_numbers = #tpu.dot_dimension_numbers<[1], [0], [0], [1], [0, 0, 1, 1], [], []>} : vector<32x16xf32>, vector<16x256xf32>, vector<32x256xf32> -> vector<32x256xf32>
    %c4 = arith.constant 4 : index
    %c0_35 = arith.constant 0 : index
    %c0_36 = arith.constant 0 : index
    %41 = vector.load %arg6[%c4, %c0_35, %c0_36] : memref<5x32x16xf32, #tpu.memory_space<vmem>>, vector<1x32x16xf32>
    %42 = vector.shape_cast %41 : vector<1x32x16xf32> to vector<32x16xf32>
    %43 = vector.extract_strided_slice %24 {offsets = [0, 1024], sizes = [16, 256], strides = [1, 1]} : vector<16x1280xf32> to vector<16x256xf32>
    %cst_37 = arith.constant dense<0.000000e+00> : vector<32x256xf32>
    %44 = tpu.matmul %42, %43, %cst_37 {dimension_numbers = #tpu.dot_dimension_numbers<[1], [0], [0], [1], [0, 0, 1, 1], [], []>} : vector<32x16xf32>, vector<16x256xf32>, vector<32x256xf32> -> vector<32x256xf32>
    %45 = arith.addf %28, %32 : vector<32x256xf32>
    %46 = arith.addf %36, %40 : vector<32x256xf32>
    %47 = arith.addf %45, %46 : vector<32x256xf32>
    %48 = arith.addf %47, %44 : vector<32x256xf32>
    %c0_38 = arith.constant 0 : index
    %c0_39 = arith.constant 0 : index
    %49 = vector.load %arg7[%c0_38, %c0_39] : memref<1x256xf32, #tpu.memory_space<vmem>>, vector<1x256xf32>
    %50 = vector.broadcast %49 : vector<1x256xf32> to vector<32x256xf32>
    %51 = arith.addf %48, %50 : vector<32x256xf32>
    %cst_40 = arith.constant 0.000000e+00 : f32
    %52 = vector.broadcast %cst_40 : f32 to vector<32x256xf32>
    %53 = arith.maximumf %51, %52 : vector<32x256xf32>
    %c0_41 = arith.constant 0 : index
    %c0_42 = arith.constant 0 : index
    %54 = vector.load %arg8[%c0_41, %c0_42] : memref<256x256xf32, #tpu.memory_space<vmem>>, vector<256x256xf32>
    %cst_43 = arith.constant dense<0.000000e+00> : vector<32x256xf32>
    %55 = tpu.matmul %53, %54, %cst_43 {dimension_numbers = #tpu.dot_dimension_numbers<[1], [0], [0], [1], [0, 0, 1, 1], [], []>} : vector<32x256xf32>, vector<256x256xf32>, vector<32x256xf32> -> vector<32x256xf32>
    %c0_44 = arith.constant 0 : index
    %c0_45 = arith.constant 0 : index
    %c0_46 = arith.constant 0 : index
    %56 = vector.load %arg9[%c0_44, %c0_45, %c0_46] : memref<2x56x32xf32, #tpu.memory_space<vmem>>, vector<1x56x32xf32>
    %57 = vector.shape_cast %56 : vector<1x56x32xf32> to vector<56x32xf32>
    %58 = vector.extract_strided_slice %55 {offsets = [0, 0], sizes = [32, 128], strides = [1, 1]} : vector<32x256xf32> to vector<32x128xf32>
    %cst_47 = arith.constant dense<0.000000e+00> : vector<56x128xf32>
    %59 = tpu.matmul %57, %58, %cst_47 {dimension_numbers = #tpu.dot_dimension_numbers<[1], [0], [0], [1], [0, 0, 1, 1], [], []>} : vector<56x32xf32>, vector<32x128xf32>, vector<56x128xf32> -> vector<56x128xf32>
    %c1_48 = arith.constant 1 : index
    %c0_49 = arith.constant 0 : index
    %c0_50 = arith.constant 0 : index
    %60 = vector.load %arg9[%c1_48, %c0_49, %c0_50] : memref<2x56x32xf32, #tpu.memory_space<vmem>>, vector<1x56x32xf32>
    %61 = vector.shape_cast %60 : vector<1x56x32xf32> to vector<56x32xf32>
    %62 = vector.extract_strided_slice %55 {offsets = [0, 128], sizes = [32, 128], strides = [1, 1]} : vector<32x256xf32> to vector<32x128xf32>
    %cst_51 = arith.constant dense<0.000000e+00> : vector<56x128xf32>
    %63 = tpu.matmul %61, %62, %cst_51 {dimension_numbers = #tpu.dot_dimension_numbers<[1], [0], [0], [1], [0, 0, 1, 1], [], []>} : vector<56x32xf32>, vector<32x128xf32>, vector<56x128xf32> -> vector<56x128xf32>
    %64 = arith.addf %59, %63 : vector<56x128xf32>
    %c0_52 = arith.constant 0 : index
    %c0_53 = arith.constant 0 : index
    %65 = vector.load %arg10[%c0_52, %c0_53] : memref<1x128xf32, #tpu.memory_space<vmem>>, vector<1x128xf32>
    %66 = vector.broadcast %65 : vector<1x128xf32> to vector<56x128xf32>
    %67 = arith.addf %64, %66 : vector<56x128xf32>
    %68 = math.tanh %67 : vector<56x128xf32>
    %c0_54 = arith.constant 0 : index
    %c0_55 = arith.constant 0 : index
    %c0_56 = arith.constant 0 : index
    %69 = vector.load %arg11[%c0_54, %c0_55, %c0_56] : memref<1x56x128xf32, #tpu.memory_space<vmem>>, vector<1x56x128xf32>
    %70 = vector.shape_cast %69 : vector<1x56x128xf32> to vector<56x128xf32>
    %71 = vector.shape_cast %68 : vector<56x128xf32> to vector<1x56x128xf32>
    tpu.vector_store %arg11[%c0_54, %c0_55, %c0_56], %71 {strides = array<i32>} : memref<1x56x128xf32, #tpu.memory_space<vmem>>, vector<1x56x128xf32>,
    return
  }
  func.func @transform_0(%arg0: i32) -> (i32, i32, i32) {
    %c0_i32 = arith.constant 0 : i32
    %c0_i32_0 = arith.constant 0 : i32
    %c0_i32_1 = arith.constant 0 : i32
    return %arg0, %c0_i32, %c0_i32_0 : i32, i32, i32
  }
  func.func @transform_1(%arg0: i32) -> (i32, i32) {
    %c0_i32 = arith.constant 0 : i32
    %c0_i32_0 = arith.constant 0 : i32
    %c0_i32_1 = arith.constant 0 : i32
    return %c0_i32, %c0_i32_0 : i32, i32
  }
  func.func @transform_2(%arg0: i32) -> (i32, i32, i32) {
    %c0_i32 = arith.constant 0 : i32
    %c0_i32_0 = arith.constant 0 : i32
    %c0_i32_1 = arith.constant 0 : i32
    %c0_i32_2 = arith.constant 0 : i32
    return %c0_i32, %c0_i32_0, %c0_i32_1 : i32, i32, i32
  }
  func.func @transform_3(%arg0: i32) -> (i32, i32) {
    %c0_i32 = arith.constant 0 : i32
    %c0_i32_0 = arith.constant 0 : i32
    %c0_i32_1 = arith.constant 0 : i32
    return %c0_i32, %c0_i32_0 : i32, i32
  }
  func.func @transform_4(%arg0: i32) -> (i32, i32) {
    %c0_i32 = arith.constant 0 : i32
    %c0_i32_0 = arith.constant 0 : i32
    %c0_i32_1 = arith.constant 0 : i32
    return %c0_i32, %c0_i32_0 : i32, i32
  }
  func.func @transform_5(%arg0: i32) -> (i32, i32, i32) {
    %c0_i32 = arith.constant 0 : i32
    %c0_i32_0 = arith.constant 0 : i32
    %c0_i32_1 = arith.constant 0 : i32
    %c0_i32_2 = arith.constant 0 : i32
    return %c0_i32, %c0_i32_0, %c0_i32_1 : i32, i32, i32
  }
  func.func @transform_6(%arg0: i32) -> (i32, i32) {
    %c0_i32 = arith.constant 0 : i32
    %c0_i32_0 = arith.constant 0 : i32
    %c0_i32_1 = arith.constant 0 : i32
    return %c0_i32, %c0_i32_0 : i32, i32
  }
  func.func @transform_7(%arg0: i32) -> (i32, i32) {
    %c0_i32 = arith.constant 0 : i32
    %c0_i32_0 = arith.constant 0 : i32
    %c0_i32_1 = arith.constant 0 : i32
    return %c0_i32, %c0_i32_0 : i32, i32
  }
  func.func @transform_8(%arg0: i32) -> (i32, i32, i32) {
    %c0_i32 = arith.constant 0 : i32
    %c0_i32_0 = arith.constant 0 : i32
    %c0_i32_1 = arith.constant 0 : i32
    %c0_i32_2 = arith.constant 0 : i32
    return %c0_i32, %c0_i32_0, %c0_i32_1 : i32, i32, i32
  }
  func.func @transform_9(%arg0: i32) -> (i32, i32) {
    %c0_i32 = arith.constant 0 : i32
    %c0_i32_0 = arith.constant 0 : i32
    %c0_i32_1 = arith.constant 0 : i32
    return %c0_i32, %c0_i32_0 : i32, i32
  }
  func.func @transform_10(%arg0: i32) -> (i32, i32, i32) {
    %c0_i32 = arith.constant 0 : i32
    %c0_i32_0 = arith.constant 0 : i32
    %c0_i32_1 = arith.constant 0 : i32
    return %arg0, %c0_i32, %c0_i32_0 : i32, i32, i32
  }
}

</mosaic_0001>

<llo_original>
// kernel: decoder2_apply.1
$region0: #{decoder2_apply.1}
  #allocation0 [shape = 'u32[]', space=smem, size = 0x4, offset = 0x4, fixed_abs, tag = 'smem constant byte address 0x4 - core index']
  #allocation1 [shape = 'u32[144,128]{1,0:T(1,128)}', space=vmem, size = 0x12000, scoped, tag = 'internal scratch']
  %s0 = inlined_call_operand.vmem [shape: f32[2,8,128], index: 0, kind: input, shape index: {}]
  %s1 = inlined_call_operand.hbm [shape: f32[128,768], index: 1, kind: input, shape index: {}]
  %s2 = inlined_call_operand.vmem [shape: f32[3,16,8], index: 2, kind: input, shape index: {}]
  %s3 = inlined_call_operand.hbm [shape: f32[1,256], index: 3, kind: input, shape index: {}]
  %s4 = inlined_call_operand.hbm [shape: f32[256,1280], index: 4, kind: input, shape index: {}]
  %s5 = inlined_call_operand.vmem [shape: f32[5,32,16], index: 5, kind: input, shape index: {}]
  %s6 = inlined_call_operand.hbm [shape: f32[1,256], index: 6, kind: input, shape index: {}]
  %s7 = inlined_call_operand.hbm [shape: f32[256,256], index: 7, kind: input, shape index: {}]
  %s8 = inlined_call_operand.vmem [shape: f32[2,56,32], index: 8, kind: input, shape index: {}]
  %s9 = inlined_call_operand.hbm [shape: f32[1,128], index: 9, kind: input, shape index: {}]
  %s10 = inlined_call_operand.vmem [shape: f32[2,56,128], index: 10, kind: output, shape index: {}]
  %s11 = sld [smem:[#allocation0]]
  $region97: #{decoder2_apply.1} parent=0
    _
  %s13 = ssub.s32 1, %s11
  %s14 = scalar_select 0, %s13, %s11
  $region1: #{decoder2_apply.1} parent=0
    #allocation2 [shape = 'u8[393216]{0}', space=vmem, size = 0x60000, scoped, tag = 'input window, operand 1, single buffered']
    #allocation3 [shape = 's32[2]{0}', space=sflag, size = 0x8, scoped, tag = 'scoped memory for decoder2_apply.1']
    #allocation4 [shape = 'u8[1024]{0}', space=vmem, size = 0x400, scoped, tag = 'input window, operand 3, single buffered']
    #allocation5 [shape = 's32[1]{0}', space=sflag, size = 0x4, scoped, tag = 'scoped memory for decoder2_apply.1']
    #allocation6 [shape = 'u8[1310720]{0}', space=vmem, size = 0x140000, scoped, tag = 'input window, operand 4, single buffered']
    #allocation7 [shape = 'u8[1024]{0}', space=vmem, size = 0x400, scoped, tag = 'input window, operand 6, single buffered']
    #allocation8 [shape = 's32[1]{0}', space=sflag, size = 0x4, scoped, tag = 'scoped memory for decoder2_apply.1']
    #allocation9 [shape = 'u8[262144]{0}', space=vmem, size = 0x40000, scoped, tag = 'input window, operand 7, single buffered']
    #allocation10 [shape = 'u8[512]{0}', space=vmem, size = 0x400, scoped, tag = 'input window, operand 9, single buffered']
    #allocation11 [shape = 's32[1]{0}', space=sflag, size = 0x4, scoped, tag = 'scoped memory for decoder2_apply.1']
    %15 = vsyncpa [#allocation3], 0
    %16 = vsyncpa [#allocation5], 0
    %17 = vsyncpa [#allocation8], 0
    %18 = vsyncpa [#allocation11], 0
    loop: start=0, step=1, limit=4
    $region2: #{decoder2_apply.1} parent=1 // loop_pre_header
      _
    $region3: #{decoder2_apply.1} parent=1 // loop_header
      %s20 = sphi 0, %s24
      %p21 = scmp.ge.s32.totalorder %s20, 4
      %s30 = sphi 0, %s32
      %s33 = sphi 0, %s30
      %s34 = sphi 0, %s33
      %s50 = sphi 0, %s34
      %s54 = sphi 0, %s54
      %s56 = sphi 0, %s54
      %s57 = sphi 0, %s56
      %s71 = sphi 0, %s57
      %s75 = sphi 0, %s75
      %s77 = sphi 0, %s75
      %s78 = sphi 0, %s77
      %s92 = sphi 0, %s78
      %s96 = sphi 0, %s96
      %s98 = sphi 0, %s96
      %s99 = sphi 0, %s98
      %s113 = sphi 0, %s99
      %s117 = sphi 0, %s117
      %s119 = sphi 0, %s117
      %s120 = sphi 0, %s119
      %s134 = sphi 0, %s120
      %s138 = sphi 0, %s138
      %s140 = sphi 0, %s138
      %s141 = sphi 0, %s140
      %s155 = sphi 0, %s141
      %s159 = sphi 0, %s159
      %s161 = sphi 0, %s159
      %s162 = sphi 0, %s161
      %s176 = sphi 0, %s162
      %s180 = sphi 0, %s180
      %s182 = sphi 0, %s180
      %s183 = sphi 0, %s182
      %s197 = sphi 0, %s183
      %s201 = sphi 0, %s201
      %s203 = sphi 0, %s201
      %s204 = sphi 0, %s203
      %s218 = sphi 0, %s204
      %s222 = sphi 0, %s222
      %s224 = sphi 0, %s222
      %s225 = sphi 0, %s224
      %s239 = sphi 0, %s225
      %s245 = sphi 0, %s247
      %s248 = sphi 0, %s245
      %s249 = sphi 0, %s248
      %s265 = sphi 0, %s249
    $region4: #{decoder2_apply.1} parent=1 // loop_header_branch
      %23 = sbr.rel (%p21) target = $region8
    $region5: #{decoder2_apply.1} parent=1 // loop_body
      %s25 = ssub.s32 %s20, 1
      %s26 = ssub.s32 %s20, 2
      %s27 = sadd.s32 %s20, 1
      %s28 = ssub.s32 %s20, %s27
      %p29 = scmp.eq.s32.totalorder %s28, 0
      %s31 = sadd.s32 %s30, 1
      %s32 = scalar_select %p29, %s30, %s31
      %p35 = pneg %p29
      %p36 = scmp.eq.s32.totalorder %s20, 1
      %p37 = por %p35, %p36
      %p38 = scmp.ne.s32.totalorder %s30, %s33
      %p39 = scmp.eq.s32.totalorder %s20, 0
      %p40 = por %p38, %p39
      %p41 = scmp.ne.s32.totalorder %s30, %s33
      %p42 = scmp.eq.s32.totalorder %s25, 1
      %p43 = por %p41, %p42
      %p44 = scmp.ne.s32.totalorder %s33, %s34
      %p45 = scmp.eq.s32.totalorder %s25, 0
      %p46 = por %p44, %p45
      %p47 = scmp.ne.s32.totalorder %s33, %s34
      %p48 = scmp.eq.s32.totalorder %s26, 1
      %p49 = por %p47, %p48
      %p51 = scmp.ne.s32.totalorder %s34, %s50
      %p52 = scmp.eq.s32.totalorder %s26, 0
      %p53 = por %p51, %p52
      %s55 = sadd.s32 %s54, 1
      %p58 = scmp.eq.s32.totalorder %s20, 1
      %p59 = scmp.ne.s32.totalorder %s54, %s56
      %p60 = scmp.eq.s32.totalorder %s20, 0
      %p61 = por %p59, %p60
      %p62 = scmp.ne.s32.totalorder %s54, %s56
      %p63 = scmp.eq.s32.totalorder %s25, 1
      %p64 = por %p62, %p63
      %p65 = scmp.ne.s32.totalorder %s56, %s57
      %p66 = scmp.eq.s32.totalorder %s25, 0
      %p67 = por %p65, %p66
      %p68 = scmp.ne.s32.totalorder %s56, %s57
      %p69 = scmp.eq.s32.totalorder %s26, 1
      %p70 = por %p68, %p69
      %p72 = scmp.ne.s32.totalorder %s57, %s71
      %p73 = scmp.eq.s32.totalorder %s26, 0
      %p74 = por %p72, %p73
      %s76 = sadd.s32 %s75, 1
      %p79 = scmp.eq.s32.totalorder %s20, 1
      %p80 = scmp.ne.s32.totalorder %s75, %s77
      %p81 = scmp.eq.s32.totalorder %s20, 0
      %p82 = por %p80, %p81
      %p83 = scmp.ne.s32.totalorder %s75, %s77
      %p84 = scmp.eq.s32.totalorder %s25, 1
      %p85 = por %p83, %p84
      %p86 = scmp.ne.s32.totalorder %s77, %s78
      %p87 = scmp.eq.s32.totalorder %s25, 0
      %p88 = por %p86, %p87
      %p89 = scmp.ne.s32.totalorder %s77, %s78
      %p90 = scmp.eq.s32.totalorder %s26, 1
      %p91 = por %p89, %p90
      %p93 = scmp.ne.s32.totalorder %s78, %s92
      %p94 = scmp.eq.s32.totalorder %s26, 0
      %p95 = por %p93, %p94
      %s97 = sadd.s32 %s96, 1
      %p100 = scmp.eq.s32.totalorder %s20, 1
      %p101 = scmp.ne.s32.totalorder %s96, %s98
      %p102 = scmp.eq.s32.totalorder %s20, 0
      %p103 = por %p101, %p102
      %p104 = scmp.ne.s32.totalorder %s96, %s98
      %p105 = scmp.eq.s32.totalorder %s25, 1
      %p106 = por %p104, %p105
      %p107 = scmp.ne.s32.totalorder %s98, %s99
      %p108 = scmp.eq.s32.totalorder %s25, 0
      %p109 = por %p107, %p108
      %p110 = scmp.ne.s32.totalorder %s98, %s99
      %p111 = scmp.eq.s32.totalorder %s26, 1
      %p112 = por %p110, %p111
      %p114 = scmp.ne.s32.totalorder %s99, %s113
      %p115 = scmp.eq.s32.totalorder %s26, 0
      %p116 = por %p114, %p115
      %s118 = sadd.s32 %s117, 1
      %p121 = scmp.eq.s32.totalorder %s20, 1
      %p122 = scmp.ne.s32.totalorder %s117, %s119
      %p123 = scmp.eq.s32.totalorder %s20, 0
      %p124 = por %p122, %p123
      %p125 = scmp.ne.s32.totalorder %s117, %s119
      %p126 = scmp.eq.s32.totalorder %s25, 1
      %p127 = por %p125, %p126
      %p128 = scmp.ne.s32.totalorder %s119, %s120
      %p129 = scmp.eq.s32.totalorder %s25, 0
      %p130 = por %p128, %p129
      %p131 = scmp.ne.s32.totalorder %s119, %s120
      %p132 = scmp.eq.s32.totalorder %s26, 1
      %p133 = por %p131, %p132
      %p135 = scmp.ne.s32.totalorder %s120, %s134
      %p136 = scmp.eq.s32.totalorder %s26, 0
      %p137 = por %p135, %p136
      %s139 = sadd.s32 %s138, 1
      %p142 = scmp.eq.s32.totalorder %s20, 1
      %p143 = scmp.ne.s32.totalorder %s138, %s140
      %p144 = scmp.eq.s32.totalorder %s20, 0
      %p145 = por %p143, %p144
      %p146 = scmp.ne.s32.totalorder %s138, %s140
      %p147 = scmp.eq.s32.totalorder %s25, 1
      %p148 = por %p146, %p147
      %p149 = scmp.ne.s32.totalorder %s140, %s141
      %p150 = scmp.eq.s32.totalorder %s25, 0
      %p151 = por %p149, %p150
      %p152 = scmp.ne.s32.totalorder %s140, %s141
      %p153 = scmp.eq.s32.totalorder %s26, 1
      %p154 = por %p152, %p153
      %p156 = scmp.ne.s32.totalorder %s141, %s155
      %p157 = scmp.eq.s32.totalorder %s26, 0
      %p158 = por %p156, %p157
      %s160 = sadd.s32 %s159, 1
      %p163 = scmp.eq.s32.totalorder %s20, 1
      %p164 = scmp.ne.s32.totalorder %s159, %s161
      %p165 = scmp.eq.s32.totalorder %s20, 0
      %p166 = por %p164, %p165
      %p167 = scmp.ne.s32.totalorder %s159, %s161
      %p168 = scmp.eq.s32.totalorder %s25, 1
      %p169 = por %p167, %p168
      %p170 = scmp.ne.s32.totalorder %s161, %s162
      %p171 = scmp.eq.s32.totalorder %s25, 0
      %p172 = por %p170, %p171
      %p173 = scmp.ne.s32.totalorder %s161, %s162
      %p174 = scmp.eq.s32.totalorder %s26, 1
      %p175 = por %p173, %p174
      %p177 = scmp.ne.s32.totalorder %s162, %s176
      %p178 = scmp.eq.s32.totalorder %s26, 0
      %p179 = por %p177, %p178
      %s181 = sadd.s32 %s180, 1
      %p184 = scmp.eq.s32.totalorder %s20, 1
      %p185 = scmp.ne.s32.totalorder %s180, %s182
      %p186 = scmp.eq.s32.totalorder %s20, 0
      %p187 = por %p185, %p186
      %p188 = scmp.ne.s32.totalorder %s180, %s182
      %p189 = scmp.eq.s32.totalorder %s25, 1
      %p190 = por %p188, %p189
      %p191 = scmp.ne.s32.totalorder %s182, %s183
      %p192 = scmp.eq.s32.totalorder %s25, 0
      %p193 = por %p191, %p192
      %p194 = scmp.ne.s32.totalorder %s182, %s183
      %p195 = scmp.eq.s32.totalorder %s26, 1
      %p196 = por %p194, %p195
      %p198 = scmp.ne.s32.totalorder %s183, %s197
      %p199 = scmp.eq.s32.totalorder %s26, 0
      %p200 = por %p198, %p199
      %s202 = sadd.s32 %s201, 1
      %p205 = scmp.eq.s32.totalorder %s20, 1
      %p206 = scmp.ne.s32.totalorder %s201, %s203
      %p207 = scmp.eq.s32.totalorder %s20, 0
      %p208 = por %p206, %p207
      %p209 = scmp.ne.s32.totalorder %s201, %s203
      %p210 = scmp.eq.s32.totalorder %s25, 1
      %p211 = por %p209, %p210
      %p212 = scmp.ne.s32.totalorder %s203, %s204
      %p213 = scmp.eq.s32.totalorder %s25, 0
      %p214 = por %p212, %p213
      %p215 = scmp.ne.s32.totalorder %s203, %s204
      %p216 = scmp.eq.s32.totalorder %s26, 1
      %p217 = por %p215, %p216
      %p219 = scmp.ne.s32.totalorder %s204, %s218
      %p220 = scmp.eq.s32.totalorder %s26, 0
      %p221 = por %p219, %p220
      %s223 = sadd.s32 %s222, 1
      %p226 = scmp.eq.s32.totalorder %s20, 1
      %p227 = scmp.ne.s32.totalorder %s222, %s224
      %p228 = scmp.eq.s32.totalorder %s20, 0
      %p229 = por %p227, %p228
      %p230 = scmp.ne.s32.totalorder %s222, %s224
      %p231 = scmp.eq.s32.totalorder %s25, 1
      %p232 = por %p230, %p231
      %p233 = scmp.ne.s32.totalorder %s224, %s225
      %p234 = scmp.eq.s32.totalorder %s25, 0
      %p235 = por %p233, %p234
      %p236 = scmp.ne.s32.totalorder %s224, %s225
      %p237 = scmp.eq.s32.totalorder %s26, 1
      %p238 = por %p236, %p237
      %p240 = scmp.ne.s32.totalorder %s225, %s239
      %p241 = scmp.eq.s32.totalorder %s26, 0
      %p242 = por %p240, %p241
      %s243 = ssub.s32 %s20, %s27
      %p244 = scmp.eq.s32.totalorder %s243, 0
      %s246 = sadd.s32 %s245, 1
      %s247 = scalar_select %p244, %s245, %s246
      %p250 = pneg %p244
      %p251 = scmp.eq.s32.totalorder %s20, 1
      %p252 = por %p250, %p251
      %p253 = scmp.ne.s32.totalorder %s245, %s248
      %p254 = scmp.eq.s32.totalorder %s20, 0
      %p255 = por %p253, %p254
      %p256 = scmp.ne.s32.totalorder %s245, %s248
      %p257 = scmp.eq.s32.totalorder %s25, 1
      %p258 = por %p256, %p257
      %p259 = scmp.ne.s32.totalorder %s248, %s249
      %p260 = scmp.eq.s32.totalorder %s25, 0
      %p261 = por %p259, %p260
      %p262 = scmp.ne.s32.totalorder %s248, %s249
      %p263 = scmp.eq.s32.totalorder %s26, 1
      %p264 = por %p262, %p263
      %p266 = scmp.ne.s32.totalorder %s249, %s265
      %p267 = scmp.eq.s32.totalorder %s26, 0
      %p268 = por %p266, %p267
      %p269 = scmp.le.s32.totalorder 1, %s20
      %p270 = scmp.lt.s32.totalorder %s20, 3
      %p271 = pnand %p269, %p270
      %p272 = pneg %p271
      // Predicated region
      $region9: #{decoder2_apply.1} parent=5 // pred_check
        _
      $region10: #{decoder2_apply.1} parent=5 // pred_check_branch
        %274 = sbr.rel (%p271) target = $region12
      $region11: #{decoder2_apply.1} parent=5 // pred_region
        %s275 = ssub.s32 %s20, 1
        // Predicated region
        $region13: #{decoder2_apply.1} parent=11 // pred_check
          %p276 = pneg %p67
        $region14: #{decoder2_apply.1} parent=11 // pred_check_branch
          %278 = sbr.rel (%p276) target = $region16
        $region15: #{decoder2_apply.1} parent=11 // pred_region
          %s280 = ssub.s32 12288, 12288
          %281 = vsyncadd [#allocation3], %s280
          %s282 = sshll.u32 [#allocation2], 4
          %s283 = int_to_ptr.vmem [resolvable:$true] %s282
          %288 = dma.hbm_to_vmem [thread:$0]  %s1, 12288, %s283, [#allocation3], 768, 768, 48
        $region16: #{decoder2_apply.1} parent=11 // pred_fallthru
          _
        // Predicated region
        $region17: #{decoder2_apply.1} parent=11 // pred_check
          %p289 = pneg %p88
        $region18: #{decoder2_apply.1} parent=11 // pred_check_branch
          %291 = sbr.rel (%p289) target = $region20
        $region19: #{decoder2_apply.1} parent=11 // pred_region
          _
        $region20: #{decoder2_apply.1} parent=11 // pred_fallthru
          _
        // Predicated region
        $region21: #{decoder2_apply.1} parent=11 // pred_check
          %p292 = pneg %p109
        $region22: #{decoder2_apply.1} parent=11 // pred_check_branch
          %294 = sbr.rel (%p292) target = $region24
        $region23: #{decoder2_apply.1} parent=11 // pred_region
          %s296 = ssub.s32 32, 32
          %297 = vsyncadd [#allocation5], %s296
          %s299 = sshll.u32 [#allocation4], 4
          %s300 = int_to_ptr.vmem [resolvable:$true] %s299
          %302 = dma.hbm_to_vmem [thread:$0]  %s3, 32, %s300, [#allocation5]
        $region24: #{decoder2_apply.1} parent=11 // pred_fallthru
          _
        // Predicated region
        $region25: #{decoder2_apply.1} parent=11 // pred_check
          %p303 = pneg %p130
        $region26: #{decoder2_apply.1} parent=11 // pred_check_branch
          %305 = sbr.rel (%p303) target = $region28
        $region27: #{decoder2_apply.1} parent=11 // pred_region
          %s307 = ssub.s32 40960, 40960
          %308 = vsyncadd [#allocation5], %s307
          %s309 = sshll.u32 [#allocation6], 4
          %s310 = int_to_ptr.vmem [resolvable:$true] %s309
          %315 = dma.hbm_to_vmem [thread:$0]  %s4, 40960, %s310, [#allocation5], 1280, 1280, 80
        $region28: #{decoder2_apply.1} parent=11 // pred_fallthru
          _
        // Predicated region
        $region29: #{decoder2_apply.1} parent=11 // pred_check
          %p316 = pneg %p151
        $region30: #{decoder2_apply.1} parent=11 // pred_check_branch
          %318 = sbr.rel (%p316) target = $region32
        $region31: #{decoder2_apply.1} parent=11 // pred_region
          _
        $region32: #{decoder2_apply.1} parent=11 // pred_fallthru
          _
        // Predicated region
        $region33: #{decoder2_apply.1} parent=11 // pred_check
          %p319 = pneg %p172
        $region34: #{decoder2_apply.1} parent=11 // pred_check_branch
          %321 = sbr.rel (%p319) target = $region36
        $region35: #{decoder2_apply.1} parent=11 // pred_region
          %s323 = ssub.s32 32, 32
          %324 = vsyncadd [#allocation8], %s323
          %s326 = sshll.u32 [#allocation7], 4
          %s327 = int_to_ptr.vmem [resolvable:$true] %s326
          %329 = dma.hbm_to_vmem [thread:$0]  %s6, 32, %s327, [#allocation8]
        $region36: #{decoder2_apply.1} parent=11 // pred_fallthru
          _
        // Predicated region
        $region37: #{decoder2_apply.1} parent=11 // pred_check
          %p330 = pneg %p193
        $region38: #{decoder2_apply.1} parent=11 // pred_check_branch
          %332 = sbr.rel (%p330) target = $region40
        $region39: #{decoder2_apply.1} parent=11 // pred_region
          %s334 = ssub.s32 8192, 8192
          %335 = vsyncadd [#allocation8], %s334
          %s336 = sshll.u32 [#allocation9], 4
          %s337 = int_to_ptr.vmem [resolvable:$true] %s336
          %342 = dma.hbm_to_vmem [thread:$0]  %s7, 8192, %s337, [#allocation8], 256, 256, 16
        $region40: #{decoder2_apply.1} parent=11 // pred_fallthru
          _
        // Predicated region
        $region41: #{decoder2_apply.1} parent=11 // pred_check
          %p343 = pneg %p214
        $region42: #{decoder2_apply.1} parent=11 // pred_check_branch
          %345 = sbr.rel (%p343) target = $region44
        $region43: #{decoder2_apply.1} parent=11 // pred_region
          _
        $region44: #{decoder2_apply.1} parent=11 // pred_fallthru
          _
        // Predicated region
        $region45: #{decoder2_apply.1} parent=11 // pred_check
          %p346 = pneg %p235
        $region46: #{decoder2_apply.1} parent=11 // pred_check_branch
          %348 = sbr.rel (%p346) target = $region48
        $region47: #{decoder2_apply.1} parent=11 // pred_region
          %s350 = ssub.s32 16, 16
          %351 = vsyncadd [#allocation11], %s350
          %s353 = sshll.u32 [#allocation10], 4
          %s354 = int_to_ptr.vmem [resolvable:$true] %s353
          %356 = dma.hbm_to_vmem [thread:$0]  %s9, 16, %s354, [#allocation11]
        $region48: #{decoder2_apply.1} parent=11 // pred_fallthru
          _
      $region12: #{decoder2_apply.1} parent=5 // pred_fallthru
        _
      %p357 = scmp.lt.s32.totalorder %s20, 2
      // Predicated region
      $region49: #{decoder2_apply.1} parent=5 // pred_check
        %p358 = pneg %p357
      $region50: #{decoder2_apply.1} parent=5 // pred_check_branch
        %360 = sbr.rel (%p358) target = $region52
      $region51: #{decoder2_apply.1} parent=5 // pred_region
        // Predicated region
        $region53: #{decoder2_apply.1} parent=51 // pred_check
          %p361 = pneg %p40
        $region54: #{decoder2_apply.1} parent=51 // pred_check_branch
          %363 = sbr.rel (%p361) target = $region56
        $region55: #{decoder2_apply.1} parent=51 // pred_region
          %p364 = scmp.lt.s32.totalorder %s20, 1
          %s365 = scalar_select %p364, %s20, 1
          %s366 = smul.addr %s365, 8
          %s367 = scalar_lea.vmem %s0, %s366
        $region56: #{decoder2_apply.1} parent=51 // pred_fallthru
          _
      $region52: #{decoder2_apply.1} parent=5 // pred_fallthru
        _
      %p368 = scmp.le.s32.totalorder 1, %s20
      %p369 = scmp.lt.s32.totalorder %s20, 3
      %p370 = pnand %p368, %p369
      %p371 = pneg %p370
      // Predicated region
      $region57: #{decoder2_apply.1} parent=5 // pred_check
        _
      $region58: #{decoder2_apply.1} parent=5 // pred_check_branch
        %373 = sbr.rel (%p370) target = $region60
      $region59: #{decoder2_apply.1} parent=5 // pred_region
        %s374 = ssub.s32 %s20, 1
        // Predicated region
        $region61: #{decoder2_apply.1} parent=59 // pred_check
          %p375 = pneg %p67
        $region62: #{decoder2_apply.1} parent=59 // pred_check_branch
          %377 = sbr.rel (%p375) target = $region64
        $region63: #{decoder2_apply.1} parent=59 // pred_region
          %378 = dma.done [#allocation3], 12288
        $region64: #{decoder2_apply.1} parent=59 // pred_fallthru
          _
        // Predicated region
        $region65: #{decoder2_apply.1} parent=59 // pred_check
          %p379 = pneg %p109
        $region66: #{decoder2_apply.1} parent=59 // pred_check_branch
          %381 = sbr.rel (%p379) target = $region68
        $region67: #{decoder2_apply.1} parent=59 // pred_region
          %382 = dma.done [#allocation5], 32
        $region68: #{decoder2_apply.1} parent=59 // pred_fallthru
          _
        // Predicated region
        $region69: #{decoder2_apply.1} parent=59 // pred_check
          %p383 = pneg %p130
        $region70: #{decoder2_apply.1} parent=59 // pred_check_branch
          %385 = sbr.rel (%p383) target = $region72
        $region71: #{decoder2_apply.1} parent=59 // pred_region
          %386 = dma.done [#allocation5], 40960
        $region72: #{decoder2_apply.1} parent=59 // pred_fallthru
          _
        // Predicated region
        $region73: #{decoder2_apply.1} parent=59 // pred_check
          %p387 = pneg %p172
        $region74: #{decoder2_apply.1} parent=59 // pred_check_branch
          %389 = sbr.rel (%p387) target = $region76
        $region75: #{decoder2_apply.1} parent=59 // pred_region
          %390 = dma.done [#allocation8], 32
        $region76: #{decoder2_apply.1} parent=59 // pred_fallthru
          _
        // Predicated region
        $region77: #{decoder2_apply.1} parent=59 // pred_check
          %p391 = pneg %p193
        $region78: #{decoder2_apply.1} parent=59 // pred_check_branch
          %393 = sbr.rel (%p391) target = $region80
        $region79: #{decoder2_apply.1} parent=59 // pred_region
          %394 = dma.done [#allocation8], 8192
        $region80: #{decoder2_apply.1} parent=59 // pred_fallthru
          _
        // Predicated region
        $region81: #{decoder2_apply.1} parent=59 // pred_check
          %p395 = pneg %p235
        $region82: #{decoder2_apply.1} parent=59 // pred_check_branch
          %397 = sbr.rel (%p395) target = $region84
        $region83: #{decoder2_apply.1} parent=59 // pred_region
          %398 = dma.done [#allocation11], 16
        $region84: #{decoder2_apply.1} parent=59 // pred_fallthru
          _
        %p399 = scmp.lt.s32.totalorder %s25, 1
        %s400 = scalar_select %p399, %s25, 1
        %s401 = smul.addr %s400, 8
        %s402 = scalar_lea.vmem %s0, %s401
        %p403 = pneg %p46
        %p404 = pneg %p43
        %p405 = pneg %p67
        %p406 = pneg %p64
        %p407 = pneg %p88
        %p408 = pneg %p85
        %p409 = pneg %p109
        %p410 = pneg %p106
        %p411 = pneg %p130
        %p412 = pneg %p127
        %p413 = pneg %p151
        %p414 = pneg %p148
        %p415 = pneg %p172
        %p416 = pneg %p169
        %p417 = pneg %p193
        %p418 = pneg %p190
        %p419 = pneg %p214
        %p420 = pneg %p211
        %p421 = pneg %p235
        %p422 = pneg %p232
        %p423 = pneg %p261
        %p424 = pneg %p258
        %p425 = scmp.lt.s32.totalorder %s25, 1
        %s426 = scalar_select %p425, %s25, 1
        %s427 = smul.addr %s426, 7
        %s428 = smul.addr %s427, 8
        %s429 = scalar_lea.vmem %s10, %s428
        %p430 = scmp.lt.s32.totalorder %s25, 1
        %s431 = scalar_select %p430, %s25, 1
        %s432 = smul.addr %s431, 8
        %s433 = scalar_lea.vmem %s0, %s432
        %p434 = scmp.lt.s32.totalorder %s25, 1
        %s435 = scalar_select %p434, %s25, 1
        %s436 = smul.addr %s435, 7
        %s437 = smul.addr %s436, 8
        %s438 = scalar_lea.vmem %s10, %s437
        %v439 = vld [vmem:[%s433] sm:$0xff]
        %v440 = vld [vmem:[#allocation2] sm:$0xff]
        %v441 = vld [vmem:[#allocation2 + $0x8] sm:$0xff]
        %v442 = vld [vmem:[#allocation2 + $0x10] sm:$0xff]
        %v443 = vld [vmem:[#allocation2 + $0x18] sm:$0xff]
        %v444 = vld [vmem:[#allocation2 + $0x20] sm:$0xff]
        %v445 = vld [vmem:[#allocation2 + $0x28] sm:$0xff]
        %v446 = vld [vmem:[#allocation2 + $0x30] sm:$0xff]
        %v447 = vld [vmem:[#allocation2 + $0x38] sm:$0xff]
        %v448 = vld [vmem:[#allocation2 + $0x40] sm:$0xff]
        %v449 = vld [vmem:[#allocation2 + $0x48] sm:$0xff]
        %v450 = vld [vmem:[#allocation2 + $0x50] sm:$0xff]
        %v451 = vld [vmem:[#allocation2 + $0x58] sm:$0xff]
        %v452 = vld [vmem:[#allocation2 + $0x60] sm:$0xff]
        %v453 = vld [vmem:[#allocation2 + $0x68] sm:$0xff]
        %v454 = vld [vmem:[#allocation2 + $0x70] sm:$0xff]
        %v455 = vld [vmem:[#allocation2 + $0x78] sm:$0xff]
        %v456 = vld [vmem:[#allocation2 + $0x80] sm:$0xff]
        %v457 = vld [vmem:[#allocation2 + $0x88] sm:$0xff]
        %v458 = vld [vmem:[#allocation2 + $0x90] sm:$0xff]
        %v459 = vld [vmem:[#allocation2 + $0x98] sm:$0xff]
        %v460 = vld [vmem:[#allocation2 + $0xa0] sm:$0xff]
        %v461 = vld [vmem:[#allocation2 + $0xa8] sm:$0xff]
        %v462 = vld [vmem:[#allocation2 + $0xb0] sm:$0xff]
        %v463 = vld [vmem:[#allocation2 + $0xb8] sm:$0xff]
        %v464 = vld [vmem:[#allocation2 + $0xc0] sm:$0xff]
        %v465 = vld [vmem:[#allocation2 + $0xc8] sm:$0xff]
        %v466 = vld [vmem:[#allocation2 + $0xd0] sm:$0xff]
        %v467 = vld [vmem:[#allocation2 + $0xd8] sm:$0xff]
        %v468 = vld [vmem:[#allocation2 + $0xe0] sm:$0xff]
        %v469 = vld [vmem:[#allocation2 + $0xe8] sm:$0xff]
        %v470 = vld [vmem:[#allocation2 + $0xf0] sm:$0xff]
        %v471 = vld [vmem:[#allocation2 + $0xf8] sm:$0xff]
        %v472 = vld [vmem:[#allocation2 + $0x100] sm:$0xff]
        %v473 = vld [vmem:[#allocation2 + $0x108] sm:$0xff]
        %v474 = vld [vmem:[#allocation2 + $0x110] sm:$0xff]
        %v475 = vld [vmem:[#allocation2 + $0x118] sm:$0xff]
        %v476 = vld [vmem:[#allocation2 + $0x120] sm:$0xff]
        %v477 = vld [vmem:[#allocation2 + $0x128] sm:$0xff]
        %v478 = vld [vmem:[#allocation2 + $0x130] sm:$0xff]
        %v479 = vld [vmem:[#allocation2 + $0x138] sm:$0xff]
        %v480 = vld [vmem:[#allocation2 + $0x140] sm:$0xff]
        %v481 = vld [vmem:[#allocation2 + $0x148] sm:$0xff]
        %v482 = vld [vmem:[#allocation2 + $0x150] sm:$0xff]
        %v483 = vld [vmem:[#allocation2 + $0x158] sm:$0xff]
        %v484 = vld [vmem:[#allocation2 + $0x160] sm:$0xff]
        %v485 = vld [vmem:[#allocation2 + $0x168] sm:$0xff]
        %v486 = vld [vmem:[#allocation2 + $0x170] sm:$0xff]
        %v487 = vld [vmem:[#allocation2 + $0x178] sm:$0xff]
        %v488 = vld [vmem:[#allocation2 + $0x180] sm:$0xff]
        %v489 = vld [vmem:[#allocation2 + $0x188] sm:$0xff]
        %v490 = vld [vmem:[#allocation2 + $0x190] sm:$0xff]
        %v491 = vld [vmem:[#allocation2 + $0x198] sm:$0xff]
        %v492 = vld [vmem:[#allocation2 + $0x1a0] sm:$0xff]
        %v493 = vld [vmem:[#allocation2 + $0x1a8] sm:$0xff]
        %v494 = vld [vmem:[#allocation2 + $0x1b0] sm:$0xff]
        %v495 = vld [vmem:[#allocation2 + $0x1b8] sm:$0xff]
        %v496 = vld [vmem:[#allocation2 + $0x1c0] sm:$0xff]
        %v497 = vld [vmem:[#allocation2 + $0x1c8] sm:$0xff]
        %v498 = vld [vmem:[#allocation2 + $0x1d0] sm:$0xff]
        %v499 = vld [vmem:[#allocation2 + $0x1d8] sm:$0xff]
        %v500 = vld [vmem:[#allocation2 + $0x1e0] sm:$0xff]
        %v501 = vld [vmem:[#allocation2 + $0x1e8] sm:$0xff]
        %v502 = vld [vmem:[#allocation2 + $0x1f0] sm:$0xff]
        %v503 = vld [vmem:[#allocation2 + $0x1f8] sm:$0xff]
        %v504 = vld [vmem:[#allocation2 + $0x200] sm:$0xff]
        %v505 = vld [vmem:[#allocation2 + $0x208] sm:$0xff]
        %v506 = vld [vmem:[#allocation2 + $0x210] sm:$0xff]
        %v507 = vld [vmem:[#allocation2 + $0x218] sm:$0xff]
        %v508 = vld [vmem:[#allocation2 + $0x220] sm:$0xff]
        %v509 = vld [vmem:[#allocation2 + $0x228] sm:$0xff]
        %v510 = vld [vmem:[#allocation2 + $0x230] sm:$0xff]
        %v511 = vld [vmem:[#allocation2 + $0x238] sm:$0xff]
        %v512 = vld [vmem:[#allocation2 + $0x240] sm:$0xff]
        %v513 = vld [vmem:[#allocation2 + $0x248] sm:$0xff]
        %v514 = vld [vmem:[#allocation2 + $0x250] sm:$0xff]
        %v515 = vld [vmem:[#allocation2 + $0x258] sm:$0xff]
        %v516 = vld [vmem:[#allocation2 + $0x260] sm:$0xff]
        %v517 = vld [vmem:[#allocation2 + $0x268] sm:$0xff]
        %v518 = vld [vmem:[#allocation2 + $0x270] sm:$0xff]
        %v519 = vld [vmem:[#allocation2 + $0x278] sm:$0xff]
        %v520 = vld [vmem:[#allocation2 + $0x280] sm:$0xff]
        %v521 = vld [vmem:[#allocation2 + $0x288] sm:$0xff]
        %v522 = vld [vmem:[#allocation2 + $0x290] sm:$0xff]
        %v523 = vld [vmem:[#allocation2 + $0x298] sm:$0xff]
        %v524 = vld [vmem:[#allocation2 + $0x2a0] sm:$0xff]
        %v525 = vld [vmem:[#allocation2 + $0x2a8] sm:$0xff]
        %v526 = vld [vmem:[#allocation2 + $0x2b0] sm:$0xff]
        %v527 = vld [vmem:[#allocation2 + $0x2b8] sm:$0xff]
        %v528 = vld [vmem:[#allocation2 + $0x2c0] sm:$0xff]
        %v529 = vld [vmem:[#allocation2 + $0x2c8] sm:$0xff]
        %v530 = vld [vmem:[#allocation2 + $0x2d0] sm:$0xff]
        %v531 = vld [vmem:[#allocation2 + $0x2d8] sm:$0xff]
        %v532 = vld [vmem:[#allocation2 + $0x2e0] sm:$0xff]
        %v533 = vld [vmem:[#allocation2 + $0x2e8] sm:$0xff]
        %v534 = vld [vmem:[#allocation2 + $0x2f0] sm:$0xff]
        %v535 = vld [vmem:[#allocation2 + $0x2f8] sm:$0xff]
        %536 = vmatprep.subr.mxu0 %v441
        %537 = vmatpush1.msra.mxu0 %v440
        %538 = vmatprep.subr.mxu0 %v447
        %539 = vmatpush1.msra.mxu0 %v446
        %540 = vmatprep.subr.mxu0 %v453
        %541 = vmatpush1.msra.mxu0 %v452
        %542 = vmatprep.subr.mxu0 %v459
        %543 = vmatpush1.msra.mxu0 %v458
        %544 = vmatprep.subr.mxu0 %v465
        %545 = vmatpush1.msra.mxu0 %v464
        %546 = vmatprep.subr.mxu0 %v471
        %547 = vmatpush1.msra.mxu0 %v470
        %548 = vmatprep.subr.mxu0 %v477
        %549 = vmatpush1.msra.mxu0 %v476
        %550 = vmatprep.subr.mxu0 %v483
        %551 = vmatpush1.msra.mxu0 %v482
        %552 = vmatprep.subr.mxu0 %v489
        %553 = vmatpush1.msra.mxu0 %v488
        %554 = vmatprep.subr.mxu0 %v495
        %555 = vmatpush1.msra.mxu0 %v494
        %556 = vmatprep.subr.mxu0 %v501
        %557 = vmatpush1.msra.mxu0 %v500
        %558 = vmatprep.subr.mxu0 %v507
        %559 = vmatpush1.msra.mxu0 %v506
        %560 = vmatprep.subr.mxu0 %v513
        %561 = vmatpush1.msra.mxu0 %v512
        %562 = vmatprep.subr.mxu0 %v519
        %563 = vmatpush1.msra.mxu0 %v518
        %564 = vmatprep.subr.mxu0 %v525
        %565 = vmatpush1.msra.mxu0 %v524
        %566 = vmatprep.subr.mxu0 %v531
        %567 = vmatpush1.msra.mxu0 %v530
        %568 = vmatprep.subr.mxu0 0.0
        %569 = vmatpush1.msra.mxu0 0.0
        %570 = vmatprep.subr.mxu0 0.0
        %571 = vmatpush1.msra.mxu0 0.0
        %572 = vmatprep.subr.mxu0 0.0
        %573 = vmatpush1.msra.mxu0 0.0
        %574 = vmatprep.subr.mxu0 0.0
        %575 = vmatpush1.msra.mxu0 0.0
        %576 = vmatprep.subr.mxu0 0.0
        %577 = vmatpush1.msra.mxu0 0.0
        %578 = vmatprep.subr.mxu0 0.0
        %579 = vmatpush1.msra.mxu0 0.0
        %580 = vmatprep.subr.mxu0 0.0
        %581 = vmatpush1.msra.mxu0 0.0
        %582 = vmatprep.subr.mxu0 0.0
        %583 = vmatpush1.msra.mxu0 0.0
        %584 = vmatprep.subr.mxu0 0.0
        %585 = vmatpush1.msra.mxu0 0.0
        %586 = vmatprep.subr.mxu0 0.0
        %587 = vmatpush1.msra.mxu0 0.0
        %588 = vmatprep.subr.mxu0 0.0
        %589 = vmatpush1.msra.mxu0 0.0
        %590 = vmatprep.subr.mxu0 0.0
        %591 = vmatpush1.msra.mxu0 0.0
        %592 = vmatprep.subr.mxu0 0.0
        %593 = vmatpush1.msra.mxu0 0.0
        %594 = vmatprep.subr.mxu0 0.0
        %595 = vmatpush1.msra.mxu0 0.0
        %596 = vmatprep.subr.mxu0 0.0
        %597 = vmatpush1.msra.mxu0 0.0
        %598 = vmatprep.subr.mxu0 0.0
        %599 = vmatpush1.msra.mxu0 0.0
        %600 = vmatprep.mubr.f32.mxu0 0.0
        %601 = vmatmul.mubr.f32.gmra.mrb[0].mxu0 %v439
        %v602 = vpop.f32.mrb[0].mxu0
        %v603 = vadd.f32 0.0, %v602
        %v604 = vpop.f32.mrb[0].mxu0
        %v605 = vadd.f32 0.0, %v604
        %606 = vdwg.mxu0
        %607 = vmatprep.subr.mxu0 %v443
        %608 = vmatpush1.msra.mxu0 %v442
        %609 = vmatprep.subr.mxu0 %v449
        %610 = vmatpush1.msra.mxu0 %v448
        %611 = vmatprep.subr.mxu0 %v455
        %612 = vmatpush1.msra.mxu0 %v454
        %613 = vmatprep.subr.mxu0 %v461
        %614 = vmatpush1.msra.mxu0 %v460
        %615 = vmatprep.subr.mxu0 %v467
        %616 = vmatpush1.msra.mxu0 %v466
        %617 = vmatprep.subr.mxu0 %v473
        %618 = vmatpush1.msra.mxu0 %v472
        %619 = vmatprep.subr.mxu0 %v479
        %620 = vmatpush1.msra.mxu0 %v478
        %621 = vmatprep.subr.mxu0 %v485
        %622 = vmatpush1.msra.mxu0 %v484
        %623 = vmatprep.subr.mxu0 %v491
        %624 = vmatpush1.msra.mxu0 %v490
        %625 = vmatprep.subr.mxu0 %v497
        %626 = vmatpush1.msra.mxu0 %v496
        %627 = vmatprep.subr.mxu0 %v503
        %628 = vmatpush1.msra.mxu0 %v502
        %629 = vmatprep.subr.mxu0 %v509
        %630 = vmatpush1.msra.mxu0 %v508
        %631 = vmatprep.subr.mxu0 %v515
        %632 = vmatpush1.msra.mxu0 %v514
        %633 = vmatprep.subr.mxu0 %v521
        %634 = vmatpush1.msra.mxu0 %v520
        %635 = vmatprep.subr.mxu0 %v527
        %636 = vmatpush1.msra.mxu0 %v526
        %637 = vmatprep.subr.mxu0 %v533
        %638 = vmatpush1.msra.mxu0 %v532
        %639 = vmatprep.subr.mxu0 0.0
        %640 = vmatpush1.msra.mxu0 0.0
        %641 = vmatprep.subr.mxu0 0.0
        %642 = vmatpush1.msra.mxu0 0.0
        %643 = vmatprep.subr.mxu0 0.0
        %644 = vmatpush1.msra.mxu0 0.0
        %645 = vmatprep.subr.mxu0 0.0
        %646 = vmatpush1.msra.mxu0 0.0
        %647 = vmatprep.subr.mxu0 0.0
        %648 = vmatpush1.msra.mxu0 0.0
        %649 = vmatprep.subr.mxu0 0.0
        %650 = vmatpush1.msra.mxu0 0.0
        %651 = vmatprep.subr.mxu0 0.0
        %652 = vmatpush1.msra.mxu0 0.0
        %653 = vmatprep.subr.mxu0 0.0
        %654 = vmatpush1.msra.mxu0 0.0
        %655 = vmatprep.subr.mxu0 0.0
        %656 = vmatpush1.msra.mxu0 0.0
        %657 = vmatprep.subr.mxu0 0.0
        %658 = vmatpush1.msra.mxu0 0.0
        %659 = vmatprep.subr.mxu0 0.0
        %660 = vmatpush1.msra.mxu0 0.0
        %661 = vmatprep.subr.mxu0 0.0
        %662 = vmatpush1.msra.mxu0 0.0
        %663 = vmatprep.subr.mxu0 0.0
        %664 = vmatpush1.msra.mxu0 0.0
        %665 = vmatprep.subr.mxu0 0.0
        %666 = vmatpush1.msra.mxu0 0.0
        %667 = vmatprep.subr.mxu0 0.0
        %668 = vmatpush1.msra.mxu0 0.0
        %669 = vmatprep.subr.mxu0 0.0
        %670 = vmatpush1.msra.mxu0 0.0
        %671 = vmatprep.mubr.f32.mxu0 0.0
        %672 = vmatmul.mubr.f32.gmra.mrb[0].mxu0 %v439
        %v673 = vpop.f32.mrb[0].mxu0
        %v674 = vadd.f32 0.0, %v673
        %v675 = vpop.f32.mrb[0].mxu0
        %v676 = vadd.f32 0.0, %v675
        %677 = vdwg.mxu0
        %678 = vmatprep.subr.mxu0 %v445
        %679 = vmatpush1.msra.mxu0 %v444
        %680 = vmatprep.subr.mxu0 %v451
        %681 = vmatpush1.msra.mxu0 %v450
        %682 = vmatprep.subr.mxu0 %v457
        %683 = vmatpush1.msra.mxu0 %v456
        %684 = vmatprep.subr.mxu0 %v463
        %685 = vmatpush1.msra.mxu0 %v462
        %686 = vmatprep.subr.mxu0 %v469
        %687 = vmatpush1.msra.mxu0 %v468
        %688 = vmatprep.subr.mxu0 %v475
        %689 = vmatpush1.msra.mxu0 %v474
        %690 = vmatprep.subr.mxu0 %v481
        %691 = vmatpush1.msra.mxu0 %v480
        %692 = vmatprep.subr.mxu0 %v487
        %693 = vmatpush1.msra.mxu0 %v486
        %694 = vmatprep.subr.mxu0 %v493
        %695 = vmatpush1.msra.mxu0 %v492
        %696 = vmatprep.subr.mxu0 %v499
        %697 = vmatpush1.msra.mxu0 %v498
        %698 = vmatprep.subr.mxu0 %v505
        %699 = vmatpush1.msra.mxu0 %v504
        %700 = vmatprep.subr.mxu0 %v511
        %701 = vmatpush1.msra.mxu0 %v510
        %702 = vmatprep.subr.mxu0 %v517
        %703 = vmatpush1.msra.mxu0 %v516
        %704 = vmatprep.subr.mxu0 %v523
        %705 = vmatpush1.msra.mxu0 %v522
        %706 = vmatprep.subr.mxu0 %v529
        %707 = vmatpush1.msra.mxu0 %v528
        %708 = vmatprep.subr.mxu0 %v535
        %709 = vmatpush1.msra.mxu0 %v534
        %710 = vmatprep.subr.mxu0 0.0
        %711 = vmatpush1.msra.mxu0 0.0
        %712 = vmatprep.subr.mxu0 0.0
        %713 = vmatpush1.msra.mxu0 0.0
        %714 = vmatprep.subr.mxu0 0.0
        %715 = vmatpush1.msra.mxu0 0.0
        %716 = vmatprep.subr.mxu0 0.0
        %717 = vmatpush1.msra.mxu0 0.0
        %718 = vmatprep.subr.mxu0 0.0
        %719 = vmatpush1.msra.mxu0 0.0
        %720 = vmatprep.subr.mxu0 0.0
        %721 = vmatpush1.msra.mxu0 0.0
        %722 = vmatprep.subr.mxu0 0.0
        %723 = vmatpush1.msra.mxu0 0.0
        %724 = vmatprep.subr.mxu0 0.0
        %725 = vmatpush1.msra.mxu0 0.0
        %726 = vmatprep.subr.mxu0 0.0
        %727 = vmatpush1.msra.mxu0 0.0
        %728 = vmatprep.subr.mxu0 0.0
        %729 = vmatpush1.msra.mxu0 0.0
        %730 = vmatprep.subr.mxu0 0.0
        %731 = vmatpush1.msra.mxu0 0.0
        %732 = vmatprep.subr.mxu0 0.0
        %733 = vmatpush1.msra.mxu0 0.0
        %734 = vmatprep.subr.mxu0 0.0
        %735 = vmatpush1.msra.mxu0 0.0
        %736 = vmatprep.subr.mxu0 0.0
        %737 = vmatpush1.msra.mxu0 0.0
        %738 = vmatprep.subr.mxu0 0.0
        %739 = vmatpush1.msra.mxu0 0.0
        %740 = vmatprep.subr.mxu0 0.0
        %741 = vmatpush1.msra.mxu0 0.0
        %742 = vmatprep.mubr.f32.mxu0 0.0
        %743 = vmatmul.mubr.f32.gmra.mrb[0].mxu0 %v439
        %v744 = vpop.f32.mrb[0].mxu0
        %v745 = vadd.f32 0.0, %v744
        %v746 = vpop.f32.mrb[0].mxu0
        %v747 = vadd.f32 0.0, %v746
        %748 = vdwg.mxu0
        %v749 = vld [vmem:[%s2] sm:$0xff]
        %v750 = vld [vmem:[%s2 + $0x8] sm:$0xff]
        %s751 = scalar_lea.vmem %s2, 16
        %v752 = vld [vmem:[%s751] sm:$0xff]
        %v753 = vld [vmem:[%s751 + $0x8] sm:$0xff]
        %vm754 = vcmask 64512
        %v756 = vsel %vm754, %v752, 0
        %v759 = vsel %vm754, %v753, 0
        %761 = vmatprep.subr.mxu0 %v676
        %762 = vmatpush1.msra.mxu0 %v674
        %763 = vmatprep.subr.mxu0 0.0
        %764 = vmatpush1.msra.mxu0 0.0
        %765 = vmatprep.subr.mxu0 0.0
        %766 = vmatpush1.msra.mxu0 0.0
        %767 = vmatprep.subr.mxu0 0.0
        %768 = vmatpush1.msra.mxu0 0.0
        %769 = vmatprep.subr.mxu0 0.0
        %770 = vmatpush1.msra.mxu0 0.0
        %771 = vmatprep.subr.mxu0 0.0
        %772 = vmatpush1.msra.mxu0 0.0
        %773 = vmatprep.subr.mxu0 0.0
        %774 = vmatpush1.msra.mxu0 0.0
        %775 = vmatprep.subr.mxu0 0.0
        %776 = vmatpush1.msra.mxu0 0.0
        %777 = vmatprep.subr.mxu0 0.0
        %778 = vmatpush1.msra.mxu0 0.0
        %779 = vmatprep.subr.mxu0 0.0
        %780 = vmatpush1.msra.mxu0 0.0
        %781 = vmatprep.subr.mxu0 0.0
        %782 = vmatpush1.msra.mxu0 0.0
        %783 = vmatprep.subr.mxu0 0.0
        %784 = vmatpush1.msra.mxu0 0.0
        %785 = vmatprep.subr.mxu0 0.0
        %786 = vmatpush1.msra.mxu0 0.0
        %787 = vmatprep.subr.mxu0 0.0
        %788 = vmatpush1.msra.mxu0 0.0
        %789 = vmatprep.subr.mxu0 0.0
        %790 = vmatpush1.msra.mxu0 0.0
        %791 = vmatprep.subr.mxu0 0.0
        %792 = vmatpush1.msra.mxu0 0.0
        %793 = vmatprep.subr.mxu0 0.0
        %794 = vmatpush1.msra.mxu0 0.0
        %795 = vmatprep.subr.mxu0 0.0
        %796 = vmatpush1.msra.mxu0 0.0
        %797 = vmatprep.subr.mxu0 0.0
        %798 = vmatpush1.msra.mxu0 0.0
        %799 = vmatprep.subr.mxu0 0.0
        %800 = vmatpush1.msra.mxu0 0.0
        %801 = vmatprep.subr.mxu0 0.0
        %802 = vmatpush1.msra.mxu0 0.0
        %803 = vmatprep.subr.mxu0 0.0
        %804 = vmatpush1.msra.mxu0 0.0
        %805 = vmatprep.subr.mxu0 0.0
        %806 = vmatpush1.msra.mxu0 0.0
        %807 = vmatprep.subr.mxu0 0.0
        %808 = vmatpush1.msra.mxu0 0.0
        %809 = vmatprep.subr.mxu0 0.0
        %810 = vmatpush1.msra.mxu0 0.0
        %811 = vmatprep.subr.mxu0 0.0
        %812 = vmatpush1.msra.mxu0 0.0
        %813 = vmatprep.subr.mxu0 0.0
        %814 = vmatpush1.msra.mxu0 0.0
        %815 = vmatprep.subr.mxu0 0.0
        %816 = vmatpush1.msra.mxu0 0.0
        %817 = vmatprep.subr.mxu0 0.0
        %818 = vmatpush1.msra.mxu0 0.0
        %819 = vmatprep.subr.mxu0 0.0
        %820 = vmatpush1.msra.mxu0 0.0
        %821 = vmatprep.subr.mxu0 0.0
        %822 = vmatpush1.msra.mxu0 0.0
        %823 = vmatprep.subr.mxu0 0.0
        %824 = vmatpush1.msra.mxu0 0.0
        %825 = vmatprep.mubr.f32.mxu0 0.0
        %826 = vmatmul.mubr.f32.gmra.mrb[0].mxu0 %v756
        %v827 = vpop.f32.mrb[0].mxu0
        %v828 = vadd.f32 0.0, %v827
        %v829 = vpop.f32.mrb[0].mxu0
        %v830 = vadd.f32 0.0, %v829
        %831 = vmatprep.mubr.f32.mxu0 0.0
        %832 = vmatmul.mubr.f32.gmra.mrb[0].mxu0 %v759
        %v833 = vpop.f32.mrb[0].mxu0
        %v834 = vadd.f32 0.0, %v833
        %v835 = vpop.f32.mrb[0].mxu0
        %v836 = vadd.f32 0.0, %v835
        %837 = vdwg.mxu0
        %s838 = scalar_lea.vmem %s2, 32
        %v839 = vld [vmem:[%s838] sm:$0xff]
        %v840 = vld [vmem:[%s838 + $0x8] sm:$0xff]
        %v842 = vsel %vm754, %v839, 0
        %v845 = vsel %vm754, %v840, 0
        %847 = vmatprep.subr.mxu0 %v747
        %848 = vmatpush1.msra.mxu0 %v745
        %849 = vmatprep.subr.mxu0 0.0
        %850 = vmatpush1.msra.mxu0 0.0
        %851 = vmatprep.subr.mxu0 0.0
        %852 = vmatpush1.msra.mxu0 0.0
        %853 = vmatprep.subr.mxu0 0.0
        %854 = vmatpush1.msra.mxu0 0.0
        %855 = vmatprep.subr.mxu0 0.0
        %856 = vmatpush1.msra.mxu0 0.0
        %857 = vmatprep.subr.mxu0 0.0
        %858 = vmatpush1.msra.mxu0 0.0
        %859 = vmatprep.subr.mxu0 0.0
        %860 = vmatpush1.msra.mxu0 0.0
        %861 = vmatprep.subr.mxu0 0.0
        %862 = vmatpush1.msra.mxu0 0.0
        %863 = vmatprep.subr.mxu0 0.0
        %864 = vmatpush1.msra.mxu0 0.0
        %865 = vmatprep.subr.mxu0 0.0
        %866 = vmatpush1.msra.mxu0 0.0
        %867 = vmatprep.subr.mxu0 0.0
        %868 = vmatpush1.msra.mxu0 0.0
        %869 = vmatprep.subr.mxu0 0.0
        %870 = vmatpush1.msra.mxu0 0.0
        %871 = vmatprep.subr.mxu0 0.0
        %872 = vmatpush1.msra.mxu0 0.0
        %873 = vmatprep.subr.mxu0 0.0
        %874 = vmatpush1.msra.mxu0 0.0
        %875 = vmatprep.subr.mxu0 0.0
        %876 = vmatpush1.msra.mxu0 0.0
        %877 = vmatprep.subr.mxu0 0.0
        %878 = vmatpush1.msra.mxu0 0.0
        %879 = vmatprep.subr.mxu0 0.0
        %880 = vmatpush1.msra.mxu0 0.0
        %881 = vmatprep.subr.mxu0 0.0
        %882 = vmatpush1.msra.mxu0 0.0
        %883 = vmatprep.subr.mxu0 0.0
        %884 = vmatpush1.msra.mxu0 0.0
        %885 = vmatprep.subr.mxu0 0.0
        %886 = vmatpush1.msra.mxu0 0.0
        %887 = vmatprep.subr.mxu0 0.0
        %888 = vmatpush1.msra.mxu0 0.0
        %889 = vmatprep.subr.mxu0 0.0
        %890 = vmatpush1.msra.mxu0 0.0
        %891 = vmatprep.subr.mxu0 0.0
        %892 = vmatpush1.msra.mxu0 0.0
        %893 = vmatprep.subr.mxu0 0.0
        %894 = vmatpush1.msra.mxu0 0.0
        %895 = vmatprep.subr.mxu0 0.0
        %896 = vmatpush1.msra.mxu0 0.0
        %897 = vmatprep.subr.mxu0 0.0
        %898 = vmatpush1.msra.mxu0 0.0
        %899 = vmatprep.subr.mxu0 0.0
        %900 = vmatpush1.msra.mxu0 0.0
        %901 = vmatprep.subr.mxu0 0.0
        %902 = vmatpush1.msra.mxu0 0.0
        %903 = vmatprep.subr.mxu0 0.0
        %904 = vmatpush1.msra.mxu0 0.0
        %905 = vmatprep.subr.mxu0 0.0
        %906 = vmatpush1.msra.mxu0 0.0
        %907 = vmatprep.subr.mxu0 0.0
        %908 = vmatpush1.msra.mxu0 0.0
        %909 = vmatprep.subr.mxu0 0.0
        %910 = vmatpush1.msra.mxu0 0.0
        %911 = vmatprep.mubr.f32.mxu0 0.0
        %912 = vmatmul.mubr.f32.gmra.mrb[0].mxu0 %v842
        %v913 = vpop.f32.mrb[0].mxu0
        %v914 = vadd.f32 0.0, %v913
        %v915 = vpop.f32.mrb[0].mxu0
        %v916 = vadd.f32 0.0, %v915
        %917 = vmatprep.mubr.f32.mxu0 0.0
        %918 = vmatmul.mubr.f32.gmra.mrb[0].mxu0 %v845
        %v919 = vpop.f32.mrb[0].mxu0
        %v920 = vadd.f32 0.0, %v919
        %v921 = vpop.f32.mrb[0].mxu0
        %v922 = vadd.f32 0.0, %v921
        %923 = vdwg.mxu0
        %v925 = vsel %vm754, %v749, 0
        %v928 = vsel %vm754, %v750, 0
        %930 = vmatprep.subr.mxu0 %v605
        %931 = vmatpush1.msra.mxu0 %v603
        %932 = vmatprep.subr.mxu0 0.0
        %933 = vmatpush1.msra.mxu0 0.0
        %934 = vmatprep.subr.mxu0 0.0
        %935 = vmatpush1.msra.mxu0 0.0
        %936 = vmatprep.subr.mxu0 0.0
        %937 = vmatpush1.msra.mxu0 0.0
        %938 = vmatprep.subr.mxu0 0.0
        %939 = vmatpush1.msra.mxu0 0.0
        %940 = vmatprep.subr.mxu0 0.0
        %941 = vmatpush1.msra.mxu0 0.0
        %942 = vmatprep.subr.mxu0 0.0
        %943 = vmatpush1.msra.mxu0 0.0
        %944 = vmatprep.subr.mxu0 0.0
        %945 = vmatpush1.msra.mxu0 0.0
        %946 = vmatprep.subr.mxu0 0.0
        %947 = vmatpush1.msra.mxu0 0.0
        %948 = vmatprep.subr.mxu0 0.0
        %949 = vmatpush1.msra.mxu0 0.0
        %950 = vmatprep.subr.mxu0 0.0
        %951 = vmatpush1.msra.mxu0 0.0
        %952 = vmatprep.subr.mxu0 0.0
        %953 = vmatpush1.msra.mxu0 0.0
        %954 = vmatprep.subr.mxu0 0.0
        %955 = vmatpush1.msra.mxu0 0.0
        %956 = vmatprep.subr.mxu0 0.0
        %957 = vmatpush1.msra.mxu0 0.0
        %958 = vmatprep.subr.mxu0 0.0
        %959 = vmatpush1.msra.mxu0 0.0
        %960 = vmatprep.subr.mxu0 0.0
        %961 = vmatpush1.msra.mxu0 0.0
        %962 = vmatprep.subr.mxu0 0.0
        %963 = vmatpush1.msra.mxu0 0.0
        %964 = vmatprep.subr.mxu0 0.0
        %965 = vmatpush1.msra.mxu0 0.0
        %966 = vmatprep.subr.mxu0 0.0
        %967 = vmatpush1.msra.mxu0 0.0
        %968 = vmatprep.subr.mxu0 0.0
        %969 = vmatpush1.msra.mxu0 0.0
        %970 = vmatprep.subr.mxu0 0.0
        %971 = vmatpush1.msra.mxu0 0.0
        %972 = vmatprep.subr.mxu0 0.0
        %973 = vmatpush1.msra.mxu0 0.0
        %974 = vmatprep.subr.mxu0 0.0
        %975 = vmatpush1.msra.mxu0 0.0
        %976 = vmatprep.subr.mxu0 0.0
        %977 = vmatpush1.msra.mxu0 0.0
        %978 = vmatprep.subr.mxu0 0.0
        %979 = vmatpush1.msra.mxu0 0.0
        %980 = vmatprep.subr.mxu0 0.0
        %981 = vmatpush1.msra.mxu0 0.0
        %982 = vmatprep.subr.mxu0 0.0
        %983 = vmatpush1.msra.mxu0 0.0
        %984 = vmatprep.subr.mxu0 0.0
        %985 = vmatpush1.msra.mxu0 0.0
        %986 = vmatprep.subr.mxu0 0.0
        %987 = vmatpush1.msra.mxu0 0.0
        %988 = vmatprep.subr.mxu0 0.0
        %989 = vmatpush1.msra.mxu0 0.0
        %990 = vmatprep.subr.mxu0 0.0
        %991 = vmatpush1.msra.mxu0 0.0
        %992 = vmatprep.subr.mxu0 0.0
        %993 = vmatpush1.msra.mxu0 0.0
        %994 = vmatprep.mubr.f32.mxu0 0.0
        %995 = vmatmul.mubr.f32.gmra.mrb[0].mxu0 %v925
        %v996 = vpop.f32.mrb[0].mxu0
        %v997 = vadd.f32 %v828, %v996
        %v998 = vpop.f32.mrb[0].mxu0
        %v999 = vadd.f32 %v830, %v998
        %1000 = vmatprep.mubr.f32.mxu0 0.0
        %1001 = vmatmul.mubr.f32.gmra.mrb[0].mxu0 %v928
        %v1002 = vpop.f32.mrb[0].mxu0
        %v1003 = vadd.f32 %v834, %v1002
        %v1004 = vpop.f32.mrb[0].mxu0
        %v1005 = vadd.f32 %v836, %v1004
        %1006 = vdwg.mxu0
        %v1007 = vadd.f32 %v997, %v914
        %v1008 = vadd.f32 %v999, %v916
        %v1009 = vadd.f32 %v1003, %v920
        %v1010 = vadd.f32 %v1005, %v922
        %v1011 = vld [vmem:[#allocation4] sm:$0x3]
        %v1013 = vlaneseq
        %v1014 = vshrl.u32 %v1013, 7
        %v1015 = vsub.s32 0, %v1014
        %v1016 = vrot.slane %v1011, %v1015
        %v1017 = vlaneseq
        %v1018 = vshrl.u32 %v1017, 7
        %v1019 = vsub.s32 1, %v1018
        %v1020 = vrot.slane %v1011, %v1019
        %v1023 = vadd.f32 %v1007, %v1016
        %v1024 = vadd.f32 %v1008, %v1020
        %v1025 = vadd.f32 %v1009, %v1016
        %v1026 = vadd.f32 %v1010, %v1020
        %v1027 = vmax.f32 %v1023, 0.0
        %v1028 = vmax.f32 %v1024, 0.0
        %v1029 = vmax.f32 %v1025, 0.0
        %v1030 = vmax.f32 %v1026, 0.0
        %v1031 = vld [vmem:[#allocation6] sm:$0xff]
        %v1032 = vld [vmem:[#allocation6 + $0x8] sm:$0xff]
        %v1033 = vld [vmem:[#allocation6 + $0x10] sm:$0xff]
        %v1034 = vld [vmem:[#allocation6 + $0x18] sm:$0xff]
        %v1035 = vld [vmem:[#allocation6 + $0x20] sm:$0xff]
        %v1036 = vld [vmem:[#allocation6 + $0x28] sm:$0xff]
        %v1037 = vld [vmem:[#allocation6 + $0x30] sm:$0xff]
        %v1038 = vld [vmem:[#allocation6 + $0x38] sm:$0xff]
        %v1039 = vld [vmem:[#allocation6 + $0x40] sm:$0xff]
        %v1040 = vld [vmem:[#allocation6 + $0x48] sm:$0xff]
        %v1041 = vld [vmem:[#allocation6 + $0x50] sm:$0xff]
        %v1042 = vld [vmem:[#allocation6 + $0x58] sm:$0xff]
        %v1043 = vld [vmem:[#allocation6 + $0x60] sm:$0xff]
        %v1044 = vld [vmem:[#allocation6 + $0x68] sm:$0xff]
        %v1045 = vld [vmem:[#allocation6 + $0x70] sm:$0xff]
        %v1046 = vld [vmem:[#allocation6 + $0x78] sm:$0xff]
        %v1047 = vld [vmem:[#allocation6 + $0x80] sm:$0xff]
        %v1048 = vld [vmem:[#allocation6 + $0x88] sm:$0xff]
        %v1049 = vld [vmem:[#allocation6 + $0x90] sm:$0xff]
        %v1050 = vld [vmem:[#allocation6 + $0x98] sm:$0xff]
        %v1051 = vld [vmem:[#allocation6 + $0xa0] sm:$0xff]
        %v1052 = vld [vmem:[#allocation6 + $0xa8] sm:$0xff]
        %v1053 = vld [vmem:[#allocation6 + $0xb0] sm:$0xff]
        %v1054 = vld [vmem:[#allocation6 + $0xb8] sm:$0xff]
        %v1055 = vld [vmem:[#allocation6 + $0xc0] sm:$0xff]
        %v1056 = vld [vmem:[#allocation6 + $0xc8] sm:$0xff]
        %v1057 = vld [vmem:[#allocation6 + $0xd0] sm:$0xff]
        %v1058 = vld [vmem:[#allocation6 + $0xd8] sm:$0xff]
        %v1059 = vld [vmem:[#allocation6 + $0xe0] sm:$0xff]
        %v1060 = vld [vmem:[#allocation6 + $0xe8] sm:$0xff]
        %v1061 = vld [vmem:[#allocation6 + $0xf0] sm:$0xff]
        %v1062 = vld [vmem:[#allocation6 + $0xf8] sm:$0xff]
        %v1063 = vld [vmem:[#allocation6 + $0x100] sm:$0xff]
        %v1064 = vld [vmem:[#allocation6 + $0x108] sm:$0xff]
        %v1065 = vld [vmem:[#allocation6 + $0x110] sm:$0xff]
        %v1066 = vld [vmem:[#allocation6 + $0x118] sm:$0xff]
        %v1067 = vld [vmem:[#allocation6 + $0x120] sm:$0xff]
        %v1068 = vld [vmem:[#allocation6 + $0x128] sm:$0xff]
        %v1069 = vld [vmem:[#allocation6 + $0x130] sm:$0xff]
        %v1070 = vld [vmem:[#allocation6 + $0x138] sm:$0xff]
        %v1071 = vld [vmem:[#allocation6 + $0x140] sm:$0xff]
        %v1072 = vld [vmem:[#allocation6 + $0x148] sm:$0xff]
        %v1073 = vld [vmem:[#allocation6 + $0x150] sm:$0xff]
        %v1074 = vld [vmem:[#allocation6 + $0x158] sm:$0xff]
        %v1075 = vld [vmem:[#allocation6 + $0x160] sm:$0xff]
        %v1076 = vld [vmem:[#allocation6 + $0x168] sm:$0xff]
        %v1077 = vld [vmem:[#allocation6 + $0x170] sm:$0xff]
        %v1078 = vld [vmem:[#allocation6 + $0x178] sm:$0xff]
        %v1079 = vld [vmem:[#allocation6 + $0x180] sm:$0xff]
        %v1080 = vld [vmem:[#allocation6 + $0x188] sm:$0xff]
        %v1081 = vld [vmem:[#allocation6 + $0x190] sm:$0xff]
        %v1082 = vld [vmem:[#allocation6 + $0x198] sm:$0xff]
        %v1083 = vld [vmem:[#allocation6 + $0x1a0] sm:$0xff]
        %v1084 = vld [vmem:[#allocation6 + $0x1a8] sm:$0xff]
        %v1085 = vld [vmem:[#allocation6 + $0x1b0] sm:$0xff]
        %v1086 = vld [vmem:[#allocation6 + $0x1b8] sm:$0xff]
        %v1087 = vld [vmem:[#allocation6 + $0x1c0] sm:$0xff]
        %v1088 = vld [vmem:[#allocation6 + $0x1c8] sm:$0xff]
        %v1089 = vld [vmem:[#allocation6 + $0x1d0] sm:$0xff]
        %v1090 = vld [vmem:[#allocation6 + $0x1d8] sm:$0xff]
        %v1091 = vld [vmem:[#allocation6 + $0x1e0] sm:$0xff]
        %v1092 = vld [vmem:[#allocation6 + $0x1e8] sm:$0xff]
        %v1093 = vld [vmem:[#allocation6 + $0x1f0] sm:$0xff]
        %v1094 = vld [vmem:[#allocation6 + $0x1f8] sm:$0xff]
        %v1095 = vld [vmem:[#allocation6 + $0x200] sm:$0xff]
        %v1096 = vld [vmem:[#allocation6 + $0x208] sm:$0xff]
        %v1097 = vld [vmem:[#allocation6 + $0x210] sm:$0xff]
        %v1098 = vld [vmem:[#allocation6 + $0x218] sm:$0xff]
        %v1099 = vld [vmem:[#allocation6 + $0x220] sm:$0xff]
        %v1100 = vld [vmem:[#allocation6 + $0x228] sm:$0xff]
        %v1101 = vld [vmem:[#allocation6 + $0x230] sm:$0xff]
        %v1102 = vld [vmem:[#allocation6 + $0x238] sm:$0xff]
        %v1103 = vld [vmem:[#allocation6 + $0x240] sm:$0xff]
        %v1104 = vld [vmem:[#allocation6 + $0x248] sm:$0xff]
        %v1105 = vld [vmem:[#allocation6 + $0x250] sm:$0xff]
        %v1106 = vld [vmem:[#allocation6 + $0x258] sm:$0xff]
        %v1107 = vld [vmem:[#allocation6 + $0x260] sm:$0xff]
        %v1108 = vld [vmem:[#allocation6 + $0x268] sm:$0xff]
        %v1109 = vld [vmem:[#allocation6 + $0x270] sm:$0xff]
        %v1110 = vld [vmem:[#allocation6 + $0x278] sm:$0xff]
        %v1111 = vld [vmem:[#allocation6 + $0x280] sm:$0xff]
        %v1112 = vld [vmem:[#allocation6 + $0x288] sm:$0xff]
        %v1113 = vld [vmem:[#allocation6 + $0x290] sm:$0xff]
        %v1114 = vld [vmem:[#allocation6 + $0x298] sm:$0xff]
        %v1115 = vld [vmem:[#allocation6 + $0x2a0] sm:$0xff]
        %v1116 = vld [vmem:[#allocation6 + $0x2a8] sm:$0xff]
        %v1117 = vld [vmem:[#allocation6 + $0x2b0] sm:$0xff]
        %v1118 = vld [vmem:[#allocation6 + $0x2b8] sm:$0xff]
        %v1119 = vld [vmem:[#allocation6 + $0x2c0] sm:$0xff]
        %v1120 = vld [vmem:[#allocation6 + $0x2c8] sm:$0xff]
        %v1121 = vld [vmem:[#allocation6 + $0x2d0] sm:$0xff]
        %v1122 = vld [vmem:[#allocation6 + $0x2d8] sm:$0xff]
        %v1123 = vld [vmem:[#allocation6 + $0x2e0] sm:$0xff]
        %v1124 = vld [vmem:[#allocation6 + $0x2e8] sm:$0xff]
        %v1125 = vld [vmem:[#allocation6 + $0x2f0] sm:$0xff]
        %v1126 = vld [vmem:[#allocation6 + $0x2f8] sm:$0xff]
        %v1127 = vld [vmem:[#allocation6 + $0x300] sm:$0xff]
        %v1128 = vld [vmem:[#allocation6 + $0x308] sm:$0xff]
        %v1129 = vld [vmem:[#allocation6 + $0x310] sm:$0xff]
        %v1130 = vld [vmem:[#allocation6 + $0x318] sm:$0xff]
        %v1131 = vld [vmem:[#allocation6 + $0x320] sm:$0xff]
        %v1132 = vld [vmem:[#allocation6 + $0x328] sm:$0xff]
        %v1133 = vld [vmem:[#allocation6 + $0x330] sm:$0xff]
        %v1134 = vld [vmem:[#allocation6 + $0x338] sm:$0xff]
        %v1135 = vld [vmem:[#allocation6 + $0x340] sm:$0xff]
        %v1136 = vld [vmem:[#allocation6 + $0x348] sm:$0xff]
        %v1137 = vld [vmem:[#allocation6 + $0x350] sm:$0xff]
        %v1138 = vld [vmem:[#allocation6 + $0x358] sm:$0xff]
        %v1139 = vld [vmem:[#allocation6 + $0x360] sm:$0xff]
        %v1140 = vld [vmem:[#allocation6 + $0x368] sm:$0xff]
        %v1141 = vld [vmem:[#allocation6 + $0x370] sm:$0xff]
        %v1142 = vld [vmem:[#allocation6 + $0x378] sm:$0xff]
        %v1143 = vld [vmem:[#allocation6 + $0x380] sm:$0xff]
        %v1144 = vld [vmem:[#allocation6 + $0x388] sm:$0xff]
        %v1145 = vld [vmem:[#allocation6 + $0x390] sm:$0xff]
        %v1146 = vld [vmem:[#allocation6 + $0x398] sm:$0xff]
        %v1147 = vld [vmem:[#allocation6 + $0x3a0] sm:$0xff]
        %v1148 = vld [vmem:[#allocation6 + $0x3a8] sm:$0xff]
        %v1149 = vld [vmem:[#allocation6 + $0x3b0] sm:$0xff]
        %v1150 = vld [vmem:[#allocation6 + $0x3b8] sm:$0xff]
        %v1151 = vld [vmem:[#allocation6 + $0x3c0] sm:$0xff]
        %v1152 = vld [vmem:[#allocation6 + $0x3c8] sm:$0xff]
        %v1153 = vld [vmem:[#allocation6 + $0x3d0] sm:$0xff]
        %v1154 = vld [vmem:[#allocation6 + $0x3d8] sm:$0xff]
        %v1155 = vld [vmem:[#allocation6 + $0x3e0] sm:$0xff]
        %v1156 = vld [vmem:[#allocation6 + $0x3e8] sm:$0xff]
        %v1157 = vld [vmem:[#allocation6 + $0x3f0] sm:$0xff]
        %v1158 = vld [vmem:[#allocation6 + $0x3f8] sm:$0xff]
        %v1159 = vld [vmem:[#allocation6 + $0x400] sm:$0xff]
        %v1160 = vld [vmem:[#allocation6 + $0x408] sm:$0xff]
        %v1161 = vld [vmem:[#allocation6 + $0x410] sm:$0xff]
        %v1162 = vld [vmem:[#allocation6 + $0x418] sm:$0xff]
        %v1163 = vld [vmem:[#allocation6 + $0x420] sm:$0xff]
        %v1164 = vld [vmem:[#allocation6 + $0x428] sm:$0xff]
        %v1165 = vld [vmem:[#allocation6 + $0x430] sm:$0xff]
        %v1166 = vld [vmem:[#allocation6 + $0x438] sm:$0xff]
        %v1167 = vld [vmem:[#allocation6 + $0x440] sm:$0xff]
        %v1168 = vld [vmem:[#allocation6 + $0x448] sm:$0xff]
        %v1169 = vld [vmem:[#allocation6 + $0x450] sm:$0xff]
        %v1170 = vld [vmem:[#allocation6 + $0x458] sm:$0xff]
        %v1171 = vld [vmem:[#allocation6 + $0x460] sm:$0xff]
        %v1172 = vld [vmem:[#allocation6 + $0x468] sm:$0xff]
        %v1173 = vld [vmem:[#allocation6 + $0x470] sm:$0xff]
        %v1174 = vld [vmem:[#allocation6 + $0x478] sm:$0xff]
        %v1175 = vld [vmem:[#allocation6 + $0x480] sm:$0xff]
        %v1176 = vld [vmem:[#allocation6 + $0x488] sm:$0xff]
        %v1177 = vld [vmem:[#allocation6 + $0x490] sm:$0xff]
        %v1178 = vld [vmem:[#allocation6 + $0x498] sm:$0xff]
        %v1179 = vld [vmem:[#allocation6 + $0x4a0] sm:$0xff]
        %v1180 = vld [vmem:[#allocation6 + $0x4a8] sm:$0xff]
        %v1181 = vld [vmem:[#allocation6 + $0x4b0] sm:$0xff]
        %v1182 = vld [vmem:[#allocation6 + $0x4b8] sm:$0xff]
        %v1183 = vld [vmem:[#allocation6 + $0x4c0] sm:$0xff]
        %v1184 = vld [vmem:[#allocation6 + $0x4c8] sm:$0xff]
        %v1185 = vld [vmem:[#allocation6 + $0x4d0] sm:$0xff]
        %v1186 = vld [vmem:[#allocation6 + $0x4d8] sm:$0xff]
        %v1187 = vld [vmem:[#allocation6 + $0x4e0] sm:$0xff]
        %v1188 = vld [vmem:[#allocation6 + $0x4e8] sm:$0xff]
        %v1189 = vld [vmem:[#allocation6 + $0x4f0] sm:$0xff]
        %v1190 = vld [vmem:[#allocation6 + $0x4f8] sm:$0xff]
        %v1191 = vld [vmem:[#allocation6 + $0x500] sm:$0xff]
        %v1192 = vld [vmem:[#allocation6 + $0x508] sm:$0xff]
        %v1193 = vld [vmem:[#allocation6 + $0x510] sm:$0xff]
        %v1194 = vld [vmem:[#allocation6 + $0x518] sm:$0xff]
        %v1195 = vld [vmem:[#allocation6 + $0x520] sm:$0xff]
        %v1196 = vld [vmem:[#allocation6 + $0x528] sm:$0xff]
        %v1197 = vld [vmem:[#allocation6 + $0x530] sm:$0xff]
        %v1198 = vld [vmem:[#allocation6 + $0x538] sm:$0xff]
        %v1199 = vld [vmem:[#allocation6 + $0x540] sm:$0xff]
        %v1200 = vld [vmem:[#allocation6 + $0x548] sm:$0xff]
        %v1201 = vld [vmem:[#allocation6 + $0x550] sm:$0xff]
        %v1202 = vld [vmem:[#allocation6 + $0x558] sm:$0xff]
        %v1203 = vld [vmem:[#allocation6 + $0x560] sm:$0xff]
        %v1204 = vld [vmem:[#allocation6 + $0x568] sm:$0xff]
        %v1205 = vld [vmem:[#allocation6 + $0x570] sm:$0xff]
        %v1206 = vld [vmem:[#allocation6 + $0x578] sm:$0xff]
        %v1207 = vld [vmem:[#allocation6 + $0x580] sm:$0xff]
        %v1208 = vld [vmem:[#allocation6 + $0x588] sm:$0xff]
        %v1209 = vld [vmem:[#allocation6 + $0x590] sm:$0xff]
        %v1210 = vld [vmem:[#allocation6 + $0x598] sm:$0xff]
        %v1211 = vld [vmem:[#allocation6 + $0x5a0] sm:$0xff]
        %v1212 = vld [vmem:[#allocation6 + $0x5a8] sm:$0xff]
        %v1213 = vld [vmem:[#allocation6 + $0x5b0] sm:$0xff]
        %v1214 = vld [vmem:[#allocation6 + $0x5b8] sm:$0xff]
        %v1215 = vld [vmem:[#allocation6 + $0x5c0] sm:$0xff]
        %v1216 = vld [vmem:[#allocation6 + $0x5c8] sm:$0xff]
        %v1217 = vld [vmem:[#allocation6 + $0x5d0] sm:$0xff]
        %v1218 = vld [vmem:[#allocation6 + $0x5d8] sm:$0xff]
        %v1219 = vld [vmem:[#allocation6 + $0x5e0] sm:$0xff]
        %v1220 = vld [vmem:[#allocation6 + $0x5e8] sm:$0xff]
        %v1221 = vld [vmem:[#allocation6 + $0x5f0] sm:$0xff]
        %v1222 = vld [vmem:[#allocation6 + $0x5f8] sm:$0xff]
        %v1223 = vld [vmem:[#allocation6 + $0x600] sm:$0xff]
        %v1224 = vld [vmem:[#allocation6 + $0x608] sm:$0xff]
        %v1225 = vld [vmem:[#allocation6 + $0x610] sm:$0xff]
        %v1226 = vld [vmem:[#allocation6 + $0x618] sm:$0xff]
        %v1227 = vld [vmem:[#allocation6 + $0x620] sm:$0xff]
        %v1228 = vld [vmem:[#allocation6 + $0x628] sm:$0xff]
        %v1229 = vld [vmem:[#allocation6 + $0x630] sm:$0xff]
        %v1230 = vld [vmem:[#allocation6 + $0x638] sm:$0xff]
        %v1231 = vld [vmem:[#allocation6 + $0x640] sm:$0xff]
        %v1232 = vld [vmem:[#allocation6 + $0x648] sm:$0xff]
        %v1233 = vld [vmem:[#allocation6 + $0x650] sm:$0xff]
        %v1234 = vld [vmem:[#allocation6 + $0x658] sm:$0xff]
        %v1235 = vld [vmem:[#allocation6 + $0x660] sm:$0xff]
        %v1236 = vld [vmem:[#allocation6 + $0x668] sm:$0xff]
        %v1237 = vld [vmem:[#allocation6 + $0x670] sm:$0xff]
        %v1238 = vld [vmem:[#allocation6 + $0x678] sm:$0xff]
        %v1239 = vld [vmem:[#allocation6 + $0x680] sm:$0xff]
        %v1240 = vld [vmem:[#allocation6 + $0x688] sm:$0xff]
        %v1241 = vld [vmem:[#allocation6 + $0x690] sm:$0xff]
        %v1242 = vld [vmem:[#allocation6 + $0x698] sm:$0xff]
        %v1243 = vld [vmem:[#allocation6 + $0x6a0] sm:$0xff]
        %v1244 = vld [vmem:[#allocation6 + $0x6a8] sm:$0xff]
        %v1245 = vld [vmem:[#allocation6 + $0x6b0] sm:$0xff]
        %v1246 = vld [vmem:[#allocation6 + $0x6b8] sm:$0xff]
        %v1247 = vld [vmem:[#allocation6 + $0x6c0] sm:$0xff]
        %v1248 = vld [vmem:[#allocation6 + $0x6c8] sm:$0xff]
        %v1249 = vld [vmem:[#allocation6 + $0x6d0] sm:$0xff]
        %v1250 = vld [vmem:[#allocation6 + $0x6d8] sm:$0xff]
        %v1251 = vld [vmem:[#allocation6 + $0x6e0] sm:$0xff]
        %v1252 = vld [vmem:[#allocation6 + $0x6e8] sm:$0xff]
        %v1253 = vld [vmem:[#allocation6 + $0x6f0] sm:$0xff]
        %v1254 = vld [vmem:[#allocation6 + $0x6f8] sm:$0xff]
        %v1255 = vld [vmem:[#allocation6 + $0x700] sm:$0xff]
        %v1256 = vld [vmem:[#allocation6 + $0x708] sm:$0xff]
        %v1257 = vld [vmem:[#allocation6 + $0x710] sm:$0xff]
        %v1258 = vld [vmem:[#allocation6 + $0x718] sm:$0xff]
        %v1259 = vld [vmem:[#allocation6 + $0x720] sm:$0xff]
        %v1260 = vld [vmem:[#allocation6 + $0x728] sm:$0xff]
        %v1261 = vld [vmem:[#allocation6 + $0x730] sm:$0xff]
        %v1262 = vld [vmem:[#allocation6 + $0x738] sm:$0xff]
        %v1263 = vld [vmem:[#allocation6 + $0x740] sm:$0xff]
        %v1264 = vld [vmem:[#allocation6 + $0x748] sm:$0xff]
        %v1265 = vld [vmem:[#allocation6 + $0x750] sm:$0xff]
        %v1266 = vld [vmem:[#allocation6 + $0x758] sm:$0xff]
        %v1267 = vld [vmem:[#allocation6 + $0x760] sm:$0xff]
        %v1268 = vld [vmem:[#allocation6 + $0x768] sm:$0xff]
        %v1269 = vld [vmem:[#allocation6 + $0x770] sm:$0xff]
        %v1270 = vld [vmem:[#allocation6 + $0x778] sm:$0xff]
        %v1271 = vld [vmem:[#allocation6 + $0x780] sm:$0xff]
        %v1272 = vld [vmem:[#allocation6 + $0x788] sm:$0xff]
        %v1273 = vld [vmem:[#allocation6 + $0x790] sm:$0xff]
        %v1274 = vld [vmem:[#allocation6 + $0x798] sm:$0xff]
        %v1275 = vld [vmem:[#allocation6 + $0x7a0] sm:$0xff]
        %v1276 = vld [vmem:[#allocation6 + $0x7a8] sm:$0xff]
        %v1277 = vld [vmem:[#allocation6 + $0x7b0] sm:$0xff]
        %v1278 = vld [vmem:[#allocation6 + $0x7b8] sm:$0xff]
        %v1279 = vld [vmem:[#allocation6 + $0x7c0] sm:$0xff]
        %v1280 = vld [vmem:[#allocation6 + $0x7c8] sm:$0xff]
        %v1281 = vld [vmem:[#allocation6 + $0x7d0] sm:$0xff]
        %v1282 = vld [vmem:[#allocation6 + $0x7d8] sm:$0xff]
        %v1283 = vld [vmem:[#allocation6 + $0x7e0] sm:$0xff]
        %v1284 = vld [vmem:[#allocation6 + $0x7e8] sm:$0xff]
        %v1285 = vld [vmem:[#allocation6 + $0x7f0] sm:$0xff]
        %v1286 = vld [vmem:[#allocation6 + $0x7f8] sm:$0xff]
        %v1287 = vld [vmem:[#allocation6 + $0x800] sm:$0xff]
        %v1288 = vld [vmem:[#allocation6 + $0x808] sm:$0xff]
        %v1289 = vld [vmem:[#allocation6 + $0x810] sm:$0xff]
        %v1290 = vld [vmem:[#allocation6 + $0x818] sm:$0xff]
        %v1291 = vld [vmem:[#allocation6 + $0x820] sm:$0xff]
        %v1292 = vld [vmem:[#allocation6 + $0x828] sm:$0xff]
        %v1293 = vld [vmem:[#allocation6 + $0x830] sm:$0xff]
        %v1294 = vld [vmem:[#allocation6 + $0x838] sm:$0xff]
        %v1295 = vld [vmem:[#allocation6 + $0x840] sm:$0xff]
        %v1296 = vld [vmem:[#allocation6 + $0x848] sm:$0xff]
        %v1297 = vld [vmem:[#allocation6 + $0x850] sm:$0xff]
        %v1298 = vld [vmem:[#allocation6 + $0x858] sm:$0xff]
        %v1299 = vld [vmem:[#allocation6 + $0x860] sm:$0xff]
        %v1300 = vld [vmem:[#allocation6 + $0x868] sm:$0xff]
        %v1301 = vld [vmem:[#allocation6 + $0x870] sm:$0xff]
        %v1302 = vld [vmem:[#allocation6 + $0x878] sm:$0xff]
        %v1303 = vld [vmem:[#allocation6 + $0x880] sm:$0xff]
        %v1304 = vld [vmem:[#allocation6 + $0x888] sm:$0xff]
        %v1305 = vld [vmem:[#allocation6 + $0x890] sm:$0xff]
        %v1306 = vld [vmem:[#allocation6 + $0x898] sm:$0xff]
        %v1307 = vld [vmem:[#allocation6 + $0x8a0] sm:$0xff]
        %v1308 = vld [vmem:[#allocation6 + $0x8a8] sm:$0xff]
        %v1309 = vld [vmem:[#allocation6 + $0x8b0] sm:$0xff]
        %v1310 = vld [vmem:[#allocation6 + $0x8b8] sm:$0xff]
        %v1311 = vld [vmem:[#allocation6 + $0x8c0] sm:$0xff]
        %v1312 = vld [vmem:[#allocation6 + $0x8c8] sm:$0xff]
        %v1313 = vld [vmem:[#allocation6 + $0x8d0] sm:$0xff]
        %v1314 = vld [vmem:[#allocation6 + $0x8d8] sm:$0xff]
        %v1315 = vld [vmem:[#allocation6 + $0x8e0] sm:$0xff]
        %v1316 = vld [vmem:[#allocation6 + $0x8e8] sm:$0xff]
        %v1317 = vld [vmem:[#allocation6 + $0x8f0] sm:$0xff]
        %v1318 = vld [vmem:[#allocation6 + $0x8f8] sm:$0xff]
        %v1319 = vld [vmem:[#allocation6 + $0x900] sm:$0xff]
        %v1320 = vld [vmem:[#allocation6 + $0x908] sm:$0xff]
        %v1321 = vld [vmem:[#allocation6 + $0x910] sm:$0xff]
        %v1322 = vld [vmem:[#allocation6 + $0x918] sm:$0xff]
        %v1323 = vld [vmem:[#allocation6 + $0x920] sm:$0xff]
        %v1324 = vld [vmem:[#allocation6 + $0x928] sm:$0xff]
        %v1325 = vld [vmem:[#allocation6 + $0x930] sm:$0xff]
        %v1326 = vld [vmem:[#allocation6 + $0x938] sm:$0xff]
        %v1327 = vld [vmem:[#allocation6 + $0x940] sm:$0xff]
        %v1328 = vld [vmem:[#allocation6 + $0x948] sm:$0xff]
        %v1329 = vld [vmem:[#allocation6 + $0x950] sm:$0xff]
        %v1330 = vld [vmem:[#allocation6 + $0x958] sm:$0xff]
        %v1331 = vld [vmem:[#allocation6 + $0x960] sm:$0xff]
        %v1332 = vld [vmem:[#allocation6 + $0x968] sm:$0xff]
        %v1333 = vld [vmem:[#allocation6 + $0x970] sm:$0xff]
        %v1334 = vld [vmem:[#allocation6 + $0x978] sm:$0xff]
        %v1335 = vld [vmem:[#allocation6 + $0x980] sm:$0xff]
        %v1336 = vld [vmem:[#allocation6 + $0x988] sm:$0xff]
        %v1337 = vld [vmem:[#allocation6 + $0x990] sm:$0xff]
        %v1338 = vld [vmem:[#allocation6 + $0x998] sm:$0xff]
        %v1339 = vld [vmem:[#allocation6 + $0x9a0] sm:$0xff]
        %v1340 = vld [vmem:[#allocation6 + $0x9a8] sm:$0xff]
        %v1341 = vld [vmem:[#allocation6 + $0x9b0] sm:$0xff]
        %v1342 = vld [vmem:[#allocation6 + $0x9b8] sm:$0xff]
        %v1343 = vld [vmem:[#allocation6 + $0x9c0] sm:$0xff]
        %v1344 = vld [vmem:[#allocation6 + $0x9c8] sm:$0xff]
        %v1345 = vld [vmem:[#allocation6 + $0x9d0] sm:$0xff]
        %v1346 = vld [vmem:[#allocation6 + $0x9d8] sm:$0xff]
        %v1347 = vld [vmem:[#allocation6 + $0x9e0] sm:$0xff]
        %v1348 = vld [vmem:[#allocation6 + $0x9e8] sm:$0xff]
        %v1349 = vld [vmem:[#allocation6 + $0x9f0] sm:$0xff]
        %v1350 = vld [vmem:[#allocation6 + $0x9f8] sm:$0xff]
        %1351 = vmatprep.subr.mxu0 %v1032
        %1352 = vmatpush1.msra.mxu0 %v1031
        %1353 = vmatprep.subr.mxu0 %v1042
        %1354 = vmatpush1.msra.mxu0 %v1041
        %1355 = vmatprep.subr.mxu0 %v1052
        %1356 = vmatpush1.msra.mxu0 %v1051
        %1357 = vmatprep.subr.mxu0 %v1062
        %1358 = vmatpush1.msra.mxu0 %v1061
        %1359 = vmatprep.subr.mxu0 %v1072
        %1360 = vmatpush1.msra.mxu0 %v1071
        %1361 = vmatprep.subr.mxu0 %v1082
        %1362 = vmatpush1.msra.mxu0 %v1081
        %1363 = vmatprep.subr.mxu0 %v1092
        %1364 = vmatpush1.msra.mxu0 %v1091
        %1365 = vmatprep.subr.mxu0 %v1102
        %1366 = vmatpush1.msra.mxu0 %v1101
        %1367 = vmatprep.subr.mxu0 %v1112
        %1368 = vmatpush1.msra.mxu0 %v1111
        %1369 = vmatprep.subr.mxu0 %v1122
        %1370 = vmatpush1.msra.mxu0 %v1121
        %1371 = vmatprep.subr.mxu0 %v1132
        %1372 = vmatpush1.msra.mxu0 %v1131
        %1373 = vmatprep.subr.mxu0 %v1142
        %1374 = vmatpush1.msra.mxu0 %v1141
        %1375 = vmatprep.subr.mxu0 %v1152
        %1376 = vmatpush1.msra.mxu0 %v1151
        %1377 = vmatprep.subr.mxu0 %v1162
        %1378 = vmatpush1.msra.mxu0 %v1161
        %1379 = vmatprep.subr.mxu0 %v1172
        %1380 = vmatpush1.msra.mxu0 %v1171
        %1381 = vmatprep.subr.mxu0 %v1182
        %1382 = vmatpush1.msra.mxu0 %v1181
        %1383 = vmatprep.subr.mxu0 %v1192
        %1384 = vmatpush1.msra.mxu0 %v1191
        %1385 = vmatprep.subr.mxu0 %v1202
        %1386 = vmatpush1.msra.mxu0 %v1201
        %1387 = vmatprep.subr.mxu0 %v1212
        %1388 = vmatpush1.msra.mxu0 %v1211
        %1389 = vmatprep.subr.mxu0 %v1222
        %1390 = vmatpush1.msra.mxu0 %v1221
        %1391 = vmatprep.subr.mxu0 %v1232
        %1392 = vmatpush1.msra.mxu0 %v1231
        %1393 = vmatprep.subr.mxu0 %v1242
        %1394 = vmatpush1.msra.mxu0 %v1241
        %1395 = vmatprep.subr.mxu0 %v1252
        %1396 = vmatpush1.msra.mxu0 %v1251
        %1397 = vmatprep.subr.mxu0 %v1262
        %1398 = vmatpush1.msra.mxu0 %v1261
        %1399 = vmatprep.subr.mxu0 %v1272
        %1400 = vmatpush1.msra.mxu0 %v1271
        %1401 = vmatprep.subr.mxu0 %v1282
        %1402 = vmatpush1.msra.mxu0 %v1281
        %1403 = vmatprep.subr.mxu0 %v1292
        %1404 = vmatpush1.msra.mxu0 %v1291
        %1405 = vmatprep.subr.mxu0 %v1302
        %1406 = vmatpush1.msra.mxu0 %v1301
        %1407 = vmatprep.subr.mxu0 %v1312
        %1408 = vmatpush1.msra.mxu0 %v1311
        %1409 = vmatprep.subr.mxu0 %v1322
        %1410 = vmatpush1.msra.mxu0 %v1321
        %1411 = vmatprep.subr.mxu0 %v1332
        %1412 = vmatpush1.msra.mxu0 %v1331
        %1413 = vmatprep.subr.mxu0 %v1342
        %1414 = vmatpush1.msra.mxu0 %v1341
        %1415 = vmatprep.mubr.f32.mxu0 %v1028
        %1416 = vmatmul.mubr.f32.gmra.mrb[0].mxu0 %v1027
        %v1417 = vpop.f32.mrb[0].mxu0
        %v1418 = vadd.f32 0.0, %v1417
        %v1419 = vpop.f32.mrb[0].mxu0
        %v1420 = vadd.f32 0.0, %v1419
        %1421 = vmatprep.mubr.f32.mxu0 %v1030
        %1422 = vmatmul.mubr.f32.gmra.mrb[0].mxu0 %v1029
        %v1423 = vpop.f32.mrb[0].mxu0
        %v1424 = vadd.f32 0.0, %v1423
        %v1425 = vpop.f32.mrb[0].mxu0
        %v1426 = vadd.f32 0.0, %v1425
        %1427 = vdwg.mxu0
        %1428 = vmatprep.subr.mxu0 %v1034
        %1429 = vmatpush1.msra.mxu0 %v1033
        %1430 = vmatprep.subr.mxu0 %v1044
        %1431 = vmatpush1.msra.mxu0 %v1043
        %1432 = vmatprep.subr.mxu0 %v1054
        %1433 = vmatpush1.msra.mxu0 %v1053
        %1434 = vmatprep.subr.mxu0 %v1064
        %1435 = vmatpush1.msra.mxu0 %v1063
        %1436 = vmatprep.subr.mxu0 %v1074
        %1437 = vmatpush1.msra.mxu0 %v1073
        %1438 = vmatprep.subr.mxu0 %v1084
        %1439 = vmatpush1.msra.mxu0 %v1083
        %1440 = vmatprep.subr.mxu0 %v1094
        %1441 = vmatpush1.msra.mxu0 %v1093
        %1442 = vmatprep.subr.mxu0 %v1104
        %1443 = vmatpush1.msra.mxu0 %v1103
        %1444 = vmatprep.subr.mxu0 %v1114
        %1445 = vmatpush1.msra.mxu0 %v1113
        %1446 = vmatprep.subr.mxu0 %v1124
        %1447 = vmatpush1.msra.mxu0 %v1123
        %1448 = vmatprep.subr.mxu0 %v1134
        %1449 = vmatpush1.msra.mxu0 %v1133
        %1450 = vmatprep.subr.mxu0 %v1144
        %1451 = vmatpush1.msra.mxu0 %v1143
        %1452 = vmatprep.subr.mxu0 %v1154
        %1453 = vmatpush1.msra.mxu0 %v1153
        %1454 = vmatprep.subr.mxu0 %v1164
        %1455 = vmatpush1.msra.mxu0 %v1163
        %1456 = vmatprep.subr.mxu0 %v1174
        %1457 = vmatpush1.msra.mxu0 %v1173
        %1458 = vmatprep.subr.mxu0 %v1184
        %1459 = vmatpush1.msra.mxu0 %v1183
        %1460 = vmatprep.subr.mxu0 %v1194
        %1461 = vmatpush1.msra.mxu0 %v1193
        %1462 = vmatprep.subr.mxu0 %v1204
        %1463 = vmatpush1.msra.mxu0 %v1203
        %1464 = vmatprep.subr.mxu0 %v1214
        %1465 = vmatpush1.msra.mxu0 %v1213
        %1466 = vmatprep.subr.mxu0 %v1224
        %1467 = vmatpush1.msra.mxu0 %v1223
        %1468 = vmatprep.subr.mxu0 %v1234
        %1469 = vmatpush1.msra.mxu0 %v1233
        %1470 = vmatprep.subr.mxu0 %v1244
        %1471 = vmatpush1.msra.mxu0 %v1243
        %1472 = vmatprep.subr.mxu0 %v1254
        %1473 = vmatpush1.msra.mxu0 %v1253
        %1474 = vmatprep.subr.mxu0 %v1264
        %1475 = vmatpush1.msra.mxu0 %v1263
        %1476 = vmatprep.subr.mxu0 %v1274
        %1477 = vmatpush1.msra.mxu0 %v1273
        %1478 = vmatprep.subr.mxu0 %v1284
        %1479 = vmatpush1.msra.mxu0 %v1283
        %1480 = vmatprep.subr.mxu0 %v1294
        %1481 = vmatpush1.msra.mxu0 %v1293
        %1482 = vmatprep.subr.mxu0 %v1304
        %1483 = vmatpush1.msra.mxu0 %v1303
        %1484 = vmatprep.subr.mxu0 %v1314
        %1485 = vmatpush1.msra.mxu0 %v1313
        %1486 = vmatprep.subr.mxu0 %v1324
        %1487 = vmatpush1.msra.mxu0 %v1323
        %1488 = vmatprep.subr.mxu0 %v1334
        %1489 = vmatpush1.msra.mxu0 %v1333
        %1490 = vmatprep.subr.mxu0 %v1344
        %1491 = vmatpush1.msra.mxu0 %v1343
        %1492 = vmatprep.mubr.f32.mxu0 %v1028
        %1493 = vmatmul.mubr.f32.gmra.mrb[0].mxu0 %v1027
        %v1494 = vpop.f32.mrb[0].mxu0
        %v1495 = vadd.f32 0.0, %v1494
        %v1496 = vpop.f32.mrb[0].mxu0
        %v1497 = vadd.f32 0.0, %v1496
        %1498 = vmatprep.mubr.f32.mxu0 %v1030
        %1499 = vmatmul.mubr.f32.gmra.mrb[0].mxu0 %v1029
        %v1500 = vpop.f32.mrb[0].mxu0
        %v1501 = vadd.f32 0.0, %v1500
        %v1502 = vpop.f32.mrb[0].mxu0
        %v1503 = vadd.f32 0.0, %v1502
        %1504 = vdwg.mxu0
        %1505 = vmatprep.subr.mxu0 %v1036
        %1506 = vmatpush1.msra.mxu0 %v1035
        %1507 = vmatprep.subr.mxu0 %v1046
        %1508 = vmatpush1.msra.mxu0 %v1045
        %1509 = vmatprep.subr.mxu0 %v1056
        %1510 = vmatpush1.msra.mxu0 %v1055
        %1511 = vmatprep.subr.mxu0 %v1066
        %1512 = vmatpush1.msra.mxu0 %v1065
        %1513 = vmatprep.subr.mxu0 %v1076
        %1514 = vmatpush1.msra.mxu0 %v1075
        %1515 = vmatprep.subr.mxu0 %v1086
        %1516 = vmatpush1.msra.mxu0 %v1085
        %1517 = vmatprep.subr.mxu0 %v1096
        %1518 = vmatpush1.msra.mxu0 %v1095
        %1519 = vmatprep.subr.mxu0 %v1106
        %1520 = vmatpush1.msra.mxu0 %v1105
        %1521 = vmatprep.subr.mxu0 %v1116
        %1522 = vmatpush1.msra.mxu0 %v1115
        %1523 = vmatprep.subr.mxu0 %v1126
        %1524 = vmatpush1.msra.mxu0 %v1125
        %1525 = vmatprep.subr.mxu0 %v1136
        %1526 = vmatpush1.msra.mxu0 %v1135
        %1527 = vmatprep.subr.mxu0 %v1146
        %1528 = vmatpush1.msra.mxu0 %v1145
        %1529 = vmatprep.subr.mxu0 %v1156
        %1530 = vmatpush1.msra.mxu0 %v1155
        %1531 = vmatprep.subr.mxu0 %v1166
        %1532 = vmatpush1.msra.mxu0 %v1165
        %1533 = vmatprep.subr.mxu0 %v1176
        %1534 = vmatpush1.msra.mxu0 %v1175
        %1535 = vmatprep.subr.mxu0 %v1186
        %1536 = vmatpush1.msra.mxu0 %v1185
        %1537 = vmatprep.subr.mxu0 %v1196
        %1538 = vmatpush1.msra.mxu0 %v1195
        %1539 = vmatprep.subr.mxu0 %v1206
        %1540 = vmatpush1.msra.mxu0 %v1205
        %1541 = vmatprep.subr.mxu0 %v1216
        %1542 = vmatpush1.msra.mxu0 %v1215
        %1543 = vmatprep.subr.mxu0 %v1226
        %1544 = vmatpush1.msra.mxu0 %v1225
        %1545 = vmatprep.subr.mxu0 %v1236
        %1546 = vmatpush1.msra.mxu0 %v1235
        %1547 = vmatprep.subr.mxu0 %v1246
        %1548 = vmatpush1.msra.mxu0 %v1245
        %1549 = vmatprep.subr.mxu0 %v1256
        %1550 = vmatpush1.msra.mxu0 %v1255
        %1551 = vmatprep.subr.mxu0 %v1266
        %1552 = vmatpush1.msra.mxu0 %v1265
        %1553 = vmatprep.subr.mxu0 %v1276
        %1554 = vmatpush1.msra.mxu0 %v1275
        %1555 = vmatprep.subr.mxu0 %v1286
        %1556 = vmatpush1.msra.mxu0 %v1285
        %1557 = vmatprep.subr.mxu0 %v1296
        %1558 = vmatpush1.msra.mxu0 %v1295
        %1559 = vmatprep.subr.mxu0 %v1306
        %1560 = vmatpush1.msra.mxu0 %v1305
        %1561 = vmatprep.subr.mxu0 %v1316
        %1562 = vmatpush1.msra.mxu0 %v1315
        %1563 = vmatprep.subr.mxu0 %v1326
        %1564 = vmatpush1.msra.mxu0 %v1325
        %1565 = vmatprep.subr.mxu0 %v1336
        %1566 = vmatpush1.msra.mxu0 %v1335
        %1567 = vmatprep.subr.mxu0 %v1346
        %1568 = vmatpush1.msra.mxu0 %v1345
        %1569 = vmatprep.mubr.f32.mxu0 %v1028
        %1570 = vmatmul.mubr.f32.gmra.mrb[0].mxu0 %v1027
        %v1571 = vpop.f32.mrb[0].mxu0
        %v1572 = vadd.f32 0.0, %v1571
        %v1573 = vpop.f32.mrb[0].mxu0
        %v1574 = vadd.f32 0.0, %v1573
        %1575 = vmatprep.mubr.f32.mxu0 %v1030
        %1576 = vmatmul.mubr.f32.gmra.mrb[0].mxu0 %v1029
        %v1577 = vpop.f32.mrb[0].mxu0
        %v1578 = vadd.f32 0.0, %v1577
        %v1579 = vpop.f32.mrb[0].mxu0
        %v1580 = vadd.f32 0.0, %v1579
        %1581 = vdwg.mxu0
        %1582 = vmatprep.subr.mxu0 %v1038
        %1583 = vmatpush1.msra.mxu0 %v1037
        %1584 = vmatprep.subr.mxu0 %v1048
        %1585 = vmatpush1.msra.mxu0 %v1047
        %1586 = vmatprep.subr.mxu0 %v1058
        %1587 = vmatpush1.msra.mxu0 %v1057
        %1588 = vmatprep.subr.mxu0 %v1068
        %1589 = vmatpush1.msra.mxu0 %v1067
        %1590 = vmatprep.subr.mxu0 %v1078
        %1591 = vmatpush1.msra.mxu0 %v1077
        %1592 = vmatprep.subr.mxu0 %v1088
        %1593 = vmatpush1.msra.mxu0 %v1087
        %1594 = vmatprep.subr.mxu0 %v1098
        %1595 = vmatpush1.msra.mxu0 %v1097
        %1596 = vmatprep.subr.mxu0 %v1108
        %1597 = vmatpush1.msra.mxu0 %v1107
        %1598 = vmatprep.subr.mxu0 %v1118
        %1599 = vmatpush1.msra.mxu0 %v1117
        %1600 = vmatprep.subr.mxu0 %v1128
        %1601 = vmatpush1.msra.mxu0 %v1127
        %1602 = vmatprep.subr.mxu0 %v1138
        %1603 = vmatpush1.msra.mxu0 %v1137
        %1604 = vmatprep.subr.mxu0 %v1148
        %1605 = vmatpush1.msra.mxu0 %v1147
        %1606 = vmatprep.subr.mxu0 %v1158
        %1607 = vmatpush1.msra.mxu0 %v1157
        %1608 = vmatprep.subr.mxu0 %v1168
        %1609 = vmatpush1.msra.mxu0 %v1167
        %1610 = vmatprep.subr.mxu0 %v1178
        %1611 = vmatpush1.msra.mxu0 %v1177
        %1612 = vmatprep.subr.mxu0 %v1188
        %1613 = vmatpush1.msra.mxu0 %v1187
        %1614 = vmatprep.subr.mxu0 %v1198
        %1615 = vmatpush1.msra.mxu0 %v1197
        %1616 = vmatprep.subr.mxu0 %v1208
        %1617 = vmatpush1.msra.mxu0 %v1207
        %1618 = vmatprep.subr.mxu0 %v1218
        %1619 = vmatpush1.msra.mxu0 %v1217
        %1620 = vmatprep.subr.mxu0 %v1228
        %1621 = vmatpush1.msra.mxu0 %v1227
        %1622 = vmatprep.subr.mxu0 %v1238
        %1623 = vmatpush1.msra.mxu0 %v1237
        %1624 = vmatprep.subr.mxu0 %v1248
        %1625 = vmatpush1.msra.mxu0 %v1247
        %1626 = vmatprep.subr.mxu0 %v1258
        %1627 = vmatpush1.msra.mxu0 %v1257
        %1628 = vmatprep.subr.mxu0 %v1268
        %1629 = vmatpush1.msra.mxu0 %v1267
        %1630 = vmatprep.subr.mxu0 %v1278
        %1631 = vmatpush1.msra.mxu0 %v1277
        %1632 = vmatprep.subr.mxu0 %v1288
        %1633 = vmatpush1.msra.mxu0 %v1287
        %1634 = vmatprep.subr.mxu0 %v1298
        %1635 = vmatpush1.msra.mxu0 %v1297
        %1636 = vmatprep.subr.mxu0 %v1308
        %1637 = vmatpush1.msra.mxu0 %v1307
        %1638 = vmatprep.subr.mxu0 %v1318
        %1639 = vmatpush1.msra.mxu0 %v1317
        %1640 = vmatprep.subr.mxu0 %v1328
        %1641 = vmatpush1.msra.mxu0 %v1327
        %1642 = vmatprep.subr.mxu0 %v1338
        %1643 = vmatpush1.msra.mxu0 %v1337
        %1644 = vmatprep.subr.mxu0 %v1348
        %1645 = vmatpush1.msra.mxu0 %v1347
        %1646 = vmatprep.mubr.f32.mxu0 %v1028
        %1647 = vmatmul.mubr.f32.gmra.mrb[0].mxu0 %v1027
        %v1648 = vpop.f32.mrb[0].mxu0
        %v1649 = vadd.f32 0.0, %v1648
        %v1650 = vpop.f32.mrb[0].mxu0
        %v1651 = vadd.f32 0.0, %v1650
        %1652 = vmatprep.mubr.f32.mxu0 %v1030
        %1653 = vmatmul.mubr.f32.gmra.mrb[0].mxu0 %v1029
        %v1654 = vpop.f32.mrb[0].mxu0
        %v1655 = vadd.f32 0.0, %v1654
        %v1656 = vpop.f32.mrb[0].mxu0
        %v1657 = vadd.f32 0.0, %v1656
        %1658 = vdwg.mxu0
        %1659 = vmatprep.subr.mxu0 %v1040
        %1660 = vmatpush1.msra.mxu0 %v1039
        %1661 = vmatprep.subr.mxu0 %v1050
        %1662 = vmatpush1.msra.mxu0 %v1049
        %1663 = vmatprep.subr.mxu0 %v1060
        %1664 = vmatpush1.msra.mxu0 %v1059
        %1665 = vmatprep.subr.mxu0 %v1070
        %1666 = vmatpush1.msra.mxu0 %v1069
        %1667 = vmatprep.subr.mxu0 %v1080
        %1668 = vmatpush1.msra.mxu0 %v1079
        %1669 = vmatprep.subr.mxu0 %v1090
        %1670 = vmatpush1.msra.mxu0 %v1089
        %1671 = vmatprep.subr.mxu0 %v1100
        %1672 = vmatpush1.msra.mxu0 %v1099
        %1673 = vmatprep.subr.mxu0 %v1110
        %1674 = vmatpush1.msra.mxu0 %v1109
        %1675 = vmatprep.subr.mxu0 %v1120
        %1676 = vmatpush1.msra.mxu0 %v1119
        %1677 = vmatprep.subr.mxu0 %v1130
        %1678 = vmatpush1.msra.mxu0 %v1129
        %1679 = vmatprep.subr.mxu0 %v1140
        %1680 = vmatpush1.msra.mxu0 %v1139
        %1681 = vmatprep.subr.mxu0 %v1150
        %1682 = vmatpush1.msra.mxu0 %v1149
        %1683 = vmatprep.subr.mxu0 %v1160
        %1684 = vmatpush1.msra.mxu0 %v1159
        %1685 = vmatprep.subr.mxu0 %v1170
        %1686 = vmatpush1.msra.mxu0 %v1169
        %1687 = vmatprep.subr.mxu0 %v1180
        %1688 = vmatpush1.msra.mxu0 %v1179
        %1689 = vmatprep.subr.mxu0 %v1190
        %1690 = vmatpush1.msra.mxu0 %v1189
        %1691 = vmatprep.subr.mxu0 %v1200
        %1692 = vmatpush1.msra.mxu0 %v1199
        %1693 = vmatprep.subr.mxu0 %v1210
        %1694 = vmatpush1.msra.mxu0 %v1209
        %1695 = vmatprep.subr.mxu0 %v1220
        %1696 = vmatpush1.msra.mxu0 %v1219
        %1697 = vmatprep.subr.mxu0 %v1230
        %1698 = vmatpush1.msra.mxu0 %v1229
        %1699 = vmatprep.subr.mxu0 %v1240
        %1700 = vmatpush1.msra.mxu0 %v1239
        %1701 = vmatprep.subr.mxu0 %v1250
        %1702 = vmatpush1.msra.mxu0 %v1249
        %1703 = vmatprep.subr.mxu0 %v1260
        %1704 = vmatpush1.msra.mxu0 %v1259
        %1705 = vmatprep.subr.mxu0 %v1270
        %1706 = vmatpush1.msra.mxu0 %v1269
        %1707 = vmatprep.subr.mxu0 %v1280
        %1708 = vmatpush1.msra.mxu0 %v1279
        %1709 = vmatprep.subr.mxu0 %v1290
        %1710 = vmatpush1.msra.mxu0 %v1289
        %1711 = vmatprep.subr.mxu0 %v1300
        %1712 = vmatpush1.msra.mxu0 %v1299
        %1713 = vmatprep.subr.mxu0 %v1310
        %1714 = vmatpush1.msra.mxu0 %v1309
        %1715 = vmatprep.subr.mxu0 %v1320
        %1716 = vmatpush1.msra.mxu0 %v1319
        %1717 = vmatprep.subr.mxu0 %v1330
        %1718 = vmatpush1.msra.mxu0 %v1329
        %1719 = vmatprep.subr.mxu0 %v1340
        %1720 = vmatpush1.msra.mxu0 %v1339
        %1721 = vmatprep.subr.mxu0 %v1350
        %1722 = vmatpush1.msra.mxu0 %v1349
        %1723 = vmatprep.mubr.f32.mxu0 %v1028
        %1724 = vmatmul.mubr.f32.gmra.mrb[0].mxu0 %v1027
        %v1725 = vpop.f32.mrb[0].mxu0
        %v1726 = vadd.f32 0.0, %v1725
        %v1727 = vpop.f32.mrb[0].mxu0
        %v1728 = vadd.f32 0.0, %v1727
        %1729 = vmatprep.mubr.f32.mxu0 %v1030
        %1730 = vmatmul.mubr.f32.gmra.mrb[0].mxu0 %v1029
        %v1731 = vpop.f32.mrb[0].mxu0
        %v1732 = vadd.f32 0.0, %v1731
        %v1733 = vpop.f32.mrb[0].mxu0
        %v1734 = vadd.f32 0.0, %v1733
        %1735 = vdwg.mxu0
        %v1736 = vld [vmem:[%s5] sm:$0xff]
        %v1737 = vld [vmem:[%s5 + $0x8] sm:$0xff]
        %v1738 = vld [vmem:[%s5 + $0x10] sm:$0xff]
        %v1739 = vld [vmem:[%s5 + $0x18] sm:$0xff]
        %s1740 = scalar_lea.vmem %s5, 32
        %v1741 = vld [vmem:[%s1740] sm:$0xff]
        %v1742 = vld [vmem:[%s1740 + $0x8] sm:$0xff]
        %v1743 = vld [vmem:[%s1740 + $0x10] sm:$0xff]
        %v1744 = vld [vmem:[%s1740 + $0x18] sm:$0xff]
        %vm1745 = vcmask 130048
        %v1747 = vsel %vm1745, %v1741, 0
        %v1750 = vsel %vm1745, %v1742, 0
        %v1753 = vsel %vm1745, %v1743, 0
        %v1756 = vsel %vm1745, %v1744, 0
        %1758 = vmatprep.subr.mxu0 %v1497
        %1759 = vmatpush1.msra.mxu0 %v1495
        %1760 = vmatprep.subr.mxu0 %v1503
        %1761 = vmatpush1.msra.mxu0 %v1501
        %1762 = vmatprep.subr.mxu0 0.0
        %1763 = vmatpush1.msra.mxu0 0.0
        %1764 = vmatprep.subr.mxu0 0.0
        %1765 = vmatpush1.msra.mxu0 0.0
        %1766 = vmatprep.subr.mxu0 0.0
        %1767 = vmatpush1.msra.mxu0 0.0
        %1768 = vmatprep.subr.mxu0 0.0
        %1769 = vmatpush1.msra.mxu0 0.0
        %1770 = vmatprep.subr.mxu0 0.0
        %1771 = vmatpush1.msra.mxu0 0.0
        %1772 = vmatprep.subr.mxu0 0.0
        %1773 = vmatpush1.msra.mxu0 0.0
        %1774 = vmatprep.subr.mxu0 0.0
        %1775 = vmatpush1.msra.mxu0 0.0
        %1776 = vmatprep.subr.mxu0 0.0
        %1777 = vmatpush1.msra.mxu0 0.0
        %1778 = vmatprep.subr.mxu0 0.0
        %1779 = vmatpush1.msra.mxu0 0.0
        %1780 = vmatprep.subr.mxu0 0.0
        %1781 = vmatpush1.msra.mxu0 0.0
        %1782 = vmatprep.subr.mxu0 0.0
        %1783 = vmatpush1.msra.mxu0 0.0
        %1784 = vmatprep.subr.mxu0 0.0
        %1785 = vmatpush1.msra.mxu0 0.0
        %1786 = vmatprep.subr.mxu0 0.0
        %1787 = vmatpush1.msra.mxu0 0.0
        %1788 = vmatprep.subr.mxu0 0.0
        %1789 = vmatpush1.msra.mxu0 0.0
        %1790 = vmatprep.subr.mxu0 0.0
        %1791 = vmatpush1.msra.mxu0 0.0
        %1792 = vmatprep.subr.mxu0 0.0
        %1793 = vmatpush1.msra.mxu0 0.0
        %1794 = vmatprep.subr.mxu0 0.0
        %1795 = vmatpush1.msra.mxu0 0.0
        %1796 = vmatprep.subr.mxu0 0.0
        %1797 = vmatpush1.msra.mxu0 0.0
        %1798 = vmatprep.subr.mxu0 0.0
        %1799 = vmatpush1.msra.mxu0 0.0
        %1800 = vmatprep.subr.mxu0 0.0
        %1801 = vmatpush1.msra.mxu0 0.0
        %1802 = vmatprep.subr.mxu0 0.0
        %1803 = vmatpush1.msra.mxu0 0.0
        %1804 = vmatprep.subr.mxu0 0.0
        %1805 = vmatpush1.msra.mxu0 0.0
        %1806 = vmatprep.subr.mxu0 0.0
        %1807 = vmatpush1.msra.mxu0 0.0
        %1808 = vmatprep.subr.mxu0 0.0
        %1809 = vmatpush1.msra.mxu0 0.0
        %1810 = vmatprep.subr.mxu0 0.0
        %1811 = vmatpush1.msra.mxu0 0.0
        %1812 = vmatprep.subr.mxu0 0.0
        %1813 = vmatpush1.msra.mxu0 0.0
        %1814 = vmatprep.subr.mxu0 0.0
        %1815 = vmatpush1.msra.mxu0 0.0
        %1816 = vmatprep.subr.mxu0 0.0
        %1817 = vmatpush1.msra.mxu0 0.0
        %1818 = vmatprep.subr.mxu0 0.0
        %1819 = vmatpush1.msra.mxu0 0.0
        %1820 = vmatprep.subr.mxu0 0.0
        %1821 = vmatpush1.msra.mxu0 0.0
        %1822 = vmatprep.mubr.f32.mxu0 0.0
        %1823 = vmatmul.mubr.f32.gmra.mrb[0].mxu0 %v1747
        %v1824 = vpop.f32.mrb[0].mxu0
        %v1825 = vadd.f32 0.0, %v1824
        %v1826 = vpop.f32.mrb[0].mxu0
        %v1827 = vadd.f32 0.0, %v1826
        %1828 = vmatprep.mubr.f32.mxu0 0.0
        %1829 = vmatmul.mubr.f32.gmra.mrb[0].mxu0 %v1750
        %v1830 = vpop.f32.mrb[0].mxu0
        %v1831 = vadd.f32 0.0, %v1830
        %v1832 = vpop.f32.mrb[0].mxu0
        %v1833 = vadd.f32 0.0, %v1832
        %1834 = vmatprep.mubr.f32.mxu0 0.0
        %1835 = vmatmul.mubr.f32.gmra.mrb[0].mxu0 %v1753
        %v1836 = vpop.f32.mrb[0].mxu0
        %v1837 = vadd.f32 0.0, %v1836
        %v1838 = vpop.f32.mrb[0].mxu0
        %v1839 = vadd.f32 0.0, %v1838
        %1840 = vmatprep.mubr.f32.mxu0 0.0
        %1841 = vmatmul.mubr.f32.gmra.mrb[0].mxu0 %v1756
        %v1842 = vpop.f32.mrb[0].mxu0
        %v1843 = vadd.f32 0.0, %v1842
        %v1844 = vpop.f32.mrb[0].mxu0
        %v1845 = vadd.f32 0.0, %v1844
        %1846 = vdwg.mxu0
        %s1847 = scalar_lea.vmem %s5, 64
        %v1848 = vld [vmem:[%s1847] sm:$0xff]
        %v1849 = vld [vmem:[%s1847 + $0x8] sm:$0xff]
        %v1850 = vld [vmem:[%s1847 + $0x10] sm:$0xff]
        %v1851 = vld [vmem:[%s1847 + $0x18] sm:$0xff]
        %s1852 = scalar_lea.vmem %s5, 96
        %v1853 = vld [vmem:[%s1852] sm:$0xff]
        %v1854 = vld [vmem:[%s1852 + $0x8] sm:$0xff]
        %v1855 = vld [vmem:[%s1852 + $0x10] sm:$0xff]
        %v1856 = vld [vmem:[%s1852 + $0x18] sm:$0xff]
        %v1858 = vsel %vm1745, %v1853, 0
        %v1861 = vsel %vm1745, %v1854, 0
        %v1864 = vsel %vm1745, %v1855, 0
        %v1867 = vsel %vm1745, %v1856, 0
        %1869 = vmatprep.subr.mxu0 %v1651
        %1870 = vmatpush1.msra.mxu0 %v1649
        %1871 = vmatprep.subr.mxu0 %v1657
        %1872 = vmatpush1.msra.mxu0 %v1655
        %1873 = vmatprep.subr.mxu0 0.0
        %1874 = vmatpush1.msra.mxu0 0.0
        %1875 = vmatprep.subr.mxu0 0.0
        %1876 = vmatpush1.msra.mxu0 0.0
        %1877 = vmatprep.subr.mxu0 0.0
        %1878 = vmatpush1.msra.mxu0 0.0
        %1879 = vmatprep.subr.mxu0 0.0
        %1880 = vmatpush1.msra.mxu0 0.0
        %1881 = vmatprep.subr.mxu0 0.0
        %1882 = vmatpush1.msra.mxu0 0.0
        %1883 = vmatprep.subr.mxu0 0.0
        %1884 = vmatpush1.msra.mxu0 0.0
        %1885 = vmatprep.subr.mxu0 0.0
        %1886 = vmatpush1.msra.mxu0 0.0
        %1887 = vmatprep.subr.mxu0 0.0
        %1888 = vmatpush1.msra.mxu0 0.0
        %1889 = vmatprep.subr.mxu0 0.0
        %1890 = vmatpush1.msra.mxu0 0.0
        %1891 = vmatprep.subr.mxu0 0.0
        %1892 = vmatpush1.msra.mxu0 0.0
        %1893 = vmatprep.subr.mxu0 0.0
        %1894 = vmatpush1.msra.mxu0 0.0
        %1895 = vmatprep.subr.mxu0 0.0
        %1896 = vmatpush1.msra.mxu0 0.0
        %1897 = vmatprep.subr.mxu0 0.0
        %1898 = vmatpush1.msra.mxu0 0.0
        %1899 = vmatprep.subr.mxu0 0.0
        %1900 = vmatpush1.msra.mxu0 0.0
        %1901 = vmatprep.subr.mxu0 0.0
        %1902 = vmatpush1.msra.mxu0 0.0
        %1903 = vmatprep.subr.mxu0 0.0
        %1904 = vmatpush1.msra.mxu0 0.0
        %1905 = vmatprep.subr.mxu0 0.0
        %1906 = vmatpush1.msra.mxu0 0.0
        %1907 = vmatprep.subr.mxu0 0.0
        %1908 = vmatpush1.msra.mxu0 0.0
        %1909 = vmatprep.subr.mxu0 0.0
        %1910 = vmatpush1.msra.mxu0 0.0
        %1911 = vmatprep.subr.mxu0 0.0
        %1912 = vmatpush1.msra.mxu0 0.0
        %1913 = vmatprep.subr.mxu0 0.0
        %1914 = vmatpush1.msra.mxu0 0.0
        %1915 = vmatprep.subr.mxu0 0.0
        %1916 = vmatpush1.msra.mxu0 0.0
        %1917 = vmatprep.subr.mxu0 0.0
        %1918 = vmatpush1.msra.mxu0 0.0
        %1919 = vmatprep.subr.mxu0 0.0
        %1920 = vmatpush1.msra.mxu0 0.0
        %1921 = vmatprep.subr.mxu0 0.0
        %1922 = vmatpush1.msra.mxu0 0.0
        %1923 = vmatprep.subr.mxu0 0.0
        %1924 = vmatpush1.msra.mxu0 0.0
        %1925 = vmatprep.subr.mxu0 0.0
        %1926 = vmatpush1.msra.mxu0 0.0
        %1927 = vmatprep.subr.mxu0 0.0
        %1928 = vmatpush1.msra.mxu0 0.0
        %1929 = vmatprep.subr.mxu0 0.0
        %1930 = vmatpush1.msra.mxu0 0.0
        %1931 = vmatprep.subr.mxu0 0.0
        %1932 = vmatpush1.msra.mxu0 0.0
        %1933 = vmatprep.mubr.f32.mxu0 0.0
        %1934 = vmatmul.mubr.f32.gmra.mrb[0].mxu0 %v1858
        %v1935 = vpop.f32.mrb[0].mxu0
        %v1936 = vadd.f32 0.0, %v1935
        %v1937 = vpop.f32.mrb[0].mxu0
        %v1938 = vadd.f32 0.0, %v1937
        %1939 = vmatprep.mubr.f32.mxu0 0.0
        %1940 = vmatmul.mubr.f32.gmra.mrb[0].mxu0 %v1861
        %v1941 = vpop.f32.mrb[0].mxu0
        %v1942 = vadd.f32 0.0, %v1941
        %v1943 = vpop.f32.mrb[0].mxu0
        %v1944 = vadd.f32 0.0, %v1943
        %1945 = vmatprep.mubr.f32.mxu0 0.0
        %1946 = vmatmul.mubr.f32.gmra.mrb[0].mxu0 %v1864
        %v1947 = vpop.f32.mrb[0].mxu0
        %v1948 = vadd.f32 0.0, %v1947
        %v1949 = vpop.f32.mrb[0].mxu0
        %v1950 = vadd.f32 0.0, %v1949
        %1951 = vmatprep.mubr.f32.mxu0 0.0
        %1952 = vmatmul.mubr.f32.gmra.mrb[0].mxu0 %v1867
        %v1953 = vpop.f32.mrb[0].mxu0
        %v1954 = vadd.f32 0.0, %v1953
        %v1955 = vpop.f32.mrb[0].mxu0
        %v1956 = vadd.f32 0.0, %v1955
        %1957 = vdwg.mxu0
        %s1958 = scalar_lea.vmem %s5, 128
        %v1959 = vld [vmem:[%s1958] sm:$0xff]
        %v1960 = vld [vmem:[%s1958 + $0x8] sm:$0xff]
        %v1961 = vld [vmem:[%s1958 + $0x10] sm:$0xff]
        %v1962 = vld [vmem:[%s1958 + $0x18] sm:$0xff]
        %v1964 = vsel %vm1745, %v1959, 0
        %v1967 = vsel %vm1745, %v1960, 0
        %v1970 = vsel %vm1745, %v1961, 0
        %v1973 = vsel %vm1745, %v1962, 0
        %1975 = vmatprep.subr.mxu0 %v1728
        %1976 = vmatpush1.msra.mxu0 %v1726
        %1977 = vmatprep.subr.mxu0 %v1734
        %1978 = vmatpush1.msra.mxu0 %v1732
        %1979 = vmatprep.subr.mxu0 0.0
        %1980 = vmatpush1.msra.mxu0 0.0
        %1981 = vmatprep.subr.mxu0 0.0
        %1982 = vmatpush1.msra.mxu0 0.0
        %1983 = vmatprep.subr.mxu0 0.0
        %1984 = vmatpush1.msra.mxu0 0.0
        %1985 = vmatprep.subr.mxu0 0.0
        %1986 = vmatpush1.msra.mxu0 0.0
        %1987 = vmatprep.subr.mxu0 0.0
        %1988 = vmatpush1.msra.mxu0 0.0
        %1989 = vmatprep.subr.mxu0 0.0
        %1990 = vmatpush1.msra.mxu0 0.0
        %1991 = vmatprep.subr.mxu0 0.0
        %1992 = vmatpush1.msra.mxu0 0.0
        %1993 = vmatprep.subr.mxu0 0.0
        %1994 = vmatpush1.msra.mxu0 0.0
        %1995 = vmatprep.subr.mxu0 0.0
        %1996 = vmatpush1.msra.mxu0 0.0
        %1997 = vmatprep.subr.mxu0 0.0
        %1998 = vmatpush1.msra.mxu0 0.0
        %1999 = vmatprep.subr.mxu0 0.0
        %2000 = vmatpush1.msra.mxu0 0.0
        %2001 = vmatprep.subr.mxu0 0.0
        %2002 = vmatpush1.msra.mxu0 0.0
        %2003 = vmatprep.subr.mxu0 0.0
        %2004 = vmatpush1.msra.mxu0 0.0
        %2005 = vmatprep.subr.mxu0 0.0
        %2006 = vmatpush1.msra.mxu0 0.0
        %2007 = vmatprep.subr.mxu0 0.0
        %2008 = vmatpush1.msra.mxu0 0.0
        %2009 = vmatprep.subr.mxu0 0.0
        %2010 = vmatpush1.msra.mxu0 0.0
        %2011 = vmatprep.subr.mxu0 0.0
        %2012 = vmatpush1.msra.mxu0 0.0
        %2013 = vmatprep.subr.mxu0 0.0
        %2014 = vmatpush1.msra.mxu0 0.0
        %2015 = vmatprep.subr.mxu0 0.0
        %2016 = vmatpush1.msra.mxu0 0.0
        %2017 = vmatprep.subr.mxu0 0.0
        %2018 = vmatpush1.msra.mxu0 0.0
        %2019 = vmatprep.subr.mxu0 0.0
        %2020 = vmatpush1.msra.mxu0 0.0
        %2021 = vmatprep.subr.mxu0 0.0
        %2022 = vmatpush1.msra.mxu0 0.0
        %2023 = vmatprep.subr.mxu0 0.0
        %2024 = vmatpush1.msra.mxu0 0.0
        %2025 = vmatprep.subr.mxu0 0.0
        %2026 = vmatpush1.msra.mxu0 0.0
        %2027 = vmatprep.subr.mxu0 0.0
        %2028 = vmatpush1.msra.mxu0 0.0
        %2029 = vmatprep.subr.mxu0 0.0
        %2030 = vmatpush1.msra.mxu0 0.0
        %2031 = vmatprep.subr.mxu0 0.0
        %2032 = vmatpush1.msra.mxu0 0.0
        %2033 = vmatprep.subr.mxu0 0.0
        %2034 = vmatpush1.msra.mxu0 0.0
        %2035 = vmatprep.subr.mxu0 0.0
        %2036 = vmatpush1.msra.mxu0 0.0
        %2037 = vmatprep.subr.mxu0 0.0
        %2038 = vmatpush1.msra.mxu0 0.0
        %2039 = vmatprep.mubr.f32.mxu0 0.0
        %2040 = vmatmul.mubr.f32.gmra.mrb[0].mxu0 %v1964
        %v2041 = vpop.f32.mrb[0].mxu0
        %v2042 = vadd.f32 0.0, %v2041
        %v2043 = vpop.f32.mrb[0].mxu0
        %v2044 = vadd.f32 0.0, %v2043
        %2045 = vmatprep.mubr.f32.mxu0 0.0
        %2046 = vmatmul.mubr.f32.gmra.mrb[0].mxu0 %v1967
        %v2047 = vpop.f32.mrb[0].mxu0
        %v2048 = vadd.f32 0.0, %v2047
        %v2049 = vpop.f32.mrb[0].mxu0
        %v2050 = vadd.f32 0.0, %v2049
        %2051 = vmatprep.mubr.f32.mxu0 0.0
        %2052 = vmatmul.mubr.f32.gmra.mrb[0].mxu0 %v1970
        %v2053 = vpop.f32.mrb[0].mxu0
        %v2054 = vadd.f32 0.0, %v2053
        %v2055 = vpop.f32.mrb[0].mxu0
        %v2056 = vadd.f32 0.0, %v2055
        %2057 = vmatprep.mubr.f32.mxu0 0.0
        %2058 = vmatmul.mubr.f32.gmra.mrb[0].mxu0 %v1973
        %v2059 = vpop.f32.mrb[0].mxu0
        %v2060 = vadd.f32 0.0, %v2059
        %v2061 = vpop.f32.mrb[0].mxu0
        %v2062 = vadd.f32 0.0, %v2061
        %2063 = vdwg.mxu0
        %v2065 = vsel %vm1745, %v1736, 0
        %v2068 = vsel %vm1745, %v1737, 0
        %v2071 = vsel %vm1745, %v1738, 0
        %v2074 = vsel %vm1745, %v1739, 0
        %2076 = vmatprep.subr.mxu0 %v1420
        %2077 = vmatpush1.msra.mxu0 %v1418
        %2078 = vmatprep.subr.mxu0 %v1426
        %2079 = vmatpush1.msra.mxu0 %v1424
        %2080 = vmatprep.subr.mxu0 0.0
        %2081 = vmatpush1.msra.mxu0 0.0
        %2082 = vmatprep.subr.mxu0 0.0
        %2083 = vmatpush1.msra.mxu0 0.0
        %2084 = vmatprep.subr.mxu0 0.0
        %2085 = vmatpush1.msra.mxu0 0.0
        %2086 = vmatprep.subr.mxu0 0.0
        %2087 = vmatpush1.msra.mxu0 0.0
        %2088 = vmatprep.subr.mxu0 0.0
        %2089 = vmatpush1.msra.mxu0 0.0
        %2090 = vmatprep.subr.mxu0 0.0
        %2091 = vmatpush1.msra.mxu0 0.0
        %2092 = vmatprep.subr.mxu0 0.0
        %2093 = vmatpush1.msra.mxu0 0.0
        %2094 = vmatprep.subr.mxu0 0.0
        %2095 = vmatpush1.msra.mxu0 0.0
        %2096 = vmatprep.subr.mxu0 0.0
        %2097 = vmatpush1.msra.mxu0 0.0
        %2098 = vmatprep.subr.mxu0 0.0
        %2099 = vmatpush1.msra.mxu0 0.0
        %2100 = vmatprep.subr.mxu0 0.0
        %2101 = vmatpush1.msra.mxu0 0.0
        %2102 = vmatprep.subr.mxu0 0.0
        %2103 = vmatpush1.msra.mxu0 0.0
        %2104 = vmatprep.subr.mxu0 0.0
        %2105 = vmatpush1.msra.mxu0 0.0
        %2106 = vmatprep.subr.mxu0 0.0
        %2107 = vmatpush1.msra.mxu0 0.0
        %2108 = vmatprep.subr.mxu0 0.0
        %2109 = vmatpush1.msra.mxu0 0.0
        %2110 = vmatprep.subr.mxu0 0.0
        %2111 = vmatpush1.msra.mxu0 0.0
        %2112 = vmatprep.subr.mxu0 0.0
        %2113 = vmatpush1.msra.mxu0 0.0
        %2114 = vmatprep.subr.mxu0 0.0
        %2115 = vmatpush1.msra.mxu0 0.0
        %2116 = vmatprep.subr.mxu0 0.0
        %2117 = vmatpush1.msra.mxu0 0.0
        %2118 = vmatprep.subr.mxu0 0.0
        %2119 = vmatpush1.msra.mxu0 0.0
        %2120 = vmatprep.subr.mxu0 0.0
        %2121 = vmatpush1.msra.mxu0 0.0
        %2122 = vmatprep.subr.mxu0 0.0
        %2123 = vmatpush1.msra.mxu0 0.0
        %2124 = vmatprep.subr.mxu0 0.0
        %2125 = vmatpush1.msra.mxu0 0.0
        %2126 = vmatprep.subr.mxu0 0.0
        %2127 = vmatpush1.msra.mxu0 0.0
        %2128 = vmatprep.subr.mxu0 0.0
        %2129 = vmatpush1.msra.mxu0 0.0
        %2130 = vmatprep.subr.mxu0 0.0
        %2131 = vmatpush1.msra.mxu0 0.0
        %2132 = vmatprep.subr.mxu0 0.0
        %2133 = vmatpush1.msra.mxu0 0.0
        %2134 = vmatprep.subr.mxu0 0.0
        %2135 = vmatpush1.msra.mxu0 0.0
        %2136 = vmatprep.subr.mxu0 0.0
        %2137 = vmatpush1.msra.mxu0 0.0
        %2138 = vmatprep.subr.mxu0 0.0
        %2139 = vmatpush1.msra.mxu0 0.0
        %2140 = vmatprep.mubr.f32.mxu0 0.0
        %2141 = vmatmul.mubr.f32.gmra.mrb[0].mxu0 %v2065
        %v2142 = vpop.f32.mrb[0].mxu0
        %v2143 = vadd.f32 %v1825, %v2142
        %v2144 = vpop.f32.mrb[0].mxu0
        %v2145 = vadd.f32 %v1827, %v2144
        %2146 = vmatprep.mubr.f32.mxu0 0.0
        %2147 = vmatmul.mubr.f32.gmra.mrb[0].mxu0 %v2068
        %v2148 = vpop.f32.mrb[0].mxu0
        %v2149 = vadd.f32 %v1831, %v2148
        %v2150 = vpop.f32.mrb[0].mxu0
        %v2151 = vadd.f32 %v1833, %v2150
        %2152 = vmatprep.mubr.f32.mxu0 0.0
        %2153 = vmatmul.mubr.f32.gmra.mrb[0].mxu0 %v2071
        %v2154 = vpop.f32.mrb[0].mxu0
        %v2155 = vadd.f32 %v1837, %v2154
        %v2156 = vpop.f32.mrb[0].mxu0
        %v2157 = vadd.f32 %v1839, %v2156
        %2158 = vmatprep.mubr.f32.mxu0 0.0
        %2159 = vmatmul.mubr.f32.gmra.mrb[0].mxu0 %v2074
        %v2160 = vpop.f32.mrb[0].mxu0
        %v2161 = vadd.f32 %v1843, %v2160
        %v2162 = vpop.f32.mrb[0].mxu0
        %v2163 = vadd.f32 %v1845, %v2162
        %2164 = vdwg.mxu0
        %v2166 = vsel %vm1745, %v1848, 0
        %v2169 = vsel %vm1745, %v1849, 0
        %v2172 = vsel %vm1745, %v1850, 0
        %v2175 = vsel %vm1745, %v1851, 0
        %2177 = vmatprep.subr.mxu0 %v1574
        %2178 = vmatpush1.msra.mxu0 %v1572
        %2179 = vmatprep.subr.mxu0 %v1580
        %2180 = vmatpush1.msra.mxu0 %v1578
        %2181 = vmatprep.subr.mxu0 0.0
        %2182 = vmatpush1.msra.mxu0 0.0
        %2183 = vmatprep.subr.mxu0 0.0
        %2184 = vmatpush1.msra.mxu0 0.0
        %2185 = vmatprep.subr.mxu0 0.0
        %2186 = vmatpush1.msra.mxu0 0.0
        %2187 = vmatprep.subr.mxu0 0.0
        %2188 = vmatpush1.msra.mxu0 0.0
        %2189 = vmatprep.subr.mxu0 0.0
        %2190 = vmatpush1.msra.mxu0 0.0
        %2191 = vmatprep.subr.mxu0 0.0
        %2192 = vmatpush1.msra.mxu0 0.0
        %2193 = vmatprep.subr.mxu0 0.0
        %2194 = vmatpush1.msra.mxu0 0.0
        %2195 = vmatprep.subr.mxu0 0.0
        %2196 = vmatpush1.msra.mxu0 0.0
        %2197 = vmatprep.subr.mxu0 0.0
        %2198 = vmatpush1.msra.mxu0 0.0
        %2199 = vmatprep.subr.mxu0 0.0
        %2200 = vmatpush1.msra.mxu0 0.0
        %2201 = vmatprep.subr.mxu0 0.0
        %2202 = vmatpush1.msra.mxu0 0.0
        %2203 = vmatprep.subr.mxu0 0.0
        %2204 = vmatpush1.msra.mxu0 0.0
        %2205 = vmatprep.subr.mxu0 0.0
        %2206 = vmatpush1.msra.mxu0 0.0
        %2207 = vmatprep.subr.mxu0 0.0
        %2208 = vmatpush1.msra.mxu0 0.0
        %2209 = vmatprep.subr.mxu0 0.0
        %2210 = vmatpush1.msra.mxu0 0.0
        %2211 = vmatprep.subr.mxu0 0.0
        %2212 = vmatpush1.msra.mxu0 0.0
        %2213 = vmatprep.subr.mxu0 0.0
        %2214 = vmatpush1.msra.mxu0 0.0
        %2215 = vmatprep.subr.mxu0 0.0
        %2216 = vmatpush1.msra.mxu0 0.0
        %2217 = vmatprep.subr.mxu0 0.0
        %2218 = vmatpush1.msra.mxu0 0.0
        %2219 = vmatprep.subr.mxu0 0.0
        %2220 = vmatpush1.msra.mxu0 0.0
        %2221 = vmatprep.subr.mxu0 0.0
        %2222 = vmatpush1.msra.mxu0 0.0
        %2223 = vmatprep.subr.mxu0 0.0
        %2224 = vmatpush1.msra.mxu0 0.0
        %2225 = vmatprep.subr.mxu0 0.0
        %2226 = vmatpush1.msra.mxu0 0.0
        %2227 = vmatprep.subr.mxu0 0.0
        %2228 = vmatpush1.msra.mxu0 0.0
        %2229 = vmatprep.subr.mxu0 0.0
        %2230 = vmatpush1.msra.mxu0 0.0
        %2231 = vmatprep.subr.mxu0 0.0
        %2232 = vmatpush1.msra.mxu0 0.0
        %2233 = vmatprep.subr.mxu0 0.0
        %2234 = vmatpush1.msra.mxu0 0.0
        %2235 = vmatprep.subr.mxu0 0.0
        %2236 = vmatpush1.msra.mxu0 0.0
        %2237 = vmatprep.subr.mxu0 0.0
        %2238 = vmatpush1.msra.mxu0 0.0
        %2239 = vmatprep.subr.mxu0 0.0
        %2240 = vmatpush1.msra.mxu0 0.0
        %2241 = vmatprep.mubr.f32.mxu0 0.0
        %2242 = vmatmul.mubr.f32.gmra.mrb[0].mxu0 %v2166
        %v2243 = vpop.f32.mrb[0].mxu0
        %v2244 = vadd.f32 %v1936, %v2243
        %v2245 = vpop.f32.mrb[0].mxu0
        %v2246 = vadd.f32 %v1938, %v2245
        %2247 = vmatprep.mubr.f32.mxu0 0.0
        %2248 = vmatmul.mubr.f32.gmra.mrb[0].mxu0 %v2169
        %v2249 = vpop.f32.mrb[0].mxu0
        %v2250 = vadd.f32 %v1942, %v2249
        %v2251 = vpop.f32.mrb[0].mxu0
        %v2252 = vadd.f32 %v1944, %v2251
        %2253 = vmatprep.mubr.f32.mxu0 0.0
        %2254 = vmatmul.mubr.f32.gmra.mrb[0].mxu0 %v2172
        %v2255 = vpop.f32.mrb[0].mxu0
        %v2256 = vadd.f32 %v1948, %v2255
        %v2257 = vpop.f32.mrb[0].mxu0
        %v2258 = vadd.f32 %v1950, %v2257
        %2259 = vmatprep.mubr.f32.mxu0 0.0
        %2260 = vmatmul.mubr.f32.gmra.mrb[0].mxu0 %v2175
        %v2261 = vpop.f32.mrb[0].mxu0
        %v2262 = vadd.f32 %v1954, %v2261
        %v2263 = vpop.f32.mrb[0].mxu0
        %v2264 = vadd.f32 %v1956, %v2263
        %2265 = vdwg.mxu0
        %v2266 = vadd.f32 %v2143, %v2244
        %v2267 = vadd.f32 %v2145, %v2246
        %v2268 = vadd.f32 %v2149, %v2250
        %v2269 = vadd.f32 %v2151, %v2252
        %v2270 = vadd.f32 %v2155, %v2256
        %v2271 = vadd.f32 %v2157, %v2258
        %v2272 = vadd.f32 %v2161, %v2262
        %v2273 = vadd.f32 %v2163, %v2264
        %v2274 = vadd.f32 %v2266, %v2042
        %v2275 = vadd.f32 %v2267, %v2044
        %v2276 = vadd.f32 %v2268, %v2048
        %v2277 = vadd.f32 %v2269, %v2050
        %v2278 = vadd.f32 %v2270, %v2054
        %v2279 = vadd.f32 %v2271, %v2056
        %v2280 = vadd.f32 %v2272, %v2060
        %v2281 = vadd.f32 %v2273, %v2062
        %v2282 = vld [vmem:[#allocation7] sm:$0x3]
        %v2284 = vlaneseq
        %v2285 = vshrl.u32 %v2284, 7
        %v2286 = vsub.s32 0, %v2285
        %v2287 = vrot.slane %v2282, %v2286
        %v2288 = vlaneseq
        %v2289 = vshrl.u32 %v2288, 7
        %v2290 = vsub.s32 1, %v2289
        %v2291 = vrot.slane %v2282, %v2290
        %v2294 = vadd.f32 %v2274, %v2287
        %v2295 = vadd.f32 %v2275, %v2291
        %v2296 = vadd.f32 %v2276, %v2287
        %v2297 = vadd.f32 %v2277, %v2291
        %v2298 = vadd.f32 %v2278, %v2287
        %v2299 = vadd.f32 %v2279, %v2291
        %v2300 = vadd.f32 %v2280, %v2287
        %v2301 = vadd.f32 %v2281, %v2291
        %v2302 = vmax.f32 %v2294, 0.0
        %v2303 = vmax.f32 %v2295, 0.0
        %v2304 = vmax.f32 %v2296, 0.0
        %v2305 = vmax.f32 %v2297, 0.0
        %v2306 = vmax.f32 %v2298, 0.0
        %v2307 = vmax.f32 %v2299, 0.0
        %v2308 = vmax.f32 %v2300, 0.0
        %v2309 = vmax.f32 %v2301, 0.0
        %v2310 = vld [vmem:[#allocation9] sm:$0xff]
        %v2311 = vld [vmem:[#allocation9 + $0x8] sm:$0xff]
        %v2312 = vld [vmem:[#allocation9 + $0x10] sm:$0xff]
        %v2313 = vld [vmem:[#allocation9 + $0x18] sm:$0xff]
        %v2314 = vld [vmem:[#allocation9 + $0x20] sm:$0xff]
        %v2315 = vld [vmem:[#allocation9 + $0x28] sm:$0xff]
        %v2316 = vld [vmem:[#allocation9 + $0x30] sm:$0xff]
        %v2317 = vld [vmem:[#allocation9 + $0x38] sm:$0xff]
        %v2318 = vld [vmem:[#allocation9 + $0x40] sm:$0xff]
        %v2319 = vld [vmem:[#allocation9 + $0x48] sm:$0xff]
        %v2320 = vld [vmem:[#allocation9 + $0x50] sm:$0xff]
        %v2321 = vld [vmem:[#allocation9 + $0x58] sm:$0xff]
        %v2322 = vld [vmem:[#allocation9 + $0x60] sm:$0xff]
        %v2323 = vld [vmem:[#allocation9 + $0x68] sm:$0xff]
        %v2324 = vld [vmem:[#allocation9 + $0x70] sm:$0xff]
        %v2325 = vld [vmem:[#allocation9 + $0x78] sm:$0xff]
        %v2326 = vld [vmem:[#allocation9 + $0x80] sm:$0xff]
        %v2327 = vld [vmem:[#allocation9 + $0x88] sm:$0xff]
        %v2328 = vld [vmem:[#allocation9 + $0x90] sm:$0xff]
        %v2329 = vld [vmem:[#allocation9 + $0x98] sm:$0xff]
        %v2330 = vld [vmem:[#allocation9 + $0xa0] sm:$0xff]
        %v2331 = vld [vmem:[#allocation9 + $0xa8] sm:$0xff]
        %v2332 = vld [vmem:[#allocation9 + $0xb0] sm:$0xff]
        %v2333 = vld [vmem:[#allocation9 + $0xb8] sm:$0xff]
        %v2334 = vld [vmem:[#allocation9 + $0xc0] sm:$0xff]
        %v2335 = vld [vmem:[#allocation9 + $0xc8] sm:$0xff]
        %v2336 = vld [vmem:[#allocation9 + $0xd0] sm:$0xff]
        %v2337 = vld [vmem:[#allocation9 + $0xd8] sm:$0xff]
        %v2338 = vld [vmem:[#allocation9 + $0xe0] sm:$0xff]
        %v2339 = vld [vmem:[#allocation9 + $0xe8] sm:$0xff]
        %v2340 = vld [vmem:[#allocation9 + $0xf0] sm:$0xff]
        %v2341 = vld [vmem:[#allocation9 + $0xf8] sm:$0xff]
        %v2342 = vld [vmem:[#allocation9 + $0x100] sm:$0xff]
        %v2343 = vld [vmem:[#allocation9 + $0x108] sm:$0xff]
        %v2344 = vld [vmem:[#allocation9 + $0x110] sm:$0xff]
        %v2345 = vld [vmem:[#allocation9 + $0x118] sm:$0xff]
        %v2346 = vld [vmem:[#allocation9 + $0x120] sm:$0xff]
        %v2347 = vld [vmem:[#allocation9 + $0x128] sm:$0xff]
        %v2348 = vld [vmem:[#allocation9 + $0x130] sm:$0xff]
        %v2349 = vld [vmem:[#allocation9 + $0x138] sm:$0xff]
        %v2350 = vld [vmem:[#allocation9 + $0x140] sm:$0xff]
        %v2351 = vld [vmem:[#allocation9 + $0x148] sm:$0xff]
        %v2352 = vld [vmem:[#allocation9 + $0x150] sm:$0xff]
        %v2353 = vld [vmem:[#allocation9 + $0x158] sm:$0xff]
        %v2354 = vld [vmem:[#allocation9 + $0x160] sm:$0xff]
        %v2355 = vld [vmem:[#allocation9 + $0x168] sm:$0xff]
        %v2356 = vld [vmem:[#allocation9 + $0x170] sm:$0xff]
        %v2357 = vld [vmem:[#allocation9 + $0x178] sm:$0xff]
        %v2358 = vld [vmem:[#allocation9 + $0x180] sm:$0xff]
        %v2359 = vld [vmem:[#allocation9 + $0x188] sm:$0xff]
        %v2360 = vld [vmem:[#allocation9 + $0x190] sm:$0xff]
        %v2361 = vld [vmem:[#allocation9 + $0x198] sm:$0xff]
        %v2362 = vld [vmem:[#allocation9 + $0x1a0] sm:$0xff]
        %v2363 = vld [vmem:[#allocation9 + $0x1a8] sm:$0xff]
        %v2364 = vld [vmem:[#allocation9 + $0x1b0] sm:$0xff]
        %v2365 = vld [vmem:[#allocation9 + $0x1b8] sm:$0xff]
        %v2366 = vld [vmem:[#allocation9 + $0x1c0] sm:$0xff]
        %v2367 = vld [vmem:[#allocation9 + $0x1c8] sm:$0xff]
        %v2368 = vld [vmem:[#allocation9 + $0x1d0] sm:$0xff]
        %v2369 = vld [vmem:[#allocation9 + $0x1d8] sm:$0xff]
        %v2370 = vld [vmem:[#allocation9 + $0x1e0] sm:$0xff]
        %v2371 = vld [vmem:[#allocation9 + $0x1e8] sm:$0xff]
        %v2372 = vld [vmem:[#allocation9 + $0x1f0] sm:$0xff]
        %v2373 = vld [vmem:[#allocation9 + $0x1f8] sm:$0xff]
        %2374 = vmatprep.subr.mxu0 %v2311
        %2375 = vmatpush1.msra.mxu0 %v2310
        %2376 = vmatprep.subr.mxu0 %v2313
        %2377 = vmatpush1.msra.mxu0 %v2312
        %2378 = vmatprep.subr.mxu0 %v2315
        %2379 = vmatpush1.msra.mxu0 %v2314
        %2380 = vmatprep.subr.mxu0 %v2317
        %2381 = vmatpush1.msra.mxu0 %v2316
        %2382 = vmatprep.subr.mxu0 %v2319
        %2383 = vmatpush1.msra.mxu0 %v2318
        %2384 = vmatprep.subr.mxu0 %v2321
        %2385 = vmatpush1.msra.mxu0 %v2320
        %2386 = vmatprep.subr.mxu0 %v2323
        %2387 = vmatpush1.msra.mxu0 %v2322
        %2388 = vmatprep.subr.mxu0 %v2325
        %2389 = vmatpush1.msra.mxu0 %v2324
        %2390 = vmatprep.subr.mxu0 %v2327
        %2391 = vmatpush1.msra.mxu0 %v2326
        %2392 = vmatprep.subr.mxu0 %v2329
        %2393 = vmatpush1.msra.mxu0 %v2328
        %2394 = vmatprep.subr.mxu0 %v2331
        %2395 = vmatpush1.msra.mxu0 %v2330
        %2396 = vmatprep.subr.mxu0 %v2333
        %2397 = vmatpush1.msra.mxu0 %v2332
        %2398 = vmatprep.subr.mxu0 %v2335
        %2399 = vmatpush1.msra.mxu0 %v2334
        %2400 = vmatprep.subr.mxu0 %v2337
        %2401 = vmatpush1.msra.mxu0 %v2336
        %2402 = vmatprep.subr.mxu0 %v2339
        %2403 = vmatpush1.msra.mxu0 %v2338
        %2404 = vmatprep.subr.mxu0 %v2341
        %2405 = vmatpush1.msra.mxu0 %v2340
        %2406 = vmatprep.subr.mxu0 %v2343
        %2407 = vmatpush1.msra.mxu0 %v2342
        %2408 = vmatprep.subr.mxu0 %v2345
        %2409 = vmatpush1.msra.mxu0 %v2344
        %2410 = vmatprep.subr.mxu0 %v2347
        %2411 = vmatpush1.msra.mxu0 %v2346
        %2412 = vmatprep.subr.mxu0 %v2349
        %2413 = vmatpush1.msra.mxu0 %v2348
        %2414 = vmatprep.subr.mxu0 %v2351
        %2415 = vmatpush1.msra.mxu0 %v2350
        %2416 = vmatprep.subr.mxu0 %v2353
        %2417 = vmatpush1.msra.mxu0 %v2352
        %2418 = vmatprep.subr.mxu0 %v2355
        %2419 = vmatpush1.msra.mxu0 %v2354
        %2420 = vmatprep.subr.mxu0 %v2357
        %2421 = vmatpush1.msra.mxu0 %v2356
        %2422 = vmatprep.subr.mxu0 %v2359
        %2423 = vmatpush1.msra.mxu0 %v2358
        %2424 = vmatprep.subr.mxu0 %v2361
        %2425 = vmatpush1.msra.mxu0 %v2360
        %2426 = vmatprep.subr.mxu0 %v2363
        %2427 = vmatpush1.msra.mxu0 %v2362
        %2428 = vmatprep.subr.mxu0 %v2365
        %2429 = vmatpush1.msra.mxu0 %v2364
        %2430 = vmatprep.subr.mxu0 %v2367
        %2431 = vmatpush1.msra.mxu0 %v2366
        %2432 = vmatprep.subr.mxu0 %v2369
        %2433 = vmatpush1.msra.mxu0 %v2368
        %2434 = vmatprep.subr.mxu0 %v2371
        %2435 = vmatpush1.msra.mxu0 %v2370
        %2436 = vmatprep.subr.mxu0 %v2373
        %2437 = vmatpush1.msra.mxu0 %v2372
        %2438 = vmatprep.mubr.f32.mxu0 %v2303
        %2439 = vmatmul.mubr.f32.gmra.mrb[0].mxu0 %v2302
        %v2440 = vpop.f32.mrb[0].mxu0
        %v2441 = vadd.f32 0.0, %v2440
        %v2442 = vpop.f32.mrb[0].mxu0
        %v2443 = vadd.f32 0.0, %v2442
        %2444 = vmatprep.mubr.f32.mxu0 %v2305
        %2445 = vmatmul.mubr.f32.gmra.mrb[0].mxu0 %v2304
        %v2446 = vpop.f32.mrb[0].mxu0
        %v2447 = vadd.f32 0.0, %v2446
        %v2448 = vpop.f32.mrb[0].mxu0
        %v2449 = vadd.f32 0.0, %v2448
        %2450 = vmatprep.mubr.f32.mxu0 %v2307
        %2451 = vmatmul.mubr.f32.gmra.mrb[0].mxu0 %v2306
        %v2452 = vpop.f32.mrb[0].mxu0
        %v2453 = vadd.f32 0.0, %v2452
        %v2454 = vpop.f32.mrb[0].mxu0
        %v2455 = vadd.f32 0.0, %v2454
        %2456 = vmatprep.mubr.f32.mxu0 %v2309
        %2457 = vmatmul.mubr.f32.gmra.mrb[0].mxu0 %v2308
        %v2458 = vpop.f32.mrb[0].mxu0
        %v2459 = vadd.f32 0.0, %v2458
        %v2460 = vpop.f32.mrb[0].mxu0
        %v2461 = vadd.f32 0.0, %v2460
        %2462 = vdwg.mxu0
        %v2463 = vld [vmem:[%s8] sm:$0xff]
        %v2464 = vld [vmem:[%s8 + $0x8] sm:$0xff]
        %v2465 = vld [vmem:[%s8 + $0x10] sm:$0xff]
        %v2466 = vld [vmem:[%s8 + $0x18] sm:$0xff]
        %v2467 = vld [vmem:[%s8 + $0x20] sm:$0xff]
        %v2468 = vld [vmem:[%s8 + $0x28] sm:$0xff]
        %v2469 = vld [vmem:[%s8 + $0x30] sm:$0xff]
        %s2470 = scalar_lea.vmem %s8, 56
        %v2471 = vld [vmem:[%s2470] sm:$0xff]
        %v2472 = vld [vmem:[%s2470 + $0x8] sm:$0xff]
        %v2473 = vld [vmem:[%s2470 + $0x10] sm:$0xff]
        %v2474 = vld [vmem:[%s2470 + $0x18] sm:$0xff]
        %v2475 = vld [vmem:[%s2470 + $0x20] sm:$0xff]
        %v2476 = vld [vmem:[%s2470 + $0x28] sm:$0xff]
        %v2477 = vld [vmem:[%s2470 + $0x30] sm:$0xff]
        %vm2478 = vcmask 261120
        %v2480 = vsel %vm2478, %v2471, 0
        %v2483 = vsel %vm2478, %v2472, 0
        %v2486 = vsel %vm2478, %v2473, 0
        %v2489 = vsel %vm2478, %v2474, 0
        %v2492 = vsel %vm2478, %v2475, 0
        %v2495 = vsel %vm2478, %v2476, 0
        %v2498 = vsel %vm2478, %v2477, 0
        %2500 = vmatprep.subr.mxu0 0.0
        %2501 = vmatpush1.msra.mxu0 %v2443
        %2502 = vmatprep.subr.mxu0 0.0
        %2503 = vmatpush1.msra.mxu0 %v2449
        %2504 = vmatprep.subr.mxu0 0.0
        %2505 = vmatpush1.msra.mxu0 %v2455
        %2506 = vmatprep.subr.mxu0 0.0
        %2507 = vmatpush1.msra.mxu0 %v2461
        %2508 = vmatprep.subr.mxu0 0.0
        %2509 = vmatpush1.msra.mxu0 0.0
        %2510 = vmatprep.subr.mxu0 0.0
        %2511 = vmatpush1.msra.mxu0 0.0
        %2512 = vmatprep.subr.mxu0 0.0
        %2513 = vmatpush1.msra.mxu0 0.0
        %2514 = vmatprep.subr.mxu0 0.0
        %2515 = vmatpush1.msra.mxu0 0.0
        %2516 = vmatprep.subr.mxu0 0.0
        %2517 = vmatpush1.msra.mxu0 0.0
        %2518 = vmatprep.subr.mxu0 0.0
        %2519 = vmatpush1.msra.mxu0 0.0
        %2520 = vmatprep.subr.mxu0 0.0
        %2521 = vmatpush1.msra.mxu0 0.0
        %2522 = vmatprep.subr.mxu0 0.0
        %2523 = vmatpush1.msra.mxu0 0.0
        %2524 = vmatprep.subr.mxu0 0.0
        %2525 = vmatpush1.msra.mxu0 0.0
        %2526 = vmatprep.subr.mxu0 0.0
        %2527 = vmatpush1.msra.mxu0 0.0
        %2528 = vmatprep.subr.mxu0 0.0
        %2529 = vmatpush1.msra.mxu0 0.0
        %2530 = vmatprep.subr.mxu0 0.0
        %2531 = vmatpush1.msra.mxu0 0.0
        %2532 = vmatprep.subr.mxu0 0.0
        %2533 = vmatpush1.msra.mxu0 0.0
        %2534 = vmatprep.subr.mxu0 0.0
        %2535 = vmatpush1.msra.mxu0 0.0
        %2536 = vmatprep.subr.mxu0 0.0
        %2537 = vmatpush1.msra.mxu0 0.0
        %2538 = vmatprep.subr.mxu0 0.0
        %2539 = vmatpush1.msra.mxu0 0.0
        %2540 = vmatprep.subr.mxu0 0.0
        %2541 = vmatpush1.msra.mxu0 0.0
        %2542 = vmatprep.subr.mxu0 0.0
        %2543 = vmatpush1.msra.mxu0 0.0
        %2544 = vmatprep.subr.mxu0 0.0
        %2545 = vmatpush1.msra.mxu0 0.0
        %2546 = vmatprep.subr.mxu0 0.0
        %2547 = vmatpush1.msra.mxu0 0.0
        %2548 = vmatprep.subr.mxu0 0.0
        %2549 = vmatpush1.msra.mxu0 0.0
        %2550 = vmatprep.subr.mxu0 0.0
        %2551 = vmatpush1.msra.mxu0 0.0
        %2552 = vmatprep.subr.mxu0 0.0
        %2553 = vmatpush1.msra.mxu0 0.0
        %2554 = vmatprep.subr.mxu0 0.0
        %2555 = vmatpush1.msra.mxu0 0.0
        %2556 = vmatprep.subr.mxu0 0.0
        %2557 = vmatpush1.msra.mxu0 0.0
        %2558 = vmatprep.subr.mxu0 0.0
        %2559 = vmatpush1.msra.mxu0 0.0
        %2560 = vmatprep.subr.mxu0 0.0
        %2561 = vmatpush1.msra.mxu0 0.0
        %2562 = vmatprep.subr.mxu0 0.0
        %2563 = vmatpush1.msra.mxu0 0.0
        %2564 = vmatprep.mubr.f32.mxu0 0.0
        %2565 = vmatmul.mubr.f32.gmra.mrb[0].mxu0 %v2480
        %v2566 = vpop.f32.mrb[0].mxu0
        %v2567 = vadd.f32 0.0, %v2566
        %v2568 = vpop.f32.mrb[0].mxu0
        %2569 = vmatprep.mubr.f32.mxu0 0.0
        %2570 = vmatmul.mubr.f32.gmra.mrb[0].mxu0 %v2483
        %v2571 = vpop.f32.mrb[0].mxu0
        %v2572 = vadd.f32 0.0, %v2571
        %v2573 = vpop.f32.mrb[0].mxu0
        %2574 = vmatprep.mubr.f32.mxu0 0.0
        %2575 = vmatmul.mubr.f32.gmra.mrb[0].mxu0 %v2486
        %v2576 = vpop.f32.mrb[0].mxu0
        %v2577 = vadd.f32 0.0, %v2576
        %v2578 = vpop.f32.mrb[0].mxu0
        %2579 = vmatprep.mubr.f32.mxu0 0.0
        %2580 = vmatmul.mubr.f32.gmra.mrb[0].mxu0 %v2489
        %v2581 = vpop.f32.mrb[0].mxu0
        %v2582 = vadd.f32 0.0, %v2581
        %v2583 = vpop.f32.mrb[0].mxu0
        %2584 = vmatprep.mubr.f32.mxu0 0.0
        %2585 = vmatmul.mubr.f32.gmra.mrb[0].mxu0 %v2492
        %v2586 = vpop.f32.mrb[0].mxu0
        %v2587 = vadd.f32 0.0, %v2586
        %v2588 = vpop.f32.mrb[0].mxu0
        %2589 = vmatprep.mubr.f32.mxu0 0.0
        %2590 = vmatmul.mubr.f32.gmra.mrb[0].mxu0 %v2495
        %v2591 = vpop.f32.mrb[0].mxu0
        %v2592 = vadd.f32 0.0, %v2591
        %v2593 = vpop.f32.mrb[0].mxu0
        %2594 = vmatprep.mubr.f32.mxu0 0.0
        %2595 = vmatmul.mubr.f32.gmra.mrb[0].mxu0 %v2498
        %v2596 = vpop.f32.mrb[0].mxu0
        %v2597 = vadd.f32 0.0, %v2596
        %v2598 = vpop.f32.mrb[0].mxu0
        %2599 = vdwg.mxu0
        %v2601 = vsel %vm2478, %v2463, 0
        %v2604 = vsel %vm2478, %v2464, 0
        %v2607 = vsel %vm2478, %v2465, 0
        %v2610 = vsel %vm2478, %v2466, 0
        %v2613 = vsel %vm2478, %v2467, 0
        %v2616 = vsel %vm2478, %v2468, 0
        %v2619 = vsel %vm2478, %v2469, 0
        %2621 = vmatprep.subr.mxu0 0.0
        %2622 = vmatpush1.msra.mxu0 %v2441
        %2623 = vmatprep.subr.mxu0 0.0
        %2624 = vmatpush1.msra.mxu0 %v2447
        %2625 = vmatprep.subr.mxu0 0.0
        %2626 = vmatpush1.msra.mxu0 %v2453
        %2627 = vmatprep.subr.mxu0 0.0
        %2628 = vmatpush1.msra.mxu0 %v2459
        %2629 = vmatprep.subr.mxu0 0.0
        %2630 = vmatpush1.msra.mxu0 0.0
        %2631 = vmatprep.subr.mxu0 0.0
        %2632 = vmatpush1.msra.mxu0 0.0
        %2633 = vmatprep.subr.mxu0 0.0
        %2634 = vmatpush1.msra.mxu0 0.0
        %2635 = vmatprep.subr.mxu0 0.0
        %2636 = vmatpush1.msra.mxu0 0.0
        %2637 = vmatprep.subr.mxu0 0.0
        %2638 = vmatpush1.msra.mxu0 0.0
        %2639 = vmatprep.subr.mxu0 0.0
        %2640 = vmatpush1.msra.mxu0 0.0
        %2641 = vmatprep.subr.mxu0 0.0
        %2642 = vmatpush1.msra.mxu0 0.0
        %2643 = vmatprep.subr.mxu0 0.0
        %2644 = vmatpush1.msra.mxu0 0.0
        %2645 = vmatprep.subr.mxu0 0.0
        %2646 = vmatpush1.msra.mxu0 0.0
        %2647 = vmatprep.subr.mxu0 0.0
        %2648 = vmatpush1.msra.mxu0 0.0
        %2649 = vmatprep.subr.mxu0 0.0
        %2650 = vmatpush1.msra.mxu0 0.0
        %2651 = vmatprep.subr.mxu0 0.0
        %2652 = vmatpush1.msra.mxu0 0.0
        %2653 = vmatprep.subr.mxu0 0.0
        %2654 = vmatpush1.msra.mxu0 0.0
        %2655 = vmatprep.subr.mxu0 0.0
        %2656 = vmatpush1.msra.mxu0 0.0
        %2657 = vmatprep.subr.mxu0 0.0
        %2658 = vmatpush1.msra.mxu0 0.0
        %2659 = vmatprep.subr.mxu0 0.0
        %2660 = vmatpush1.msra.mxu0 0.0
        %2661 = vmatprep.subr.mxu0 0.0
        %2662 = vmatpush1.msra.mxu0 0.0
        %2663 = vmatprep.subr.mxu0 0.0
        %2664 = vmatpush1.msra.mxu0 0.0
        %2665 = vmatprep.subr.mxu0 0.0
        %2666 = vmatpush1.msra.mxu0 0.0
        %2667 = vmatprep.subr.mxu0 0.0
        %2668 = vmatpush1.msra.mxu0 0.0
        %2669 = vmatprep.subr.mxu0 0.0
        %2670 = vmatpush1.msra.mxu0 0.0
        %2671 = vmatprep.subr.mxu0 0.0
        %2672 = vmatpush1.msra.mxu0 0.0
        %2673 = vmatprep.subr.mxu0 0.0
        %2674 = vmatpush1.msra.mxu0 0.0
        %2675 = vmatprep.subr.mxu0 0.0
        %2676 = vmatpush1.msra.mxu0 0.0
        %2677 = vmatprep.subr.mxu0 0.0
        %2678 = vmatpush1.msra.mxu0 0.0
        %2679 = vmatprep.subr.mxu0 0.0
        %2680 = vmatpush1.msra.mxu0 0.0
        %2681 = vmatprep.subr.mxu0 0.0
        %2682 = vmatpush1.msra.mxu0 0.0
        %2683 = vmatprep.subr.mxu0 0.0
        %2684 = vmatpush1.msra.mxu0 0.0
        %2685 = vmatprep.mubr.f32.mxu0 0.0
        %2686 = vmatmul.mubr.f32.gmra.mrb[0].mxu0 %v2601
        %v2687 = vpop.f32.mrb[0].mxu0
        %v2688 = vadd.f32 %v2567, %v2687
        %v2689 = vpop.f32.mrb[0].mxu0
        %2690 = vmatprep.mubr.f32.mxu0 0.0
        %2691 = vmatmul.mubr.f32.gmra.mrb[0].mxu0 %v2604
        %v2692 = vpop.f32.mrb[0].mxu0
        %v2693 = vadd.f32 %v2572, %v2692
        %v2694 = vpop.f32.mrb[0].mxu0
        %2695 = vmatprep.mubr.f32.mxu0 0.0
        %2696 = vmatmul.mubr.f32.gmra.mrb[0].mxu0 %v2607
        %v2697 = vpop.f32.mrb[0].mxu0
        %v2698 = vadd.f32 %v2577, %v2697
        %v2699 = vpop.f32.mrb[0].mxu0
        %2700 = vmatprep.mubr.f32.mxu0 0.0
        %2701 = vmatmul.mubr.f32.gmra.mrb[0].mxu0 %v2610
        %v2702 = vpop.f32.mrb[0].mxu0
        %v2703 = vadd.f32 %v2582, %v2702
        %v2704 = vpop.f32.mrb[0].mxu0
        %2705 = vmatprep.mubr.f32.mxu0 0.0
        %2706 = vmatmul.mubr.f32.gmra.mrb[0].mxu0 %v2613
        %v2707 = vpop.f32.mrb[0].mxu0
        %v2708 = vadd.f32 %v2587, %v2707
        %v2709 = vpop.f32.mrb[0].mxu0
        %2710 = vmatprep.mubr.f32.mxu0 0.0
        %2711 = vmatmul.mubr.f32.gmra.mrb[0].mxu0 %v2616
        %v2712 = vpop.f32.mrb[0].mxu0
        %v2713 = vadd.f32 %v2592, %v2712
        %v2714 = vpop.f32.mrb[0].mxu0
        %2715 = vmatprep.mubr.f32.mxu0 0.0
        %2716 = vmatmul.mubr.f32.gmra.mrb[0].mxu0 %v2619
        %v2717 = vpop.f32.mrb[0].mxu0
        %v2718 = vadd.f32 %v2597, %v2717
        %v2719 = vpop.f32.mrb[0].mxu0
        %2720 = vdwg.mxu0
        %v2721 = vld [vmem:[#allocation10] sm:$0x1]
        %v2723 = vlaneseq
        %v2724 = vshrl.u32 %v2723, 7
        %v2725 = vsub.s32 0, %v2724
        %v2726 = vrot.slane %v2721, %v2725
        %v2728 = vadd.f32 %v2688, %v2726
        %v2729 = vadd.f32 %v2693, %v2726
        %v2730 = vadd.f32 %v2698, %v2726
        %v2731 = vadd.f32 %v2703, %v2726
        %v2732 = vadd.f32 %v2708, %v2726
        %v2733 = vadd.f32 %v2713, %v2726
        %v2734 = vadd.f32 %v2718, %v2726
        %v2735 = vtanh.pop %v2728
        %v2736 = vtanh.pop %v2729
        %v2737 = vtanh.pop %v2730
        %v2738 = vtanh.pop %v2731
        %v2739 = vtanh.pop %v2732
        %v2740 = vtanh.pop %v2733
        %v2741 = vtanh.pop %v2734
        %2742 = vst [vmem:[%s438] sm:$0xff] %v2735
        %2743 = vst [vmem:[%s438 + $0x8] sm:$0xff] %v2736
        %2744 = vst [vmem:[%s438 + $0x10] sm:$0xff] %v2737
        %2745 = vst [vmem:[%s438 + $0x18] sm:$0xff] %v2738
        %2746 = vst [vmem:[%s438 + $0x20] sm:$0xff] %v2739
        %2747 = vst [vmem:[%s438 + $0x28] sm:$0xff] %v2740
        %2748 = vst [vmem:[%s438 + $0x30] sm:$0xff] %v2741
        %p2749 = scmp.lt.s32.totalorder %s25, 1
        %s2750 = scalar_select %p2749, %s25, 1
        %s2751 = smul.addr %s2750, 7
        %s2752 = smul.addr %s2751, 8
        %s2753 = scalar_lea.vmem %s10, %s2752
        // Predicated region
        $region85: #{decoder2_apply.1} parent=59 // pred_check
          %p2754 = pneg %p258
        $region86: #{decoder2_apply.1} parent=59 // pred_check_branch
          %2756 = sbr.rel (%p2754) target = $region88
        $region87: #{decoder2_apply.1} parent=59 // pred_region
          _
        $region88: #{decoder2_apply.1} parent=59 // pred_fallthru
          _
      $region60: #{decoder2_apply.1} parent=5 // pred_fallthru
        _
      %p2757 = scmp.le.s32.totalorder 2, %s20
      // Predicated region
      $region89: #{decoder2_apply.1} parent=5 // pred_check
        %p2758 = pneg %p2757
      $region90: #{decoder2_apply.1} parent=5 // pred_check_branch
        %2760 = sbr.rel (%p2758) target = $region92
      $region91: #{decoder2_apply.1} parent=5 // pred_region
        %s2761 = ssub.s32 %s20, 2
        // Predicated region
        $region93: #{decoder2_apply.1} parent=91 // pred_check
          %p2762 = pneg %p264
        $region94: #{decoder2_apply.1} parent=91 // pred_check_branch
          %2764 = sbr.rel (%p2762) target = $region96
        $region95: #{decoder2_apply.1} parent=91 // pred_region
          %p2765 = scmp.lt.s32.totalorder %s26, 1
          %s2766 = scalar_select %p2765, %s26, 1
          %s2767 = smul.addr %s2766, 7
          %s2768 = smul.addr %s2767, 8
          %s2769 = scalar_lea.vmem %s10, %s2768
        $region96: #{decoder2_apply.1} parent=91 // pred_fallthru
          _
      $region92: #{decoder2_apply.1} parent=5 // pred_fallthru
        _
    $region6: #{decoder2_apply.1} parent=1 // loop_footer
      %s24 = sadd.s32 1, %s20
    $region7: #{decoder2_apply.1} parent=1 // loop_footer_branch
      %19 = sbr.rel target = $region3
    $region8: #{decoder2_apply.1} parent=1 // loop_exit
      _
    %2770 = vsyncpa [#allocation3], 1
    %s2771 = scalar_lea.sflag [#allocation3], 1
    %2772 = vsyncpa %s2771, 1
    %2773 = vsyncpa [#allocation5], 1
    %2774 = vsyncpa [#allocation8], 1
    %2775 = vsyncpa [#allocation11], 1

</llo_original>
